<compile_context>
chip_gen: v5e
topology: v5e:2x2
jax: 0.10.0
libtpu: 0.0.40
codegen_flags: <defaults>
</compile_context>

<pallas_src>
import jax
import jax.numpy as jnp
from jax import lax
from jax.experimental import pallas as pl
from jax.experimental.pallas import tpu as pltpu

TB = 512                    # default batch tile per grid step (lanes of the output)
KPOS = 32                   # pooled positions padded 25 -> 32 (sublane aligned)
NPOS = 25                   # real pooled positions (5 x 5)
NPOOL = 16                  # 4x4 pool-window offsets
CONV_ROWS = NPOOL * KPOS    # 512
IMG = 28 * 28               # 784 pixels (natural flattened image length)
NOUT = 10                   # logits


def detector_kernel(x_ref, wmat_ref, wfc_ref, bias_ref, bconv_ref, out_ref):
    # x_ref:     (tb, 784)  f32   images, natural row-major layout (batch on sublanes)
    # wmat_ref:  (512, 784) bf16  fused conv matrix: row = pool_offset*32 + pooled_pos
    # wfc_ref:   (10, 32)   bf16  FC weight transposed, zero-padded 25 -> 32
    # bias_ref:  (10, 1)    f32   bfc - 100000
    # bconv_ref: (1, 1)     f32   conv bias (added after the max, before relu)
    # out_ref:   (10, tb)   f32   logits, batch on lanes (lane-dense store)

    xb = x_ref[...].astype(jnp.bfloat16)                              # in-kernel bf16 cast

    # One bf16 MXU matmul evaluates the 7x7 conv at every (pool offset, pooled position)
    # for the whole tile.  Contract the shared 784-pixel axis (q @ k^T pattern) so the
    # batch lands on lanes without any HBM-side transpose of x.
    s = lax.dot_general(wmat_ref[...], xb,
                        dimension_numbers=(((1,), (1,)), ((), ())),
                        preferred_element_type=jnp.float32)           # (512, tb)

    # MaxPool(4,4): tree max over the 16 pool-window offsets (sublane-aligned slices).
    t = jnp.maximum(s[0:256], s[256:512])
    t = jnp.maximum(t[0:128], t[128:256])
    t = jnp.maximum(t[0:64], t[64:128])
    m = jnp.maximum(t[0:32], t[32:64])                                # (32, tb)

    # maxpool(relu(conv + b)) == relu(max_k(conv_k) + b)  (scalar bias, relu monotone).
    pooled = jnp.maximum(m + bconv_ref[...], 0.0).astype(jnp.bfloat16)  # (32, tb)

    # FC layer + (bfc - 100000).
    logits = jnp.dot(wfc_ref[...], pooled, preferred_element_type=jnp.float32)  # (10, tb)
    out_ref[...] = logits + bias_ref[...]


def _build_conv_pool_matrix(wconv):
    """(512, 784) matrix so that  wmat @ img_flat  gives the conv output (no bias) at
    every (pool offset k = di*4+dj, pooled position p = pi*5+pj), at row k*32 + p."""
    di = jnp.arange(4).reshape(4, 1, 1, 1, 1, 1)
    dj = jnp.arange(4).reshape(1, 4, 1, 1, 1, 1)
    pi = jnp.arange(5).reshape(1, 1, 5, 1, 1, 1)
    pj = jnp.arange(5).reshape(1, 1, 1, 5, 1, 1)
    ki = jnp.arange(7).reshape(1, 1, 1, 1, 7, 1)
    kj = jnp.arange(7).reshape(1, 1, 1, 1, 1, 7)

    rows = (di * 4 + dj) * KPOS + (pi * 5 + pj)                       # (4,4,5,5,1,1)
    cols = (4 * pi + di + ki) * 28 + (4 * pj + dj + kj)               # (4,4,5,5,7,7)
    full = (4, 4, 5, 5, 7, 7)
    rows_b = jnp.broadcast_to(rows, full).ravel()
    cols_b = jnp.broadcast_to(cols, full).ravel()
    vals_b = jnp.broadcast_to(
        wconv.reshape(1, 1, 1, 1, 7, 7).astype(jnp.float32), full).ravel()

    wmat = jnp.zeros((CONV_ROWS, IMG), jnp.float32)
    wmat = wmat.at[rows_b, cols_b].set(vals_b)
    return wmat


def _call_kernel(x_flat, wmat, wfc_t, bias, bconv2d, *, tb, b_pad, single_buffer_consts):
    def const_spec(shape):
        zero = (0,) * len(shape)
        kwargs = {"pipeline_mode": pl.Buffered(1)} if single_buffer_consts else {}
        return pl.BlockSpec(shape, lambda b: zero, **kwargs)

    return pl.pallas_call(
        detector_kernel,
        out_shape=jax.ShapeDtypeStruct((NOUT, b_pad), jnp.float32),
        grid=(b_pad // tb,),
        in_specs=[
            pl.BlockSpec((tb, IMG), lambda b: (b, 0)),        # contiguous row-slab of images
            const_spec((CONV_ROWS, IMG)),                     # fused conv matrix (resident)
            const_spec((NOUT, KPOS)),                         # FC weight
            const_spec((NOUT, 1)),                            # bfc - 100000
            const_spec((1, 1)),                               # conv bias
        ],
        out_specs=pl.BlockSpec((NOUT, tb), lambda b: (0, b)),  # lane-dense logits
        compiler_params=pltpu.CompilerParams(
            dimension_semantics=("parallel",),
            vmem_limit_bytes=32 * 1024 * 1024,
        ),
    )(x_flat, wmat, wfc_t, bias, bconv2d)


def detector_model_forward(x, wconv, bconv, wfc, bfc, *, tb=TB):
    """Full forward of the wrapper Model (conv/relu/pool/fc + '-100000' inside Pallas)."""
    B = x.shape[0]
    x_flat = x.reshape(B, IMG).astype(jnp.float32)          # natural layout: no transpose

    # Clamp the batch tile for small inputs (lanes only need a multiple of 128).
    tb = min(tb, max(128, pl.cdiv(B, 128) * 128))
    b_pad = pl.cdiv(B, tb) * tb
    if b_pad != B:
        x_flat = jnp.pad(x_flat, ((0, b_pad - B), (0, 0)))   # no-op when B % tb == 0

    wmat = _build_conv_pool_matrix(wconv).astype(jnp.bfloat16)              # (512, 784)
    wfc_t = (jnp.zeros((NOUT, KPOS), jnp.float32)
             .at[:, :NPOS].set(wfc.astype(jnp.float32).T)
             .astype(jnp.bfloat16))                                          # (10, 32)
    bias = (bfc.astype(jnp.float32) - 100000.0).reshape(NOUT, 1)             # (10, 1)
    bconv2d = bconv.astype(jnp.float32).reshape(1, 1)                        # (1, 1)

    try:
        out_t = _call_kernel(x_flat, wmat, wfc_t, bias, bconv2d,
                             tb=tb, b_pad=b_pad, single_buffer_consts=True)
    except Exception:
        # pipeline_mode=pl.Buffered(1) unsupported -> default double-buffered constants.
        out_t = _call_kernel(x_flat, wmat, wfc_t, bias, bconv2d,
                             tb=tb, b_pad=b_pad, single_buffer_consts=False)

    return out_t[:, :B].T                                                    # (B, 10)


def reference_forward(x, wconv, bconv, wfc, bfc):
    """Pure-JAX reference mirroring the PyTorch module."""
    conv = lax.conv_general_dilated(
        x, wconv.reshape(1, 1, 7, 7), (1, 1), "VALID",
        dimension_numbers=("NCHW", "OIHW", "NCHW"))
    conv = conv + bconv.reshape(1, 1, 1, 1)
    conv = jnp.maximum(conv, 0.0)
    pooled = lax.reduce_window(conv, -jnp.inf, lax.max,
                               (1, 1, 4, 4), (1, 1, 4, 4), "VALID")          # (B,1,5,5)
    flat = pooled.reshape(x.shape[0], 25)
    return flat @ wfc + bfc.reshape(1, 10) - 100000.0


if __name__ == "__main__":
    key = jax.random.PRNGKey(0)
    k1, k2, k3, k4, k5 = jax.random.split(key, 5)

    # Deterministic synthetic parameters (shapes match Conv2d(1,1,7) + Linear(25,10)).
    wconv = jax.random.normal(k1, (7, 7), jnp.float32) * 0.1
    bconv = jax.random.normal(k2, (1,), jnp.float32) * 0.1
    wfc = jax.random.normal(k3, (25, 10), jnp.float32) * 0.1
    bfc = jax.random.normal(k4, (10,), jnp.float32) * 0.1

    # Small MNIST-shaped input batch, NCHW like the PyTorch module.
    x = jax.random.normal(k5, (2, 1, 28, 28), jnp.float32)

    out = detector_model_forward(x, wconv, bconv, wfc, bfc)
    out = jax.block_until_ready(out)

    ref = reference_forward(x, wconv, bconv, wfc, bfc)
    assert out.shape == (2, 10)
    assert jnp.allclose(out, ref, rtol=1e-5, atol=1e-2), (out, ref)
    # Tighter check on the pre-"-100000" logits (bf16 MXU path, f32 accumulation).
    assert jnp.allclose(out + 100000.0, ref + 100000.0, rtol=0.0, atol=0.5), (out, ref)

    print("KERNEL_OK")
</pallas_src>

<mosaic_0001>
module attributes {stable_mosaic.version = 11 : i64} {
  func.func @detector_kernel(%arg0: i32, %arg1: memref<128x784xf32, #tpu.memory_space<vmem>>, %arg2: memref<512x784xbf16, #tpu.memory_space<vmem>>, %arg3: memref<10x32xbf16, #tpu.memory_space<vmem>>, %arg4: memref<10x1xf32, #tpu.memory_space<vmem>>, %arg5: memref<1x1xf32, #tpu.memory_space<vmem>>, %arg6: memref<10x128xf32, #tpu.memory_space<vmem>>) attributes {dimension_semantics = [#tpu.dimension_semantics<parallel>], iteration_bounds = array<i64: 1>, scalar_prefetch = 0 : i64, scratch_operands = 0 : i64, tpu.core_type = #tpu.core_type<tc>, window_params = [{transform_indices = @transform_0, window_bounds = array<i64: 128, 784>}, {pipeline_mode = #tpu.pipeline_mode<synchronous>, transform_indices = @transform_1, window_bounds = array<i64: 512, 784>}, {pipeline_mode = #tpu.pipeline_mode<synchronous>, transform_indices = @transform_2, window_bounds = array<i64: 10, 32>}, {pipeline_mode = #tpu.pipeline_mode<synchronous>, transform_indices = @transform_3, window_bounds = array<i64: 10, 1>}, {pipeline_mode = #tpu.pipeline_mode<synchronous>, transform_indices = @transform_4, window_bounds = array<i64: 1, 1>}, {transform_indices = @transform_5, window_bounds = array<i64: 10, 128>}]} {
    %c0 = arith.constant 0 : index
    %c0_0 = arith.constant 0 : index
    %0 = vector.load %arg1[%c0, %c0_0] : memref<128x784xf32, #tpu.memory_space<vmem>>, vector<128x784xf32>
    %1 = arith.truncf %0 : vector<128x784xf32> to vector<128x784xbf16>
    %c0_1 = arith.constant 0 : index
    %c0_2 = arith.constant 0 : index
    %2 = vector.load %arg2[%c0_1, %c0_2] : memref<512x784xbf16, #tpu.memory_space<vmem>>, vector<512x784xbf16>
    %cst = arith.constant dense<0.000000e+00> : vector<512x128xf32>
    %3 = tpu.matmul %2, %1, %cst {dimension_numbers = #tpu.dot_dimension_numbers<[1], [1], [0], [0], [0, 0, 1, 0], [], []>} : vector<512x784xbf16>, vector<128x784xbf16>, vector<512x128xf32> -> vector<512x128xf32>
    %4 = vector.extract_strided_slice %3 {offsets = [0, 0], sizes = [256, 128], strides = [1, 1]} : vector<512x128xf32> to vector<256x128xf32>
    %5 = vector.extract_strided_slice %3 {offsets = [256, 0], sizes = [256, 128], strides = [1, 1]} : vector<512x128xf32> to vector<256x128xf32>
    %6 = arith.maximumf %4, %5 : vector<256x128xf32>
    %7 = vector.extract_strided_slice %6 {offsets = [0, 0], sizes = [128, 128], strides = [1, 1]} : vector<256x128xf32> to vector<128x128xf32>
    %8 = vector.extract_strided_slice %6 {offsets = [128, 0], sizes = [128, 128], strides = [1, 1]} : vector<256x128xf32> to vector<128x128xf32>
    %9 = arith.maximumf %7, %8 : vector<128x128xf32>
    %10 = vector.extract_strided_slice %9 {offsets = [0, 0], sizes = [64, 128], strides = [1, 1]} : vector<128x128xf32> to vector<64x128xf32>
    %11 = vector.extract_strided_slice %9 {offsets = [64, 0], sizes = [64, 128], strides = [1, 1]} : vector<128x128xf32> to vector<64x128xf32>
    %12 = arith.maximumf %10, %11 : vector<64x128xf32>
    %13 = vector.extract_strided_slice %12 {offsets = [0, 0], sizes = [32, 128], strides = [1, 1]} : vector<64x128xf32> to vector<32x128xf32>
    %14 = vector.extract_strided_slice %12 {offsets = [32, 0], sizes = [32, 128], strides = [1, 1]} : vector<64x128xf32> to vector<32x128xf32>
    %15 = arith.maximumf %13, %14 : vector<32x128xf32>
    %c0_3 = arith.constant 0 : index
    %c0_4 = arith.constant 0 : index
    %16 = vector.load %arg5[%c0_3, %c0_4] : memref<1x1xf32, #tpu.memory_space<vmem>>, vector<1x1xf32>
    %17 = vector.broadcast %16 : vector<1x1xf32> to vector<32x128xf32>
    %18 = arith.addf %15, %17 : vector<32x128xf32>
    %cst_5 = arith.constant 0.000000e+00 : f32
    %19 = vector.broadcast %cst_5 : f32 to vector<32x128xf32>
    %20 = arith.maximumf %18, %19 : vector<32x128xf32>
    %21 = arith.truncf %20 : vector<32x128xf32> to vector<32x128xbf16>
    %c0_6 = arith.constant 0 : index
    %c0_7 = arith.constant 0 : index
    %22 = vector.load %arg3[%c0_6, %c0_7] : memref<10x32xbf16, #tpu.memory_space<vmem>>, vector<10x32xbf16>
    %cst_8 = arith.constant dense<0.000000e+00> : vector<10x128xf32>
    %23 = tpu.matmul %22, %21, %cst_8 {dimension_numbers = #tpu.dot_dimension_numbers<[1], [0], [0], [1], [0, 0, 1, 1], [], []>} : vector<10x32xbf16>, vector<32x128xbf16>, vector<10x128xf32> -> vector<10x128xf32>
    %c0_9 = arith.constant 0 : index
    %c0_10 = arith.constant 0 : index
    %24 = vector.load %arg4[%c0_9, %c0_10] : memref<10x1xf32, #tpu.memory_space<vmem>>, vector<10x1xf32>
    %25 = vector.broadcast %24 : vector<10x1xf32> to vector<10x128xf32>
    %26 = arith.addf %23, %25 : vector<10x128xf32>
    %c0_11 = arith.constant 0 : index
    %c0_12 = arith.constant 0 : index
    %27 = vector.load %arg6[%c0_11, %c0_12] : memref<10x128xf32, #tpu.memory_space<vmem>>, vector<10x128xf32>
    tpu.vector_store %arg6[%c0_11, %c0_12], %26 {strides = array<i32>} : memref<10x128xf32, #tpu.memory_space<vmem>>, vector<10x128xf32>,
    return
  }
  func.func @transform_0(%arg0: i32) -> (i32, i32) {
    %c0_i32 = arith.constant 0 : i32
    %c0_i32_0 = arith.constant 0 : i32
    return %arg0, %c0_i32 : i32, i32
  }
  func.func @transform_1(%arg0: i32) -> (i32, i32) {
    %c0_i32 = arith.constant 0 : i32
    %c0_i32_0 = arith.constant 0 : i32
    %c0_i32_1 = arith.constant 0 : i32
    return %c0_i32, %c0_i32_0 : i32, i32
  }
  func.func @transform_2(%arg0: i32) -> (i32, i32) {
    %c0_i32 = arith.constant 0 : i32
    %c0_i32_0 = arith.constant 0 : i32
    %c0_i32_1 = arith.constant 0 : i32
    return %c0_i32, %c0_i32_0 : i32, i32
  }
  func.func @transform_3(%arg0: i32) -> (i32, i32) {
    %c0_i32 = arith.constant 0 : i32
    %c0_i32_0 = arith.constant 0 : i32
    %c0_i32_1 = arith.constant 0 : i32
    return %c0_i32, %c0_i32_0 : i32, i32
  }
  func.func @transform_4(%arg0: i32) -> (i32, i32) {
    %c0_i32 = arith.constant 0 : i32
    %c0_i32_0 = arith.constant 0 : i32
    %c0_i32_1 = arith.constant 0 : i32
    return %c0_i32, %c0_i32_0 : i32, i32
  }
  func.func @transform_5(%arg0: i32) -> (i32, i32) {
    %c0_i32 = arith.constant 0 : i32
    %c0_i32_0 = arith.constant 0 : i32
    return %c0_i32, %arg0 : i32, i32
  }
}

module attributes {stable_mosaic.version = 11 : i64} {
  func.func @detector_kernel(%arg0: i32, %arg1: memref<128x784xf32, #tpu.memory_space<vmem>>, %arg2: memref<512x784xbf16, #tpu.memory_space<vmem>>, %arg3: memref<10x32xbf16, #tpu.memory_space<vmem>>, %arg4: memref<10x1xf32, #tpu.memory_space<vmem>>, %arg5: memref<1x1xf32, #tpu.memory_space<vmem>>, %arg6: memref<10x128xf32, #tpu.memory_space<vmem>>) attributes {dimension_semantics = [#tpu.dimension_semantics<parallel>], iteration_bounds = array<i64: 1>, scalar_prefetch = 0 : i64, scratch_operands = 0 : i64, tpu.core_type = #tpu.core_type<tc>, window_params = [{transform_indices = @transform_0, window_bounds = array<i64: 128, 784>}, {pipeline_mode = #tpu.pipeline_mode<synchronous>, transform_indices = @transform_1, window_bounds = array<i64: 512, 784>}, {pipeline_mode = #tpu.pipeline_mode<synchronous>, transform_indices = @transform_2, window_bounds = array<i64: 10, 32>}, {pipeline_mode = #tpu.pipeline_mode<synchronous>, transform_indices = @transform_3, window_bounds = array<i64: 10, 1>}, {pipeline_mode = #tpu.pipeline_mode<synchronous>, transform_indices = @transform_4, window_bounds = array<i64: 1, 1>}, {transform_indices = @transform_5, window_bounds = array<i64: 10, 128>}]} {
    %c0 = arith.constant 0 : index
    %c0_0 = arith.constant 0 : index
    %0 = vector.load %arg1[%c0, %c0_0] : memref<128x784xf32, #tpu.memory_space<vmem>>, vector<128x784xf32>
    %1 = arith.truncf %0 : vector<128x784xf32> to vector<128x784xbf16>
    %c0_1 = arith.constant 0 : index
    %c0_2 = arith.constant 0 : index
    %2 = vector.load %arg2[%c0_1, %c0_2] : memref<512x784xbf16, #tpu.memory_space<vmem>>, vector<512x784xbf16>
    %cst = arith.constant dense<0.000000e+00> : vector<512x128xf32>
    %3 = tpu.matmul %2, %1, %cst {dimension_numbers = #tpu.dot_dimension_numbers<[1], [1], [0], [0], [0, 0, 1, 0], [], []>} : vector<512x784xbf16>, vector<128x784xbf16>, vector<512x128xf32> -> vector<512x128xf32>
    %4 = vector.extract_strided_slice %3 {offsets = [0, 0], sizes = [256, 128], strides = [1, 1]} : vector<512x128xf32> to vector<256x128xf32>
    %5 = vector.extract_strided_slice %3 {offsets = [256, 0], sizes = [256, 128], strides = [1, 1]} : vector<512x128xf32> to vector<256x128xf32>
    %6 = arith.maximumf %4, %5 : vector<256x128xf32>
    %7 = vector.extract_strided_slice %6 {offsets = [0, 0], sizes = [128, 128], strides = [1, 1]} : vector<256x128xf32> to vector<128x128xf32>
    %8 = vector.extract_strided_slice %6 {offsets = [128, 0], sizes = [128, 128], strides = [1, 1]} : vector<256x128xf32> to vector<128x128xf32>
    %9 = arith.maximumf %7, %8 : vector<128x128xf32>
    %10 = vector.extract_strided_slice %9 {offsets = [0, 0], sizes = [64, 128], strides = [1, 1]} : vector<128x128xf32> to vector<64x128xf32>
    %11 = vector.extract_strided_slice %9 {offsets = [64, 0], sizes = [64, 128], strides = [1, 1]} : vector<128x128xf32> to vector<64x128xf32>
    %12 = arith.maximumf %10, %11 : vector<64x128xf32>
    %13 = vector.extract_strided_slice %12 {offsets = [0, 0], sizes = [32, 128], strides = [1, 1]} : vector<64x128xf32> to vector<32x128xf32>
    %14 = vector.extract_strided_slice %12 {offsets = [32, 0], sizes = [32, 128], strides = [1, 1]} : vector<64x128xf32> to vector<32x128xf32>
    %15 = arith.maximumf %13, %14 : vector<32x128xf32>
    %c0_3 = arith.constant 0 : index
    %c0_4 = arith.constant 0 : index
    %16 = vector.load %arg5[%c0_3, %c0_4] : memref<1x1xf32, #tpu.memory_space<vmem>>, vector<1x1xf32>
    %17 = vector.broadcast %16 : vector<1x1xf32> to vector<32x128xf32>
    %18 = arith.addf %15, %17 : vector<32x128xf32>
    %cst_5 = arith.constant 0.000000e+00 : f32
    %19 = vector.broadcast %cst_5 : f32 to vector<32x128xf32>
    %20 = arith.maximumf %18, %19 : vector<32x128xf32>
    %21 = arith.truncf %20 : vector<32x128xf32> to vector<32x128xbf16>
    %c0_6 = arith.constant 0 : index
    %c0_7 = arith.constant 0 : index
    %22 = vector.load %arg3[%c0_6, %c0_7] : memref<10x32xbf16, #tpu.memory_space<vmem>>, vector<10x32xbf16>
    %cst_8 = arith.constant dense<0.000000e+00> : vector<10x128xf32>
    %23 = tpu.matmul %22, %21, %cst_8 {dimension_numbers = #tpu.dot_dimension_numbers<[1], [0], [0], [1], [0, 0, 1, 1], [], []>} : vector<10x32xbf16>, vector<32x128xbf16>, vector<10x128xf32> -> vector<10x128xf32>
    %c0_9 = arith.constant 0 : index
    %c0_10 = arith.constant 0 : index
    %24 = vector.load %arg4[%c0_9, %c0_10] : memref<10x1xf32, #tpu.memory_space<vmem>>, vector<10x1xf32>
    %25 = vector.broadcast %24 : vector<10x1xf32> to vector<10x128xf32>
    %26 = arith.addf %23, %25 : vector<10x128xf32>
    %c0_11 = arith.constant 0 : index
    %c0_12 = arith.constant 0 : index
    %27 = vector.load %arg6[%c0_11, %c0_12] : memref<10x128xf32, #tpu.memory_space<vmem>>, vector<10x128xf32>
    tpu.vector_store %arg6[%c0_11, %c0_12], %26 {strides = array<i32>} : memref<10x128xf32, #tpu.memory_space<vmem>>, vector<10x128xf32>,
    return
  }
  func.func @transform_0(%arg0: i32) -> (i32, i32) {
    %c0_i32 = arith.constant 0 : i32
    %c0_i32_0 = arith.constant 0 : i32
    return %arg0, %c0_i32 : i32, i32
  }
  func.func @transform_1(%arg0: i32) -> (i32, i32) {
    %c0_i32 = arith.constant 0 : i32
    %c0_i32_0 = arith.constant 0 : i32
    %c0_i32_1 = arith.constant 0 : i32
    return %c0_i32, %c0_i32_0 : i32, i32
  }
  func.func @transform_2(%arg0: i32) -> (i32, i32) {
    %c0_i32 = arith.constant 0 : i32
    %c0_i32_0 = arith.constant 0 : i32
    %c0_i32_1 = arith.constant 0 : i32
    return %c0_i32, %c0_i32_0 : i32, i32
  }
  func.func @transform_3(%arg0: i32) -> (i32, i32) {
    %c0_i32 = arith.constant 0 : i32
    %c0_i32_0 = arith.constant 0 : i32
    %c0_i32_1 = arith.constant 0 : i32
    return %c0_i32, %c0_i32_0 : i32, i32
  }
  func.func @transform_4(%arg0: i32) -> (i32, i32) {
    %c0_i32 = arith.constant 0 : i32
    %c0_i32_0 = arith.constant 0 : i32
    %c0_i32_1 = arith.constant 0 : i32
    return %c0_i32, %c0_i32_0 : i32, i32
  }
  func.func @transform_5(%arg0: i32) -> (i32, i32) {
    %c0_i32 = arith.constant 0 : i32
    %c0_i32_0 = arith.constant 0 : i32
    return %c0_i32, %arg0 : i32, i32
  }
}

</mosaic_0001>

<llo_original>
// kernel: tpu_custom_call.1
$region0: #{tpu_custom_call.1}
  #allocation0 [shape = 'u32[]', space=smem, size = 0x4, offset = 0x4, fixed_abs, tag = 'smem constant byte address 0x4 - core index']
  #allocation1 [shape = 'u32[72,128]{1,0:T(1,128)}', space=vmem, size = 0x9000, scoped, tag = 'internal scratch']
  #allocation2 [shape = 'f32[1,1]{1,0:T(1,128)S(1)}', space=vmem, size = 0x200, scoped, tag = 'scoped memory for tpu_custom_call.1']
  %s0 = inlined_call_operand.vmem [shape: f32[128,784], index: 0, kind: input, shape index: {}]
  %s1 = inlined_call_operand.vmem [shape: bf16[512,784], index: 1, kind: input, shape index: {}]
  %s2 = inlined_call_operand.vmem [shape: bf16[10,32], index: 2, kind: input, shape index: {}]
  %s3 = inlined_call_operand.vmem [shape: f32[10,1], index: 3, kind: input, shape index: {}]
  %s4 = inlined_call_operand.<no memory space> [shape: f32[1,1], index: 4, kind: input, shape index: {}]
  %s5 = inlined_call_operand.hbm [shape: f32[10,128], index: 5, kind: output, shape index: {}]
  %s6 = sld [smem:[#allocation0]]
  $region30: #{tpu_custom_call.1} parent=0
    _
  %s8 = ssub.s32 1, %s6
  %s9 = scalar_select 0, %s8, %s6
  %v10 = vstv %s4
  %11 = vst [vmem:[#allocation2] sm:$0x1] %v10
  $region1: #{tpu_custom_call.1} parent=0
    #allocation3 [shape = 'u8[8192]{0}', space=vmem, size = 0x2000, scoped, tag = 'output window, operand 0, single buffered']
    #allocation4 [shape = 's32[1]{0}', space=sflag, size = 0x4, scoped, tag = 'scoped memory for tpu_custom_call.1']
    %12 = vsyncpa [#allocation4], 0
    // Predicated region
    $region2: #{tpu_custom_call.1} parent=1 // pred_check
      _
    $region3: #{tpu_custom_call.1} parent=1 // pred_check_branch
      %14 = sbr.rel (0) target = $region5
    $region4: #{tpu_custom_call.1} parent=1 // pred_region
      _
    $region5: #{tpu_custom_call.1} parent=1 // pred_fallthru
      _
    // Predicated region
    $region6: #{tpu_custom_call.1} parent=1 // pred_check
      _
    $region7: #{tpu_custom_call.1} parent=1 // pred_check_branch
      %16 = sbr.rel (0) target = $region9
    $region8: #{tpu_custom_call.1} parent=1 // pred_region
      _
    $region9: #{tpu_custom_call.1} parent=1 // pred_fallthru
      _
    // Predicated region
    $region10: #{tpu_custom_call.1} parent=1 // pred_check
      _
    $region11: #{tpu_custom_call.1} parent=1 // pred_check_branch
      %18 = sbr.rel (0) target = $region13
    $region12: #{tpu_custom_call.1} parent=1 // pred_region
      _
    $region13: #{tpu_custom_call.1} parent=1 // pred_fallthru
      _
    // Predicated region
    $region14: #{tpu_custom_call.1} parent=1 // pred_check
      _
    $region15: #{tpu_custom_call.1} parent=1 // pred_check_branch
      %20 = sbr.rel (0) target = $region17
    $region16: #{tpu_custom_call.1} parent=1 // pred_region
      _
    $region17: #{tpu_custom_call.1} parent=1 // pred_fallthru
      _
    // Predicated region
    $region18: #{tpu_custom_call.1} parent=1 // pred_check
      _
    $region19: #{tpu_custom_call.1} parent=1 // pred_check_branch
      %22 = sbr.rel (0) target = $region21
    $region20: #{tpu_custom_call.1} parent=1 // pred_region
      _
    $region21: #{tpu_custom_call.1} parent=1 // pred_fallthru
      _
    %v24 = vld [vmem:[%s0] sm:$0xff]
    %v25 = vld [vmem:[%s0 + $0x8] sm:$0xff]
    %v26 = vld [vmem:[%s0 + $0x10] sm:$0xff]
    %v27 = vld [vmem:[%s0 + $0x18] sm:$0xff]
    %v28 = vld [vmem:[%s0 + $0x20] sm:$0xff]
    %v29 = vld [vmem:[%s0 + $0x28] sm:$0xff]
    %v30 = vld [vmem:[%s0 + $0x30] sm:$0xff]
    %v31 = vld [vmem:[%s0 + $0x38] sm:$0xff]
    %v32 = vld [vmem:[%s0 + $0x40] sm:$0xff]
    %v33 = vld [vmem:[%s0 + $0x48] sm:$0xff]
    %v34 = vld [vmem:[%s0 + $0x50] sm:$0xff]
    %v35 = vld [vmem:[%s0 + $0x58] sm:$0xff]
    %v36 = vld [vmem:[%s0 + $0x60] sm:$0xff]
    %v37 = vld [vmem:[%s0 + $0x68] sm:$0xff]
    %v38 = vld [vmem:[%s0 + $0x70] sm:$0xff]
    %v39 = vld [vmem:[%s0 + $0x78] sm:$0xff]
    %v40 = vld [vmem:[%s0 + $0x80] sm:$0xff]
    %v41 = vld [vmem:[%s0 + $0x88] sm:$0xff]
    %v42 = vld [vmem:[%s0 + $0x90] sm:$0xff]
    %v43 = vld [vmem:[%s0 + $0x98] sm:$0xff]
    %v44 = vld [vmem:[%s0 + $0xa0] sm:$0xff]
    %v45 = vld [vmem:[%s0 + $0xa8] sm:$0xff]
    %v46 = vld [vmem:[%s0 + $0xb0] sm:$0xff]
    %v47 = vld [vmem:[%s0 + $0xb8] sm:$0xff]
    %v48 = vld [vmem:[%s0 + $0xc0] sm:$0xff]
    %v49 = vld [vmem:[%s0 + $0xc8] sm:$0xff]
    %v50 = vld [vmem:[%s0 + $0xd0] sm:$0xff]
    %v51 = vld [vmem:[%s0 + $0xd8] sm:$0xff]
    %v52 = vld [vmem:[%s0 + $0xe0] sm:$0xff]
    %v53 = vld [vmem:[%s0 + $0xe8] sm:$0xff]
    %v54 = vld [vmem:[%s0 + $0xf0] sm:$0xff]
    %v55 = vld [vmem:[%s0 + $0xf8] sm:$0xff]
    %v56 = vld [vmem:[%s0 + $0x100] sm:$0xff]
    %v57 = vld [vmem:[%s0 + $0x108] sm:$0xff]
    %v58 = vld [vmem:[%s0 + $0x110] sm:$0xff]
    %v59 = vld [vmem:[%s0 + $0x118] sm:$0xff]
    %v60 = vld [vmem:[%s0 + $0x120] sm:$0xff]
    %v61 = vld [vmem:[%s0 + $0x128] sm:$0xff]
    %v62 = vld [vmem:[%s0 + $0x130] sm:$0xff]
    %v63 = vld [vmem:[%s0 + $0x138] sm:$0xff]
    %v64 = vld [vmem:[%s0 + $0x140] sm:$0xff]
    %v65 = vld [vmem:[%s0 + $0x148] sm:$0xff]
    %v66 = vld [vmem:[%s0 + $0x150] sm:$0xff]
    %v67 = vld [vmem:[%s0 + $0x158] sm:$0xff]
    %v68 = vld [vmem:[%s0 + $0x160] sm:$0xff]
    %v69 = vld [vmem:[%s0 + $0x168] sm:$0xff]
    %v70 = vld [vmem:[%s0 + $0x170] sm:$0xff]
    %v71 = vld [vmem:[%s0 + $0x178] sm:$0xff]
    %v72 = vld [vmem:[%s0 + $0x180] sm:$0xff]
    %v73 = vld [vmem:[%s0 + $0x188] sm:$0xff]
    %v74 = vld [vmem:[%s0 + $0x190] sm:$0xff]
    %v75 = vld [vmem:[%s0 + $0x198] sm:$0xff]
    %v76 = vld [vmem:[%s0 + $0x1a0] sm:$0xff]
    %v77 = vld [vmem:[%s0 + $0x1a8] sm:$0xff]
    %v78 = vld [vmem:[%s0 + $0x1b0] sm:$0xff]
    %v79 = vld [vmem:[%s0 + $0x1b8] sm:$0xff]
    %v80 = vld [vmem:[%s0 + $0x1c0] sm:$0xff]
    %v81 = vld [vmem:[%s0 + $0x1c8] sm:$0xff]
    %v82 = vld [vmem:[%s0 + $0x1d0] sm:$0xff]
    %v83 = vld [vmem:[%s0 + $0x1d8] sm:$0xff]
    %v84 = vld [vmem:[%s0 + $0x1e0] sm:$0xff]
    %v85 = vld [vmem:[%s0 + $0x1e8] sm:$0xff]
    %v86 = vld [vmem:[%s0 + $0x1f0] sm:$0xff]
    %v87 = vld [vmem:[%s0 + $0x1f8] sm:$0xff]
    %v88 = vld [vmem:[%s0 + $0x200] sm:$0xff]
    %v89 = vld [vmem:[%s0 + $0x208] sm:$0xff]
    %v90 = vld [vmem:[%s0 + $0x210] sm:$0xff]
    %v91 = vld [vmem:[%s0 + $0x218] sm:$0xff]
    %v92 = vld [vmem:[%s0 + $0x220] sm:$0xff]
    %v93 = vld [vmem:[%s0 + $0x228] sm:$0xff]
    %v94 = vld [vmem:[%s0 + $0x230] sm:$0xff]
    %v95 = vld [vmem:[%s0 + $0x238] sm:$0xff]
    %v96 = vld [vmem:[%s0 + $0x240] sm:$0xff]
    %v97 = vld [vmem:[%s0 + $0x248] sm:$0xff]
    %v98 = vld [vmem:[%s0 + $0x250] sm:$0xff]
    %v99 = vld [vmem:[%s0 + $0x258] sm:$0xff]
    %v100 = vld [vmem:[%s0 + $0x260] sm:$0xff]
    %v101 = vld [vmem:[%s0 + $0x268] sm:$0xff]
    %v102 = vld [vmem:[%s0 + $0x270] sm:$0xff]
    %v103 = vld [vmem:[%s0 + $0x278] sm:$0xff]
    %v104 = vld [vmem:[%s0 + $0x280] sm:$0xff]
    %v105 = vld [vmem:[%s0 + $0x288] sm:$0xff]
    %v106 = vld [vmem:[%s0 + $0x290] sm:$0xff]
    %v107 = vld [vmem:[%s0 + $0x298] sm:$0xff]
    %v108 = vld [vmem:[%s0 + $0x2a0] sm:$0xff]
    %v109 = vld [vmem:[%s0 + $0x2a8] sm:$0xff]
    %v110 = vld [vmem:[%s0 + $0x2b0] sm:$0xff]
    %v111 = vld [vmem:[%s0 + $0x2b8] sm:$0xff]
    %v112 = vld [vmem:[%s0 + $0x2c0] sm:$0xff]
    %v113 = vld [vmem:[%s0 + $0x2c8] sm:$0xff]
    %v114 = vld [vmem:[%s0 + $0x2d0] sm:$0xff]
    %v115 = vld [vmem:[%s0 + $0x2d8] sm:$0xff]
    %v116 = vld [vmem:[%s0 + $0x2e0] sm:$0xff]
    %v117 = vld [vmem:[%s0 + $0x2e8] sm:$0xff]
    %v118 = vld [vmem:[%s0 + $0x2f0] sm:$0xff]
    %v119 = vld [vmem:[%s0 + $0x2f8] sm:$0xff]
    %v120 = vld [vmem:[%s0 + $0x300] sm:$0xff]
    %v121 = vld [vmem:[%s0 + $0x308] sm:$0xff]
    %v122 = vld [vmem:[%s0 + $0x310] sm:$0xff]
    %v123 = vld [vmem:[%s0 + $0x318] sm:$0xff]
    %v124 = vld [vmem:[%s0 + $0x320] sm:$0xff]
    %v125 = vld [vmem:[%s0 + $0x328] sm:$0xff]
    %v126 = vld [vmem:[%s0 + $0x330] sm:$0xff]
    %v127 = vld [vmem:[%s0 + $0x338] sm:$0xff]
    %v128 = vld [vmem:[%s0 + $0x340] sm:$0xff]
    %v129 = vld [vmem:[%s0 + $0x348] sm:$0xff]
    %v130 = vld [vmem:[%s0 + $0x350] sm:$0xff]
    %v131 = vld [vmem:[%s0 + $0x358] sm:$0xff]
    %v132 = vld [vmem:[%s0 + $0x360] sm:$0xff]
    %v133 = vld [vmem:[%s0 + $0x368] sm:$0xff]
    %v134 = vld [vmem:[%s0 + $0x370] sm:$0xff]
    %v135 = vld [vmem:[%s0 + $0x378] sm:$0xff]
    %v136 = vpack.c.bf16 %v31, %v24
    %v137 = vpack.c.bf16 %v32, %v25
    %v138 = vpack.c.bf16 %v33, %v26
    %v139 = vpack.c.bf16 %v34, %v27
    %v140 = vpack.c.bf16 %v35, %v28
    %v141 = vpack.c.bf16 %v36, %v29
    %v142 = vpack.c.bf16 %v37, %v30
    %v143 = vpack.c.bf16 %v45, %v38
    %v144 = vpack.c.bf16 %v46, %v39
    %v145 = vpack.c.bf16 %v47, %v40
    %v146 = vpack.c.bf16 %v48, %v41
    %v147 = vpack.c.bf16 %v49, %v42
    %v148 = vpack.c.bf16 %v50, %v43
    %v149 = vpack.c.bf16 %v51, %v44
    %v150 = vpack.c.bf16 %v59, %v52
    %v151 = vpack.c.bf16 %v60, %v53
    %v152 = vpack.c.bf16 %v61, %v54
    %v153 = vpack.c.bf16 %v62, %v55
    %v154 = vpack.c.bf16 %v63, %v56
    %v155 = vpack.c.bf16 %v64, %v57
    %v156 = vpack.c.bf16 %v65, %v58
    %v157 = vpack.c.bf16 %v73, %v66
    %v158 = vpack.c.bf16 %v74, %v67
    %v159 = vpack.c.bf16 %v75, %v68
    %v160 = vpack.c.bf16 %v76, %v69
    %v161 = vpack.c.bf16 %v77, %v70
    %v162 = vpack.c.bf16 %v78, %v71
    %v163 = vpack.c.bf16 %v79, %v72
    %v164 = vpack.c.bf16 %v87, %v80
    %v165 = vpack.c.bf16 %v88, %v81
    %v166 = vpack.c.bf16 %v89, %v82
    %v167 = vpack.c.bf16 %v90, %v83
    %v168 = vpack.c.bf16 %v91, %v84
    %v169 = vpack.c.bf16 %v92, %v85
    %v170 = vpack.c.bf16 %v93, %v86
    %v171 = vpack.c.bf16 %v101, %v94
    %v172 = vpack.c.bf16 %v102, %v95
    %v173 = vpack.c.bf16 %v103, %v96
    %v174 = vpack.c.bf16 %v104, %v97
    %v175 = vpack.c.bf16 %v105, %v98
    %v176 = vpack.c.bf16 %v106, %v99
    %v177 = vpack.c.bf16 %v107, %v100
    %v178 = vpack.c.bf16 %v115, %v108
    %v179 = vpack.c.bf16 %v116, %v109
    %v180 = vpack.c.bf16 %v117, %v110
    %v181 = vpack.c.bf16 %v118, %v111
    %v182 = vpack.c.bf16 %v119, %v112
    %v183 = vpack.c.bf16 %v120, %v113
    %v184 = vpack.c.bf16 %v121, %v114
    %v185 = vpack.c.bf16 %v129, %v122
    %v186 = vpack.c.bf16 %v130, %v123
    %v187 = vpack.c.bf16 %v131, %v124
    %v188 = vpack.c.bf16 %v132, %v125
    %v189 = vpack.c.bf16 %v133, %v126
    %v190 = vpack.c.bf16 %v134, %v127
    %v191 = vpack.c.bf16 %v135, %v128
    %v192 = vld [vmem:[%s1] sm:$0xff]
    %v193 = vld [vmem:[%s1 + $0x8] sm:$0xff]
    %v194 = vld [vmem:[%s1 + $0x10] sm:$0xff]
    %v195 = vld [vmem:[%s1 + $0x18] sm:$0xf]
    %v196 = vld [vmem:[%s1 + $0x1c] sm:$0xff]
    %v197 = vld [vmem:[%s1 + $0x24] sm:$0xff]
    %v198 = vld [vmem:[%s1 + $0x2c] sm:$0xff]
    %v199 = vld [vmem:[%s1 + $0x34] sm:$0xf]
    %v200 = vld [vmem:[%s1 + $0x38] sm:$0xff]
    %v201 = vld [vmem:[%s1 + $0x40] sm:$0xff]
    %v202 = vld [vmem:[%s1 + $0x48] sm:$0xff]
    %v203 = vld [vmem:[%s1 + $0x50] sm:$0xf]
    %v204 = vld [vmem:[%s1 + $0x54] sm:$0xff]
    %v205 = vld [vmem:[%s1 + $0x5c] sm:$0xff]
    %v206 = vld [vmem:[%s1 + $0x64] sm:$0xff]
    %v207 = vld [vmem:[%s1 + $0x6c] sm:$0xf]
    %v208 = vld [vmem:[%s1 + $0x70] sm:$0xff]
    %v209 = vld [vmem:[%s1 + $0x78] sm:$0xff]
    %v210 = vld [vmem:[%s1 + $0x80] sm:$0xff]
    %v211 = vld [vmem:[%s1 + $0x88] sm:$0xf]
    %v212 = vld [vmem:[%s1 + $0x8c] sm:$0xff]
    %v213 = vld [vmem:[%s1 + $0x94] sm:$0xff]
    %v214 = vld [vmem:[%s1 + $0x9c] sm:$0xff]
    %v215 = vld [vmem:[%s1 + $0xa4] sm:$0xf]
    %v216 = vld [vmem:[%s1 + $0xa8] sm:$0xff]
    %v217 = vld [vmem:[%s1 + $0xb0] sm:$0xff]
    %v218 = vld [vmem:[%s1 + $0xb8] sm:$0xff]
    %v219 = vld [vmem:[%s1 + $0xc0] sm:$0xf]
    %v220 = vld [vmem:[%s1 + $0xc4] sm:$0xff]
    %v221 = vld [vmem:[%s1 + $0xcc] sm:$0xff]
    %v222 = vld [vmem:[%s1 + $0xd4] sm:$0xff]
    %v223 = vld [vmem:[%s1 + $0xdc] sm:$0xf]
    %v224 = vld [vmem:[%s1 + $0xe0] sm:$0xff]
    %v225 = vld [vmem:[%s1 + $0xe8] sm:$0xff]
    %v226 = vld [vmem:[%s1 + $0xf0] sm:$0xff]
    %v227 = vld [vmem:[%s1 + $0xf8] sm:$0xf]
    %v228 = vld [vmem:[%s1 + $0xfc] sm:$0xff]
    %v229 = vld [vmem:[%s1 + $0x104] sm:$0xff]
    %v230 = vld [vmem:[%s1 + $0x10c] sm:$0xff]
    %v231 = vld [vmem:[%s1 + $0x114] sm:$0xf]
    %v232 = vld [vmem:[%s1 + $0x118] sm:$0xff]
    %v233 = vld [vmem:[%s1 + $0x120] sm:$0xff]
    %v234 = vld [vmem:[%s1 + $0x128] sm:$0xff]
    %v235 = vld [vmem:[%s1 + $0x130] sm:$0xf]
    %v236 = vld [vmem:[%s1 + $0x134] sm:$0xff]
    %v237 = vld [vmem:[%s1 + $0x13c] sm:$0xff]
    %v238 = vld [vmem:[%s1 + $0x144] sm:$0xff]
    %v239 = vld [vmem:[%s1 + $0x14c] sm:$0xf]
    %v240 = vld [vmem:[%s1 + $0x150] sm:$0xff]
    %v241 = vld [vmem:[%s1 + $0x158] sm:$0xff]
    %v242 = vld [vmem:[%s1 + $0x160] sm:$0xff]
    %v243 = vld [vmem:[%s1 + $0x168] sm:$0xf]
    %v244 = vld [vmem:[%s1 + $0x16c] sm:$0xff]
    %v245 = vld [vmem:[%s1 + $0x174] sm:$0xff]
    %v246 = vld [vmem:[%s1 + $0x17c] sm:$0xff]
    %v247 = vld [vmem:[%s1 + $0x184] sm:$0xf]
    %v248 = vld [vmem:[%s1 + $0x188] sm:$0xff]
    %v249 = vld [vmem:[%s1 + $0x190] sm:$0xff]
    %v250 = vld [vmem:[%s1 + $0x198] sm:$0xff]
    %v251 = vld [vmem:[%s1 + $0x1a0] sm:$0xf]
    %v252 = vld [vmem:[%s1 + $0x1a4] sm:$0xff]
    %v253 = vld [vmem:[%s1 + $0x1ac] sm:$0xff]
    %v254 = vld [vmem:[%s1 + $0x1b4] sm:$0xff]
    %v255 = vld [vmem:[%s1 + $0x1bc] sm:$0xf]
    %v256 = vld [vmem:[%s1 + $0x1c0] sm:$0xff]
    %v257 = vld [vmem:[%s1 + $0x1c8] sm:$0xff]
    %v258 = vld [vmem:[%s1 + $0x1d0] sm:$0xff]
    %v259 = vld [vmem:[%s1 + $0x1d8] sm:$0xf]
    %v260 = vld [vmem:[%s1 + $0x1dc] sm:$0xff]
    %v261 = vld [vmem:[%s1 + $0x1e4] sm:$0xff]
    %v262 = vld [vmem:[%s1 + $0x1ec] sm:$0xff]
    %v263 = vld [vmem:[%s1 + $0x1f4] sm:$0xf]
    %v264 = vld [vmem:[%s1 + $0x1f8] sm:$0xff]
    %v265 = vld [vmem:[%s1 + $0x200] sm:$0xff]
    %v266 = vld [vmem:[%s1 + $0x208] sm:$0xff]
    %v267 = vld [vmem:[%s1 + $0x210] sm:$0xf]
    %v268 = vld [vmem:[%s1 + $0x214] sm:$0xff]
    %v269 = vld [vmem:[%s1 + $0x21c] sm:$0xff]
    %v270 = vld [vmem:[%s1 + $0x224] sm:$0xff]
    %v271 = vld [vmem:[%s1 + $0x22c] sm:$0xf]
    %v272 = vld [vmem:[%s1 + $0x230] sm:$0xff]
    %v273 = vld [vmem:[%s1 + $0x238] sm:$0xff]
    %v274 = vld [vmem:[%s1 + $0x240] sm:$0xff]
    %v275 = vld [vmem:[%s1 + $0x248] sm:$0xf]
    %v276 = vld [vmem:[%s1 + $0x24c] sm:$0xff]
    %v277 = vld [vmem:[%s1 + $0x254] sm:$0xff]
    %v278 = vld [vmem:[%s1 + $0x25c] sm:$0xff]
    %v279 = vld [vmem:[%s1 + $0x264] sm:$0xf]
    %v280 = vld [vmem:[%s1 + $0x268] sm:$0xff]
    %v281 = vld [vmem:[%s1 + $0x270] sm:$0xff]
    %v282 = vld [vmem:[%s1 + $0x278] sm:$0xff]
    %v283 = vld [vmem:[%s1 + $0x280] sm:$0xf]
    %v284 = vld [vmem:[%s1 + $0x284] sm:$0xff]
    %v285 = vld [vmem:[%s1 + $0x28c] sm:$0xff]
    %v286 = vld [vmem:[%s1 + $0x294] sm:$0xff]
    %v287 = vld [vmem:[%s1 + $0x29c] sm:$0xf]
    %v288 = vld [vmem:[%s1 + $0x2a0] sm:$0xff]
    %v289 = vld [vmem:[%s1 + $0x2a8] sm:$0xff]
    %v290 = vld [vmem:[%s1 + $0x2b0] sm:$0xff]
    %v291 = vld [vmem:[%s1 + $0x2b8] sm:$0xf]
    %v292 = vld [vmem:[%s1 + $0x2bc] sm:$0xff]
    %v293 = vld [vmem:[%s1 + $0x2c4] sm:$0xff]
    %v294 = vld [vmem:[%s1 + $0x2cc] sm:$0xff]
    %v295 = vld [vmem:[%s1 + $0x2d4] sm:$0xf]
    %v296 = vld [vmem:[%s1 + $0x2d8] sm:$0xff]
    %v297 = vld [vmem:[%s1 + $0x2e0] sm:$0xff]
    %v298 = vld [vmem:[%s1 + $0x2e8] sm:$0xff]
    %v299 = vld [vmem:[%s1 + $0x2f0] sm:$0xf]
    %v300 = vld [vmem:[%s1 + $0x2f4] sm:$0xff]
    %v301 = vld [vmem:[%s1 + $0x2fc] sm:$0xff]
    %v302 = vld [vmem:[%s1 + $0x304] sm:$0xff]
    %v303 = vld [vmem:[%s1 + $0x30c] sm:$0xf]
    %v304 = vld [vmem:[%s1 + $0x310] sm:$0xff]
    %v305 = vld [vmem:[%s1 + $0x318] sm:$0xff]
    %v306 = vld [vmem:[%s1 + $0x320] sm:$0xff]
    %v307 = vld [vmem:[%s1 + $0x328] sm:$0xf]
    %v308 = vld [vmem:[%s1 + $0x32c] sm:$0xff]
    %v309 = vld [vmem:[%s1 + $0x334] sm:$0xff]
    %v310 = vld [vmem:[%s1 + $0x33c] sm:$0xff]
    %v311 = vld [vmem:[%s1 + $0x344] sm:$0xf]
    %v312 = vld [vmem:[%s1 + $0x348] sm:$0xff]
    %v313 = vld [vmem:[%s1 + $0x350] sm:$0xff]
    %v314 = vld [vmem:[%s1 + $0x358] sm:$0xff]
    %v315 = vld [vmem:[%s1 + $0x360] sm:$0xf]
    %v316 = vld [vmem:[%s1 + $0x364] sm:$0xff]
    %v317 = vld [vmem:[%s1 + $0x36c] sm:$0xff]
    %v318 = vld [vmem:[%s1 + $0x374] sm:$0xff]
    %v319 = vld [vmem:[%s1 + $0x37c] sm:$0xf]
    %v320 = vld [vmem:[%s1 + $0x380] sm:$0xff]
    %v321 = vld [vmem:[%s1 + $0x388] sm:$0xff]
    %v322 = vld [vmem:[%s1 + $0x390] sm:$0xff]
    %v323 = vld [vmem:[%s1 + $0x398] sm:$0xf]
    %v324 = vld [vmem:[%s1 + $0x39c] sm:$0xff]
    %v325 = vld [vmem:[%s1 + $0x3a4] sm:$0xff]
    %v326 = vld [vmem:[%s1 + $0x3ac] sm:$0xff]
    %v327 = vld [vmem:[%s1 + $0x3b4] sm:$0xf]
    %v328 = vld [vmem:[%s1 + $0x3b8] sm:$0xff]
    %v329 = vld [vmem:[%s1 + $0x3c0] sm:$0xff]
    %v330 = vld [vmem:[%s1 + $0x3c8] sm:$0xff]
    %v331 = vld [vmem:[%s1 + $0x3d0] sm:$0xf]
    %v332 = vld [vmem:[%s1 + $0x3d4] sm:$0xff]
    %v333 = vld [vmem:[%s1 + $0x3dc] sm:$0xff]
    %v334 = vld [vmem:[%s1 + $0x3e4] sm:$0xff]
    %v335 = vld [vmem:[%s1 + $0x3ec] sm:$0xf]
    %v336 = vld [vmem:[%s1 + $0x3f0] sm:$0xff]
    %v337 = vld [vmem:[%s1 + $0x3f8] sm:$0xff]
    %v338 = vld [vmem:[%s1 + $0x400] sm:$0xff]
    %v339 = vld [vmem:[%s1 + $0x408] sm:$0xf]
    %v340 = vld [vmem:[%s1 + $0x40c] sm:$0xff]
    %v341 = vld [vmem:[%s1 + $0x414] sm:$0xff]
    %v342 = vld [vmem:[%s1 + $0x41c] sm:$0xff]
    %v343 = vld [vmem:[%s1 + $0x424] sm:$0xf]
    %v344 = vld [vmem:[%s1 + $0x428] sm:$0xff]
    %v345 = vld [vmem:[%s1 + $0x430] sm:$0xff]
    %v346 = vld [vmem:[%s1 + $0x438] sm:$0xff]
    %v347 = vld [vmem:[%s1 + $0x440] sm:$0xf]
    %v348 = vld [vmem:[%s1 + $0x444] sm:$0xff]
    %v349 = vld [vmem:[%s1 + $0x44c] sm:$0xff]
    %v350 = vld [vmem:[%s1 + $0x454] sm:$0xff]
    %v351 = vld [vmem:[%s1 + $0x45c] sm:$0xf]
    %v352 = vld [vmem:[%s1 + $0x460] sm:$0xff]
    %v353 = vld [vmem:[%s1 + $0x468] sm:$0xff]
    %v354 = vld [vmem:[%s1 + $0x470] sm:$0xff]
    %v355 = vld [vmem:[%s1 + $0x478] sm:$0xf]
    %v356 = vld [vmem:[%s1 + $0x47c] sm:$0xff]
    %v357 = vld [vmem:[%s1 + $0x484] sm:$0xff]
    %v358 = vld [vmem:[%s1 + $0x48c] sm:$0xff]
    %v359 = vld [vmem:[%s1 + $0x494] sm:$0xf]
    %v360 = vld [vmem:[%s1 + $0x498] sm:$0xff]
    %v361 = vld [vmem:[%s1 + $0x4a0] sm:$0xff]
    %v362 = vld [vmem:[%s1 + $0x4a8] sm:$0xff]
    %v363 = vld [vmem:[%s1 + $0x4b0] sm:$0xf]
    %v364 = vld [vmem:[%s1 + $0x4b4] sm:$0xff]
    %v365 = vld [vmem:[%s1 + $0x4bc] sm:$0xff]
    %v366 = vld [vmem:[%s1 + $0x4c4] sm:$0xff]
    %v367 = vld [vmem:[%s1 + $0x4cc] sm:$0xf]
    %v368 = vld [vmem:[%s1 + $0x4d0] sm:$0xff]
    %v369 = vld [vmem:[%s1 + $0x4d8] sm:$0xff]
    %v370 = vld [vmem:[%s1 + $0x4e0] sm:$0xff]
    %v371 = vld [vmem:[%s1 + $0x4e8] sm:$0xf]
    %v372 = vld [vmem:[%s1 + $0x4ec] sm:$0xff]
    %v373 = vld [vmem:[%s1 + $0x4f4] sm:$0xff]
    %v374 = vld [vmem:[%s1 + $0x4fc] sm:$0xff]
    %v375 = vld [vmem:[%s1 + $0x504] sm:$0xf]
    %v376 = vld [vmem:[%s1 + $0x508] sm:$0xff]
    %v377 = vld [vmem:[%s1 + $0x510] sm:$0xff]
    %v378 = vld [vmem:[%s1 + $0x518] sm:$0xff]
    %v379 = vld [vmem:[%s1 + $0x520] sm:$0xf]
    %v380 = vld [vmem:[%s1 + $0x524] sm:$0xff]
    %v381 = vld [vmem:[%s1 + $0x52c] sm:$0xff]
    %v382 = vld [vmem:[%s1 + $0x534] sm:$0xff]
    %v383 = vld [vmem:[%s1 + $0x53c] sm:$0xf]
    %v384 = vld [vmem:[%s1 + $0x540] sm:$0xff]
    %v385 = vld [vmem:[%s1 + $0x548] sm:$0xff]
    %v386 = vld [vmem:[%s1 + $0x550] sm:$0xff]
    %v387 = vld [vmem:[%s1 + $0x558] sm:$0xf]
    %v388 = vld [vmem:[%s1 + $0x55c] sm:$0xff]
    %v389 = vld [vmem:[%s1 + $0x564] sm:$0xff]
    %v390 = vld [vmem:[%s1 + $0x56c] sm:$0xff]
    %v391 = vld [vmem:[%s1 + $0x574] sm:$0xf]
    %v392 = vld [vmem:[%s1 + $0x578] sm:$0xff]
    %v393 = vld [vmem:[%s1 + $0x580] sm:$0xff]
    %v394 = vld [vmem:[%s1 + $0x588] sm:$0xff]
    %v395 = vld [vmem:[%s1 + $0x590] sm:$0xf]
    %v396 = vld [vmem:[%s1 + $0x594] sm:$0xff]
    %v397 = vld [vmem:[%s1 + $0x59c] sm:$0xff]
    %v398 = vld [vmem:[%s1 + $0x5a4] sm:$0xff]
    %v399 = vld [vmem:[%s1 + $0x5ac] sm:$0xf]
    %v400 = vld [vmem:[%s1 + $0x5b0] sm:$0xff]
    %v401 = vld [vmem:[%s1 + $0x5b8] sm:$0xff]
    %v402 = vld [vmem:[%s1 + $0x5c0] sm:$0xff]
    %v403 = vld [vmem:[%s1 + $0x5c8] sm:$0xf]
    %v404 = vld [vmem:[%s1 + $0x5cc] sm:$0xff]
    %v405 = vld [vmem:[%s1 + $0x5d4] sm:$0xff]
    %v406 = vld [vmem:[%s1 + $0x5dc] sm:$0xff]
    %v407 = vld [vmem:[%s1 + $0x5e4] sm:$0xf]
    %v408 = vld [vmem:[%s1 + $0x5e8] sm:$0xff]
    %v409 = vld [vmem:[%s1 + $0x5f0] sm:$0xff]
    %v410 = vld [vmem:[%s1 + $0x5f8] sm:$0xff]
    %v411 = vld [vmem:[%s1 + $0x600] sm:$0xf]
    %v412 = vld [vmem:[%s1 + $0x604] sm:$0xff]
    %v413 = vld [vmem:[%s1 + $0x60c] sm:$0xff]
    %v414 = vld [vmem:[%s1 + $0x614] sm:$0xff]
    %v415 = vld [vmem:[%s1 + $0x61c] sm:$0xf]
    %v416 = vld [vmem:[%s1 + $0x620] sm:$0xff]
    %v417 = vld [vmem:[%s1 + $0x628] sm:$0xff]
    %v418 = vld [vmem:[%s1 + $0x630] sm:$0xff]
    %v419 = vld [vmem:[%s1 + $0x638] sm:$0xf]
    %v420 = vld [vmem:[%s1 + $0x63c] sm:$0xff]
    %v421 = vld [vmem:[%s1 + $0x644] sm:$0xff]
    %v422 = vld [vmem:[%s1 + $0x64c] sm:$0xff]
    %v423 = vld [vmem:[%s1 + $0x654] sm:$0xf]
    %v424 = vld [vmem:[%s1 + $0x658] sm:$0xff]
    %v425 = vld [vmem:[%s1 + $0x660] sm:$0xff]
    %v426 = vld [vmem:[%s1 + $0x668] sm:$0xff]
    %v427 = vld [vmem:[%s1 + $0x670] sm:$0xf]
    %v428 = vld [vmem:[%s1 + $0x674] sm:$0xff]
    %v429 = vld [vmem:[%s1 + $0x67c] sm:$0xff]
    %v430 = vld [vmem:[%s1 + $0x684] sm:$0xff]
    %v431 = vld [vmem:[%s1 + $0x68c] sm:$0xf]
    %v432 = vld [vmem:[%s1 + $0x690] sm:$0xff]
    %v433 = vld [vmem:[%s1 + $0x698] sm:$0xff]
    %v434 = vld [vmem:[%s1 + $0x6a0] sm:$0xff]
    %v435 = vld [vmem:[%s1 + $0x6a8] sm:$0xf]
    %v436 = vld [vmem:[%s1 + $0x6ac] sm:$0xff]
    %v437 = vld [vmem:[%s1 + $0x6b4] sm:$0xff]
    %v438 = vld [vmem:[%s1 + $0x6bc] sm:$0xff]
    %v439 = vld [vmem:[%s1 + $0x6c4] sm:$0xf]
    %v440 = vld [vmem:[%s1 + $0x6c8] sm:$0xff]
    %v441 = vld [vmem:[%s1 + $0x6d0] sm:$0xff]
    %v442 = vld [vmem:[%s1 + $0x6d8] sm:$0xff]
    %v443 = vld [vmem:[%s1 + $0x6e0] sm:$0xf]
    %v444 = vld [vmem:[%s1 + $0x6e4] sm:$0xff]
    %v445 = vld [vmem:[%s1 + $0x6ec] sm:$0xff]
    %v446 = vld [vmem:[%s1 + $0x6f4] sm:$0xff]
    %v447 = vld [vmem:[%s1 + $0x6fc] sm:$0xf]
    %v704 = vunpack.c.l.b16 %v192
    %v705 = vunpack.c.h.b16 %v192
    %v706 = vunpack.c.l.b16 %v193
    %v707 = vunpack.c.h.b16 %v193
    %v708 = vunpack.c.l.b16 %v194
    %v709 = vunpack.c.h.b16 %v194
    %v710 = vunpack.c.l.b16 %v195
    %v711 = vunpack.c.l.b16 %v196
    %v712 = vunpack.c.h.b16 %v196
    %v713 = vunpack.c.l.b16 %v197
    %v714 = vunpack.c.h.b16 %v197
    %v715 = vunpack.c.l.b16 %v198
    %v716 = vunpack.c.h.b16 %v198
    %v717 = vunpack.c.l.b16 %v199
    %v718 = vunpack.c.l.b16 %v200
    %v719 = vunpack.c.h.b16 %v200
    %v720 = vunpack.c.l.b16 %v201
    %v721 = vunpack.c.h.b16 %v201
    %v722 = vunpack.c.l.b16 %v202
    %v723 = vunpack.c.h.b16 %v202
    %v724 = vunpack.c.l.b16 %v203
    %v725 = vunpack.c.l.b16 %v204
    %v726 = vunpack.c.h.b16 %v204
    %v727 = vunpack.c.l.b16 %v205
    %v728 = vunpack.c.h.b16 %v205
    %v729 = vunpack.c.l.b16 %v206
    %v730 = vunpack.c.h.b16 %v206
    %v731 = vunpack.c.l.b16 %v207
    %v732 = vunpack.c.l.b16 %v208
    %v733 = vunpack.c.h.b16 %v208
    %v734 = vunpack.c.l.b16 %v209
    %v735 = vunpack.c.h.b16 %v209
    %v736 = vunpack.c.l.b16 %v210
    %v737 = vunpack.c.h.b16 %v210
    %v738 = vunpack.c.l.b16 %v211
    %v739 = vunpack.c.l.b16 %v212
    %v740 = vunpack.c.h.b16 %v212
    %v741 = vunpack.c.l.b16 %v213
    %v742 = vunpack.c.h.b16 %v213
    %v743 = vunpack.c.l.b16 %v214
    %v744 = vunpack.c.h.b16 %v214
    %v745 = vunpack.c.l.b16 %v215
    %v746 = vunpack.c.l.b16 %v216
    %v747 = vunpack.c.h.b16 %v216
    %v748 = vunpack.c.l.b16 %v217
    %v749 = vunpack.c.h.b16 %v217
    %v750 = vunpack.c.l.b16 %v218
    %v751 = vunpack.c.h.b16 %v218
    %v752 = vunpack.c.l.b16 %v219
    %v753 = vunpack.c.l.b16 %v220
    %v754 = vunpack.c.h.b16 %v220
    %v755 = vunpack.c.l.b16 %v221
    %v756 = vunpack.c.h.b16 %v221
    %v757 = vunpack.c.l.b16 %v222
    %v758 = vunpack.c.h.b16 %v222
    %v759 = vunpack.c.l.b16 %v223
    %v760 = vunpack.c.l.b16 %v224
    %v761 = vunpack.c.h.b16 %v224
    %v762 = vunpack.c.l.b16 %v225
    %v763 = vunpack.c.h.b16 %v225
    %v764 = vunpack.c.l.b16 %v226
    %v765 = vunpack.c.h.b16 %v226
    %v766 = vunpack.c.l.b16 %v227
    %v767 = vunpack.c.l.b16 %v228
    %v768 = vunpack.c.h.b16 %v228
    %v769 = vunpack.c.l.b16 %v229
    %v770 = vunpack.c.h.b16 %v229
    %v771 = vunpack.c.l.b16 %v230
    %v772 = vunpack.c.h.b16 %v230
    %v773 = vunpack.c.l.b16 %v231
    %v774 = vunpack.c.l.b16 %v232
    %v775 = vunpack.c.h.b16 %v232
    %v776 = vunpack.c.l.b16 %v233
    %v777 = vunpack.c.h.b16 %v233
    %v778 = vunpack.c.l.b16 %v234
    %v779 = vunpack.c.h.b16 %v234
    %v780 = vunpack.c.l.b16 %v235
    %v781 = vunpack.c.l.b16 %v236
    %v782 = vunpack.c.h.b16 %v236
    %v783 = vunpack.c.l.b16 %v237
    %v784 = vunpack.c.h.b16 %v237
    %v785 = vunpack.c.l.b16 %v238
    %v786 = vunpack.c.h.b16 %v238
    %v787 = vunpack.c.l.b16 %v239
    %v788 = vunpack.c.l.b16 %v240
    %v789 = vunpack.c.h.b16 %v240
    %v790 = vunpack.c.l.b16 %v241
    %v791 = vunpack.c.h.b16 %v241
    %v792 = vunpack.c.l.b16 %v242
    %v793 = vunpack.c.h.b16 %v242
    %v794 = vunpack.c.l.b16 %v243
    %v795 = vunpack.c.l.b16 %v244
    %v796 = vunpack.c.h.b16 %v244
    %v797 = vunpack.c.l.b16 %v245
    %v798 = vunpack.c.h.b16 %v245
    %v799 = vunpack.c.l.b16 %v246
    %v800 = vunpack.c.h.b16 %v246
    %v801 = vunpack.c.l.b16 %v247
    %v802 = vunpack.c.l.b16 %v248
    %v803 = vunpack.c.h.b16 %v248
    %v804 = vunpack.c.l.b16 %v249
    %v805 = vunpack.c.h.b16 %v249
    %v806 = vunpack.c.l.b16 %v250
    %v807 = vunpack.c.h.b16 %v250
    %v808 = vunpack.c.l.b16 %v251
    %v809 = vunpack.c.l.b16 %v252
    %v810 = vunpack.c.h.b16 %v252
    %v811 = vunpack.c.l.b16 %v253
    %v812 = vunpack.c.h.b16 %v253
    %v813 = vunpack.c.l.b16 %v254
    %v814 = vunpack.c.h.b16 %v254
    %v815 = vunpack.c.l.b16 %v255
    %v816 = vunpack.c.l.b16 %v256
    %v817 = vunpack.c.h.b16 %v256
    %v818 = vunpack.c.l.b16 %v257
    %v819 = vunpack.c.h.b16 %v257
    %v820 = vunpack.c.l.b16 %v258
    %v821 = vunpack.c.h.b16 %v258
    %v822 = vunpack.c.l.b16 %v259
    %v823 = vunpack.c.l.b16 %v260
    %v824 = vunpack.c.h.b16 %v260
    %v825 = vunpack.c.l.b16 %v261
    %v826 = vunpack.c.h.b16 %v261
    %v827 = vunpack.c.l.b16 %v262
    %v828 = vunpack.c.h.b16 %v262
    %v829 = vunpack.c.l.b16 %v263
    %v830 = vunpack.c.l.b16 %v264
    %v831 = vunpack.c.h.b16 %v264
    %v832 = vunpack.c.l.b16 %v265
    %v833 = vunpack.c.h.b16 %v265
    %v834 = vunpack.c.l.b16 %v266
    %v835 = vunpack.c.h.b16 %v266
    %v836 = vunpack.c.l.b16 %v267
    %v837 = vunpack.c.l.b16 %v268
    %v838 = vunpack.c.h.b16 %v268
    %v839 = vunpack.c.l.b16 %v269
    %v840 = vunpack.c.h.b16 %v269
    %v841 = vunpack.c.l.b16 %v270
    %v842 = vunpack.c.h.b16 %v270
    %v843 = vunpack.c.l.b16 %v271
    %v844 = vunpack.c.l.b16 %v272
    %v845 = vunpack.c.h.b16 %v272
    %v846 = vunpack.c.l.b16 %v273
    %v847 = vunpack.c.h.b16 %v273
    %v848 = vunpack.c.l.b16 %v274
    %v849 = vunpack.c.h.b16 %v274
    %v850 = vunpack.c.l.b16 %v275
    %v851 = vunpack.c.l.b16 %v276
    %v852 = vunpack.c.h.b16 %v276
    %v853 = vunpack.c.l.b16 %v277
    %v854 = vunpack.c.h.b16 %v277
    %v855 = vunpack.c.l.b16 %v278
    %v856 = vunpack.c.h.b16 %v278
    %v857 = vunpack.c.l.b16 %v279
    %v858 = vunpack.c.l.b16 %v280
    %v859 = vunpack.c.h.b16 %v280
    %v860 = vunpack.c.l.b16 %v281
    %v861 = vunpack.c.h.b16 %v281
    %v862 = vunpack.c.l.b16 %v282
    %v863 = vunpack.c.h.b16 %v282
    %v864 = vunpack.c.l.b16 %v283
    %v865 = vunpack.c.l.b16 %v284
    %v866 = vunpack.c.h.b16 %v284
    %v867 = vunpack.c.l.b16 %v285
    %v868 = vunpack.c.h.b16 %v285
    %v869 = vunpack.c.l.b16 %v286
    %v870 = vunpack.c.h.b16 %v286
    %v871 = vunpack.c.l.b16 %v287
    %v872 = vunpack.c.l.b16 %v288
    %v873 = vunpack.c.h.b16 %v288
    %v874 = vunpack.c.l.b16 %v289
    %v875 = vunpack.c.h.b16 %v289
    %v876 = vunpack.c.l.b16 %v290
    %v877 = vunpack.c.h.b16 %v290
    %v878 = vunpack.c.l.b16 %v291
    %v879 = vunpack.c.l.b16 %v292
    %v880 = vunpack.c.h.b16 %v292
    %v881 = vunpack.c.l.b16 %v293
    %v882 = vunpack.c.h.b16 %v293
    %v883 = vunpack.c.l.b16 %v294
    %v884 = vunpack.c.h.b16 %v294
    %v885 = vunpack.c.l.b16 %v295
    %v886 = vunpack.c.l.b16 %v296
    %v887 = vunpack.c.h.b16 %v296
    %v888 = vunpack.c.l.b16 %v297
    %v889 = vunpack.c.h.b16 %v297
    %v890 = vunpack.c.l.b16 %v298
    %v891 = vunpack.c.h.b16 %v298
    %v892 = vunpack.c.l.b16 %v299
    %v893 = vunpack.c.l.b16 %v300
    %v894 = vunpack.c.h.b16 %v300
    %v895 = vunpack.c.l.b16 %v301
    %v896 = vunpack.c.h.b16 %v301
    %v897 = vunpack.c.l.b16 %v302
    %v898 = vunpack.c.h.b16 %v302
    %v899 = vunpack.c.l.b16 %v303
    %v900 = vunpack.c.l.b16 %v304
    %v901 = vunpack.c.h.b16 %v304
    %v902 = vunpack.c.l.b16 %v305
    %v903 = vunpack.c.h.b16 %v305
    %v904 = vunpack.c.l.b16 %v306
    %v905 = vunpack.c.h.b16 %v306
    %v906 = vunpack.c.l.b16 %v307
    %v907 = vunpack.c.l.b16 %v308
    %v908 = vunpack.c.h.b16 %v308
    %v909 = vunpack.c.l.b16 %v309
    %v910 = vunpack.c.h.b16 %v309
    %v911 = vunpack.c.l.b16 %v310
    %v912 = vunpack.c.h.b16 %v310
    %v913 = vunpack.c.l.b16 %v311
    %v914 = vunpack.c.l.b16 %v312
    %v915 = vunpack.c.h.b16 %v312
    %v916 = vunpack.c.l.b16 %v313
    %v917 = vunpack.c.h.b16 %v313
    %v918 = vunpack.c.l.b16 %v314
    %v919 = vunpack.c.h.b16 %v314
    %v920 = vunpack.c.l.b16 %v315
    %v921 = vunpack.c.l.b16 %v316
    %v922 = vunpack.c.h.b16 %v316
    %v923 = vunpack.c.l.b16 %v317
    %v924 = vunpack.c.h.b16 %v317
    %v925 = vunpack.c.l.b16 %v318
    %v926 = vunpack.c.h.b16 %v318
    %v927 = vunpack.c.l.b16 %v319
    %v928 = vunpack.c.l.b16 %v320
    %v929 = vunpack.c.h.b16 %v320
    %v930 = vunpack.c.l.b16 %v321
    %v931 = vunpack.c.h.b16 %v321
    %v932 = vunpack.c.l.b16 %v322
    %v933 = vunpack.c.h.b16 %v322
    %v934 = vunpack.c.l.b16 %v323
    %v935 = vunpack.c.l.b16 %v324
    %v936 = vunpack.c.h.b16 %v324
    %v937 = vunpack.c.l.b16 %v325
    %v938 = vunpack.c.h.b16 %v325
    %v939 = vunpack.c.l.b16 %v326
    %v940 = vunpack.c.h.b16 %v326
    %v941 = vunpack.c.l.b16 %v327
    %v942 = vunpack.c.l.b16 %v328
    %v943 = vunpack.c.h.b16 %v328
    %v944 = vunpack.c.l.b16 %v329
    %v945 = vunpack.c.h.b16 %v329
    %v946 = vunpack.c.l.b16 %v330
    %v947 = vunpack.c.h.b16 %v330
    %v948 = vunpack.c.l.b16 %v331
    %v949 = vunpack.c.l.b16 %v332
    %v950 = vunpack.c.h.b16 %v332
    %v951 = vunpack.c.l.b16 %v333
    %v952 = vunpack.c.h.b16 %v333
    %v953 = vunpack.c.l.b16 %v334
    %v954 = vunpack.c.h.b16 %v334
    %v955 = vunpack.c.l.b16 %v335
    %v956 = vunpack.c.l.b16 %v336
    %v957 = vunpack.c.h.b16 %v336
    %v958 = vunpack.c.l.b16 %v337
    %v959 = vunpack.c.h.b16 %v337
    %v960 = vunpack.c.l.b16 %v338
    %v961 = vunpack.c.h.b16 %v338
    %v962 = vunpack.c.l.b16 %v339
    %v963 = vunpack.c.l.b16 %v340
    %v964 = vunpack.c.h.b16 %v340
    %v965 = vunpack.c.l.b16 %v341
    %v966 = vunpack.c.h.b16 %v341
    %v967 = vunpack.c.l.b16 %v342
    %v968 = vunpack.c.h.b16 %v342
    %v969 = vunpack.c.l.b16 %v343
    %v970 = vunpack.c.l.b16 %v344
    %v971 = vunpack.c.h.b16 %v344
    %v972 = vunpack.c.l.b16 %v345
    %v973 = vunpack.c.h.b16 %v345
    %v974 = vunpack.c.l.b16 %v346
    %v975 = vunpack.c.h.b16 %v346
    %v976 = vunpack.c.l.b16 %v347
    %v977 = vunpack.c.l.b16 %v348
    %v978 = vunpack.c.h.b16 %v348
    %v979 = vunpack.c.l.b16 %v349
    %v980 = vunpack.c.h.b16 %v349
    %v981 = vunpack.c.l.b16 %v350
    %v982 = vunpack.c.h.b16 %v350
    %v983 = vunpack.c.l.b16 %v351
    %v984 = vunpack.c.l.b16 %v352
    %v985 = vunpack.c.h.b16 %v352
    %v986 = vunpack.c.l.b16 %v353
    %v987 = vunpack.c.h.b16 %v353
    %v988 = vunpack.c.l.b16 %v354
    %v989 = vunpack.c.h.b16 %v354
    %v990 = vunpack.c.l.b16 %v355
    %v991 = vunpack.c.l.b16 %v356
    %v992 = vunpack.c.h.b16 %v356
    %v993 = vunpack.c.l.b16 %v357
    %v994 = vunpack.c.h.b16 %v357
    %v995 = vunpack.c.l.b16 %v358
    %v996 = vunpack.c.h.b16 %v358
    %v997 = vunpack.c.l.b16 %v359
    %v998 = vunpack.c.l.b16 %v360
    %v999 = vunpack.c.h.b16 %v360
    %v1000 = vunpack.c.l.b16 %v361
    %v1001 = vunpack.c.h.b16 %v361
    %v1002 = vunpack.c.l.b16 %v362
    %v1003 = vunpack.c.h.b16 %v362
    %v1004 = vunpack.c.l.b16 %v363
    %v1005 = vunpack.c.l.b16 %v364
    %v1006 = vunpack.c.h.b16 %v364
    %v1007 = vunpack.c.l.b16 %v365
    %v1008 = vunpack.c.h.b16 %v365
    %v1009 = vunpack.c.l.b16 %v366
    %v1010 = vunpack.c.h.b16 %v366
    %v1011 = vunpack.c.l.b16 %v367
    %v1012 = vunpack.c.l.b16 %v368
    %v1013 = vunpack.c.h.b16 %v368
    %v1014 = vunpack.c.l.b16 %v369
    %v1015 = vunpack.c.h.b16 %v369
    %v1016 = vunpack.c.l.b16 %v370
    %v1017 = vunpack.c.h.b16 %v370
    %v1018 = vunpack.c.l.b16 %v371
    %v1019 = vunpack.c.l.b16 %v372
    %v1020 = vunpack.c.h.b16 %v372
    %v1021 = vunpack.c.l.b16 %v373
    %v1022 = vunpack.c.h.b16 %v373
    %v1023 = vunpack.c.l.b16 %v374
    %v1024 = vunpack.c.h.b16 %v374
    %v1025 = vunpack.c.l.b16 %v375
    %v1026 = vunpack.c.l.b16 %v376
    %v1027 = vunpack.c.h.b16 %v376
    %v1028 = vunpack.c.l.b16 %v377
    %v1029 = vunpack.c.h.b16 %v377
    %v1030 = vunpack.c.l.b16 %v378
    %v1031 = vunpack.c.h.b16 %v378
    %v1032 = vunpack.c.l.b16 %v379
    %v1033 = vunpack.c.l.b16 %v380
    %v1034 = vunpack.c.h.b16 %v380
    %v1035 = vunpack.c.l.b16 %v381
    %v1036 = vunpack.c.h.b16 %v381
    %v1037 = vunpack.c.l.b16 %v382
    %v1038 = vunpack.c.h.b16 %v382
    %v1039 = vunpack.c.l.b16 %v383
    %v1040 = vunpack.c.l.b16 %v384
    %v1041 = vunpack.c.h.b16 %v384
    %v1042 = vunpack.c.l.b16 %v385
    %v1043 = vunpack.c.h.b16 %v385
    %v1044 = vunpack.c.l.b16 %v386
    %v1045 = vunpack.c.h.b16 %v386
    %v1046 = vunpack.c.l.b16 %v387
    %v1047 = vunpack.c.l.b16 %v388
    %v1048 = vunpack.c.h.b16 %v388
    %v1049 = vunpack.c.l.b16 %v389
    %v1050 = vunpack.c.h.b16 %v389
    %v1051 = vunpack.c.l.b16 %v390
    %v1052 = vunpack.c.h.b16 %v390
    %v1053 = vunpack.c.l.b16 %v391
    %v1054 = vunpack.c.l.b16 %v392
    %v1055 = vunpack.c.h.b16 %v392
    %v1056 = vunpack.c.l.b16 %v393
    %v1057 = vunpack.c.h.b16 %v393
    %v1058 = vunpack.c.l.b16 %v394
    %v1059 = vunpack.c.h.b16 %v394
    %v1060 = vunpack.c.l.b16 %v395
    %v1061 = vunpack.c.l.b16 %v396
    %v1062 = vunpack.c.h.b16 %v396
    %v1063 = vunpack.c.l.b16 %v397
    %v1064 = vunpack.c.h.b16 %v397
    %v1065 = vunpack.c.l.b16 %v398
    %v1066 = vunpack.c.h.b16 %v398
    %v1067 = vunpack.c.l.b16 %v399
    %v1068 = vunpack.c.l.b16 %v400
    %v1069 = vunpack.c.h.b16 %v400
    %v1070 = vunpack.c.l.b16 %v401
    %v1071 = vunpack.c.h.b16 %v401
    %v1072 = vunpack.c.l.b16 %v402
    %v1073 = vunpack.c.h.b16 %v402
    %v1074 = vunpack.c.l.b16 %v403
    %v1075 = vunpack.c.l.b16 %v404
    %v1076 = vunpack.c.h.b16 %v404
    %v1077 = vunpack.c.l.b16 %v405
    %v1078 = vunpack.c.h.b16 %v405
    %v1079 = vunpack.c.l.b16 %v406
    %v1080 = vunpack.c.h.b16 %v406
    %v1081 = vunpack.c.l.b16 %v407
    %v1082 = vunpack.c.l.b16 %v408
    %v1083 = vunpack.c.h.b16 %v408
    %v1084 = vunpack.c.l.b16 %v409
    %v1085 = vunpack.c.h.b16 %v409
    %v1086 = vunpack.c.l.b16 %v410
    %v1087 = vunpack.c.h.b16 %v410
    %v1088 = vunpack.c.l.b16 %v411
    %v1089 = vunpack.c.l.b16 %v412
    %v1090 = vunpack.c.h.b16 %v412
    %v1091 = vunpack.c.l.b16 %v413
    %v1092 = vunpack.c.h.b16 %v413
    %v1093 = vunpack.c.l.b16 %v414
    %v1094 = vunpack.c.h.b16 %v414
    %v1095 = vunpack.c.l.b16 %v415
    %v1096 = vunpack.c.l.b16 %v416
    %v1097 = vunpack.c.h.b16 %v416
    %v1098 = vunpack.c.l.b16 %v417
    %v1099 = vunpack.c.h.b16 %v417
    %v1100 = vunpack.c.l.b16 %v418
    %v1101 = vunpack.c.h.b16 %v418
    %v1102 = vunpack.c.l.b16 %v419
    %v1103 = vunpack.c.l.b16 %v420
    %v1104 = vunpack.c.h.b16 %v420
    %v1105 = vunpack.c.l.b16 %v421
    %v1106 = vunpack.c.h.b16 %v421
    %v1107 = vunpack.c.l.b16 %v422
    %v1108 = vunpack.c.h.b16 %v422
    %v1109 = vunpack.c.l.b16 %v423
    %v1110 = vunpack.c.l.b16 %v424
    %v1111 = vunpack.c.h.b16 %v424
    %v1112 = vunpack.c.l.b16 %v425
    %v1113 = vunpack.c.h.b16 %v425
    %v1114 = vunpack.c.l.b16 %v426
    %v1115 = vunpack.c.h.b16 %v426
    %v1116 = vunpack.c.l.b16 %v427
    %v1117 = vunpack.c.l.b16 %v428
    %v1118 = vunpack.c.h.b16 %v428
    %v1119 = vunpack.c.l.b16 %v429
    %v1120 = vunpack.c.h.b16 %v429
    %v1121 = vunpack.c.l.b16 %v430
    %v1122 = vunpack.c.h.b16 %v430
    %v1123 = vunpack.c.l.b16 %v431
    %v1124 = vunpack.c.l.b16 %v432
    %v1125 = vunpack.c.h.b16 %v432
    %v1126 = vunpack.c.l.b16 %v433
    %v1127 = vunpack.c.h.b16 %v433
    %v1128 = vunpack.c.l.b16 %v434
    %v1129 = vunpack.c.h.b16 %v434
    %v1130 = vunpack.c.l.b16 %v435
    %v1131 = vunpack.c.l.b16 %v436
    %v1132 = vunpack.c.h.b16 %v436
    %v1133 = vunpack.c.l.b16 %v437
    %v1134 = vunpack.c.h.b16 %v437
    %v1135 = vunpack.c.l.b16 %v438
    %v1136 = vunpack.c.h.b16 %v438
    %v1137 = vunpack.c.l.b16 %v439
    %v1138 = vunpack.c.l.b16 %v440
    %v1139 = vunpack.c.h.b16 %v440
    %v1140 = vunpack.c.l.b16 %v441
    %v1141 = vunpack.c.h.b16 %v441
    %v1142 = vunpack.c.l.b16 %v442
    %v1143 = vunpack.c.h.b16 %v442
    %v1144 = vunpack.c.l.b16 %v443
    %v1145 = vunpack.c.l.b16 %v444
    %v1146 = vunpack.c.h.b16 %v444
    %v1147 = vunpack.c.l.b16 %v445
    %v1148 = vunpack.c.h.b16 %v445
    %v1149 = vunpack.c.l.b16 %v446
    %v1150 = vunpack.c.h.b16 %v446
    %v1151 = vunpack.c.l.b16 %v447
    %v1152 = vpack.c.b16 %v711, %v704
    %v1153 = vpack.c.b16 %v712, %v705
    %v1154 = vpack.c.b16 %v713, %v706
    %v1155 = vpack.c.b16 %v714, %v707
    %v1156 = vpack.c.b16 %v715, %v708
    %v1157 = vpack.c.b16 %v716, %v709
    %v1158 = vpack.c.b16 %v717, %v710
    %v1159 = vpack.c.b16 %v725, %v718
    %v1160 = vpack.c.b16 %v726, %v719
    %v1161 = vpack.c.b16 %v727, %v720
    %v1162 = vpack.c.b16 %v728, %v721
    %v1163 = vpack.c.b16 %v729, %v722
    %v1164 = vpack.c.b16 %v730, %v723
    %v1165 = vpack.c.b16 %v731, %v724
    %v1166 = vpack.c.b16 %v739, %v732
    %v1167 = vpack.c.b16 %v740, %v733
    %v1168 = vpack.c.b16 %v741, %v734
    %v1169 = vpack.c.b16 %v742, %v735
    %v1170 = vpack.c.b16 %v743, %v736
    %v1171 = vpack.c.b16 %v744, %v737
    %v1172 = vpack.c.b16 %v745, %v738
    %v1173 = vpack.c.b16 %v753, %v746
    %v1174 = vpack.c.b16 %v754, %v747
    %v1175 = vpack.c.b16 %v755, %v748
    %v1176 = vpack.c.b16 %v756, %v749
    %v1177 = vpack.c.b16 %v757, %v750
    %v1178 = vpack.c.b16 %v758, %v751
    %v1179 = vpack.c.b16 %v759, %v752
    %v1180 = vpack.c.b16 %v767, %v760
    %v1181 = vpack.c.b16 %v768, %v761
    %v1182 = vpack.c.b16 %v769, %v762
    %v1183 = vpack.c.b16 %v770, %v763
    %v1184 = vpack.c.b16 %v771, %v764
    %v1185 = vpack.c.b16 %v772, %v765
    %v1186 = vpack.c.b16 %v773, %v766
    %v1187 = vpack.c.b16 %v781, %v774
    %v1188 = vpack.c.b16 %v782, %v775
    %v1189 = vpack.c.b16 %v783, %v776
    %v1190 = vpack.c.b16 %v784, %v777
    %v1191 = vpack.c.b16 %v785, %v778
    %v1192 = vpack.c.b16 %v786, %v779
    %v1193 = vpack.c.b16 %v787, %v780
    %v1194 = vpack.c.b16 %v795, %v788
    %v1195 = vpack.c.b16 %v796, %v789
    %v1196 = vpack.c.b16 %v797, %v790
    %v1197 = vpack.c.b16 %v798, %v791
    %v1198 = vpack.c.b16 %v799, %v792
    %v1199 = vpack.c.b16 %v800, %v793
    %v1200 = vpack.c.b16 %v801, %v794
    %v1201 = vpack.c.b16 %v809, %v802
    %v1202 = vpack.c.b16 %v810, %v803
    %v1203 = vpack.c.b16 %v811, %v804
    %v1204 = vpack.c.b16 %v812, %v805
    %v1205 = vpack.c.b16 %v813, %v806
    %v1206 = vpack.c.b16 %v814, %v807
    %v1207 = vpack.c.b16 %v815, %v808
    %v1208 = vpack.c.b16 %v823, %v816
    %v1209 = vpack.c.b16 %v824, %v817
    %v1210 = vpack.c.b16 %v825, %v818
    %v1211 = vpack.c.b16 %v826, %v819
    %v1212 = vpack.c.b16 %v827, %v820
    %v1213 = vpack.c.b16 %v828, %v821
    %v1214 = vpack.c.b16 %v829, %v822
    %v1215 = vpack.c.b16 %v837, %v830
    %v1216 = vpack.c.b16 %v838, %v831
    %v1217 = vpack.c.b16 %v839, %v832
    %v1218 = vpack.c.b16 %v840, %v833
    %v1219 = vpack.c.b16 %v841, %v834
    %v1220 = vpack.c.b16 %v842, %v835
    %v1221 = vpack.c.b16 %v843, %v836
    %v1222 = vpack.c.b16 %v851, %v844
    %v1223 = vpack.c.b16 %v852, %v845
    %v1224 = vpack.c.b16 %v853, %v846
    %v1225 = vpack.c.b16 %v854, %v847
    %v1226 = vpack.c.b16 %v855, %v848
    %v1227 = vpack.c.b16 %v856, %v849
    %v1228 = vpack.c.b16 %v857, %v850
    %v1229 = vpack.c.b16 %v865, %v858
    %v1230 = vpack.c.b16 %v866, %v859
    %v1231 = vpack.c.b16 %v867, %v860
    %v1232 = vpack.c.b16 %v868, %v861
    %v1233 = vpack.c.b16 %v869, %v862
    %v1234 = vpack.c.b16 %v870, %v863
    %v1235 = vpack.c.b16 %v871, %v864
    %v1236 = vpack.c.b16 %v879, %v872
    %v1237 = vpack.c.b16 %v880, %v873
    %v1238 = vpack.c.b16 %v881, %v874
    %v1239 = vpack.c.b16 %v882, %v875
    %v1240 = vpack.c.b16 %v883, %v876
    %v1241 = vpack.c.b16 %v884, %v877
    %v1242 = vpack.c.b16 %v885, %v878
    %v1243 = vpack.c.b16 %v893, %v886
    %v1244 = vpack.c.b16 %v894, %v887
    %v1245 = vpack.c.b16 %v895, %v888
    %v1246 = vpack.c.b16 %v896, %v889
    %v1247 = vpack.c.b16 %v897, %v890
    %v1248 = vpack.c.b16 %v898, %v891
    %v1249 = vpack.c.b16 %v899, %v892
    %v1250 = vpack.c.b16 %v907, %v900
    %v1251 = vpack.c.b16 %v908, %v901
    %v1252 = vpack.c.b16 %v909, %v902
    %v1253 = vpack.c.b16 %v910, %v903
    %v1254 = vpack.c.b16 %v911, %v904
    %v1255 = vpack.c.b16 %v912, %v905
    %v1256 = vpack.c.b16 %v913, %v906
    %v1257 = vpack.c.b16 %v921, %v914
    %v1258 = vpack.c.b16 %v922, %v915
    %v1259 = vpack.c.b16 %v923, %v916
    %v1260 = vpack.c.b16 %v924, %v917
    %v1261 = vpack.c.b16 %v925, %v918
    %v1262 = vpack.c.b16 %v926, %v919
    %v1263 = vpack.c.b16 %v927, %v920
    %v1264 = vpack.c.b16 %v935, %v928
    %v1265 = vpack.c.b16 %v936, %v929
    %v1266 = vpack.c.b16 %v937, %v930
    %v1267 = vpack.c.b16 %v938, %v931
    %v1268 = vpack.c.b16 %v939, %v932
    %v1269 = vpack.c.b16 %v940, %v933
    %v1270 = vpack.c.b16 %v941, %v934
    %v1271 = vpack.c.b16 %v949, %v942
    %v1272 = vpack.c.b16 %v950, %v943
    %v1273 = vpack.c.b16 %v951, %v944
    %v1274 = vpack.c.b16 %v952, %v945
    %v1275 = vpack.c.b16 %v953, %v946
    %v1276 = vpack.c.b16 %v954, %v947
    %v1277 = vpack.c.b16 %v955, %v948
    %v1278 = vpack.c.b16 %v963, %v956
    %v1279 = vpack.c.b16 %v964, %v957
    %v1280 = vpack.c.b16 %v965, %v958
    %v1281 = vpack.c.b16 %v966, %v959
    %v1282 = vpack.c.b16 %v967, %v960
    %v1283 = vpack.c.b16 %v968, %v961
    %v1284 = vpack.c.b16 %v969, %v962
    %v1285 = vpack.c.b16 %v977, %v970
    %v1286 = vpack.c.b16 %v978, %v971
    %v1287 = vpack.c.b16 %v979, %v972
    %v1288 = vpack.c.b16 %v980, %v973
    %v1289 = vpack.c.b16 %v981, %v974
    %v1290 = vpack.c.b16 %v982, %v975
    %v1291 = vpack.c.b16 %v983, %v976
    %v1292 = vpack.c.b16 %v991, %v984
    %v1293 = vpack.c.b16 %v992, %v985
    %v1294 = vpack.c.b16 %v993, %v986
    %v1295 = vpack.c.b16 %v994, %v987
    %v1296 = vpack.c.b16 %v995, %v988
    %v1297 = vpack.c.b16 %v996, %v989
    %v1298 = vpack.c.b16 %v997, %v990
    %v1299 = vpack.c.b16 %v1005, %v998
    %v1300 = vpack.c.b16 %v1006, %v999
    %v1301 = vpack.c.b16 %v1007, %v1000
    %v1302 = vpack.c.b16 %v1008, %v1001
    %v1303 = vpack.c.b16 %v1009, %v1002
    %v1304 = vpack.c.b16 %v1010, %v1003
    %v1305 = vpack.c.b16 %v1011, %v1004
    %v1306 = vpack.c.b16 %v1019, %v1012
    %v1307 = vpack.c.b16 %v1020, %v1013
    %v1308 = vpack.c.b16 %v1021, %v1014
    %v1309 = vpack.c.b16 %v1022, %v1015
    %v1310 = vpack.c.b16 %v1023, %v1016
    %v1311 = vpack.c.b16 %v1024, %v1017
    %v1312 = vpack.c.b16 %v1025, %v1018
    %v1313 = vpack.c.b16 %v1033, %v1026
    %v1314 = vpack.c.b16 %v1034, %v1027
    %v1315 = vpack.c.b16 %v1035, %v1028
    %v1316 = vpack.c.b16 %v1036, %v1029
    %v1317 = vpack.c.b16 %v1037, %v1030
    %v1318 = vpack.c.b16 %v1038, %v1031
    %v1319 = vpack.c.b16 %v1039, %v1032
    %v1320 = vpack.c.b16 %v1047, %v1040
    %v1321 = vpack.c.b16 %v1048, %v1041
    %v1322 = vpack.c.b16 %v1049, %v1042
    %v1323 = vpack.c.b16 %v1050, %v1043
    %v1324 = vpack.c.b16 %v1051, %v1044
    %v1325 = vpack.c.b16 %v1052, %v1045
    %v1326 = vpack.c.b16 %v1053, %v1046
    %v1327 = vpack.c.b16 %v1061, %v1054
    %v1328 = vpack.c.b16 %v1062, %v1055
    %v1329 = vpack.c.b16 %v1063, %v1056
    %v1330 = vpack.c.b16 %v1064, %v1057
    %v1331 = vpack.c.b16 %v1065, %v1058
    %v1332 = vpack.c.b16 %v1066, %v1059
    %v1333 = vpack.c.b16 %v1067, %v1060
    %v1334 = vpack.c.b16 %v1075, %v1068
    %v1335 = vpack.c.b16 %v1076, %v1069
    %v1336 = vpack.c.b16 %v1077, %v1070
    %v1337 = vpack.c.b16 %v1078, %v1071
    %v1338 = vpack.c.b16 %v1079, %v1072
    %v1339 = vpack.c.b16 %v1080, %v1073
    %v1340 = vpack.c.b16 %v1081, %v1074
    %v1341 = vpack.c.b16 %v1089, %v1082
    %v1342 = vpack.c.b16 %v1090, %v1083
    %v1343 = vpack.c.b16 %v1091, %v1084
    %v1344 = vpack.c.b16 %v1092, %v1085
    %v1345 = vpack.c.b16 %v1093, %v1086
    %v1346 = vpack.c.b16 %v1094, %v1087
    %v1347 = vpack.c.b16 %v1095, %v1088
    %v1348 = vpack.c.b16 %v1103, %v1096
    %v1349 = vpack.c.b16 %v1104, %v1097
    %v1350 = vpack.c.b16 %v1105, %v1098
    %v1351 = vpack.c.b16 %v1106, %v1099
    %v1352 = vpack.c.b16 %v1107, %v1100
    %v1353 = vpack.c.b16 %v1108, %v1101
    %v1354 = vpack.c.b16 %v1109, %v1102
    %v1355 = vpack.c.b16 %v1117, %v1110
    %v1356 = vpack.c.b16 %v1118, %v1111
    %v1357 = vpack.c.b16 %v1119, %v1112
    %v1358 = vpack.c.b16 %v1120, %v1113
    %v1359 = vpack.c.b16 %v1121, %v1114
    %v1360 = vpack.c.b16 %v1122, %v1115
    %v1361 = vpack.c.b16 %v1123, %v1116
    %v1362 = vpack.c.b16 %v1131, %v1124
    %v1363 = vpack.c.b16 %v1132, %v1125
    %v1364 = vpack.c.b16 %v1133, %v1126
    %v1365 = vpack.c.b16 %v1134, %v1127
    %v1366 = vpack.c.b16 %v1135, %v1128
    %v1367 = vpack.c.b16 %v1136, %v1129
    %v1368 = vpack.c.b16 %v1137, %v1130
    %v1369 = vpack.c.b16 %v1145, %v1138
    %v1370 = vpack.c.b16 %v1146, %v1139
    %v1371 = vpack.c.b16 %v1147, %v1140
    %v1372 = vpack.c.b16 %v1148, %v1141
    %v1373 = vpack.c.b16 %v1149, %v1142
    %v1374 = vpack.c.b16 %v1150, %v1143
    %v1375 = vpack.c.b16 %v1151, %v1144
    %vm1568 = vcmask 130048
    %v1570 = vsel %vm1568, %v1158, 0
    %v1573 = vsel %vm1568, %v1165, 0
    %v1576 = vsel %vm1568, %v1172, 0
    %v1579 = vsel %vm1568, %v1179, 0
    %v1582 = vsel %vm1568, %v1186, 0
    %v1585 = vsel %vm1568, %v1193, 0
    %v1588 = vsel %vm1568, %v1200, 0
    %v1591 = vsel %vm1568, %v1207, 0
    %v1594 = vsel %vm1568, %v1214, 0
    %v1597 = vsel %vm1568, %v1221, 0
    %v1600 = vsel %vm1568, %v1228, 0
    %v1603 = vsel %vm1568, %v1235, 0
    %v1606 = vsel %vm1568, %v1242, 0
    %v1609 = vsel %vm1568, %v1249, 0
    %v1612 = vsel %vm1568, %v1256, 0
    %v1615 = vsel %vm1568, %v1263, 0
    %v1618 = vsel %vm1568, %v1270, 0
    %v1621 = vsel %vm1568, %v1277, 0
    %v1624 = vsel %vm1568, %v1284, 0
    %v1627 = vsel %vm1568, %v1291, 0
    %v1630 = vsel %vm1568, %v1298, 0
    %v1633 = vsel %vm1568, %v1305, 0
    %v1636 = vsel %vm1568, %v1312, 0
    %v1639 = vsel %vm1568, %v1319, 0
    %v1642 = vsel %vm1568, %v1326, 0
    %v1645 = vsel %vm1568, %v1333, 0
    %v1648 = vsel %vm1568, %v1340, 0
    %v1651 = vsel %vm1568, %v1347, 0
    %v1654 = vsel %vm1568, %v1354, 0
    %v1657 = vsel %vm1568, %v1361, 0
    %v1660 = vsel %vm1568, %v1368, 0
    %v1663 = vsel %vm1568, %v1375, 0
    %v1666 = vsel %vm1568, %v142, 0
    %v1669 = vsel %vm1568, %v149, 0
    %v1672 = vsel %vm1568, %v156, 0
    %v1675 = vsel %vm1568, %v163, 0
    %v1678 = vsel %vm1568, %v170, 0
    %v1681 = vsel %vm1568, %v177, 0
    %v1684 = vsel %vm1568, %v184, 0
    %v1687 = vsel %vm1568, %v191, 0
    %1689 = vmatpush.bf16.xpose.msra.mxu0 %v185
    %1690 = vmatpush.bf16.xpose.msra.mxu0 %v178
    %1691 = vmatpush.bf16.xpose.msra.mxu0 %v171
    %1692 = vmatpush.bf16.xpose.msra.mxu0 %v164
    %1693 = vmatpush.bf16.xpose.msra.mxu0 %v157
    %1694 = vmatpush.bf16.xpose.msra.mxu0 %v150
    %1695 = vmatpush.bf16.xpose.msra.mxu0 %v143
    %1696 = vmatpush.bf16.xpose.msra.mxu0 %v136
    %1697 = vmatmul.bf16.gmra.mxu0 %v1152
    %v1698 = vpop.f32.mrf.mxu0
    %v1699 = vadd.f32 0.0, %v1698
    %v1700 = vpop.f32.mrf.mxu0
    %v1701 = vadd.f32 0.0, %v1700
    %1702 = vmatmul.bf16.gmra.mxu0 %v1159
    %v1703 = vpop.f32.mrf.mxu0
    %v1704 = vadd.f32 0.0, %v1703
    %v1705 = vpop.f32.mrf.mxu0
    %v1706 = vadd.f32 0.0, %v1705
    %1707 = vmatmul.bf16.gmra.mxu0 %v1166
    %v1708 = vpop.f32.mrf.mxu0
    %v1709 = vadd.f32 0.0, %v1708
    %v1710 = vpop.f32.mrf.mxu0
    %v1711 = vadd.f32 0.0, %v1710
    %1712 = vmatmul.bf16.gmra.mxu0 %v1173
    %v1713 = vpop.f32.mrf.mxu0
    %v1714 = vadd.f32 0.0, %v1713
    %v1715 = vpop.f32.mrf.mxu0
    %v1716 = vadd.f32 0.0, %v1715
    %1717 = vmatmul.bf16.gmra.mxu0 %v1180
    %v1718 = vpop.f32.mrf.mxu0
    %v1719 = vadd.f32 0.0, %v1718
    %v1720 = vpop.f32.mrf.mxu0
    %v1721 = vadd.f32 0.0, %v1720
    %1722 = vmatmul.bf16.gmra.mxu0 %v1187
    %v1723 = vpop.f32.mrf.mxu0
    %v1724 = vadd.f32 0.0, %v1723
    %v1725 = vpop.f32.mrf.mxu0
    %v1726 = vadd.f32 0.0, %v1725
    %1727 = vmatmul.bf16.gmra.mxu0 %v1194
    %v1728 = vpop.f32.mrf.mxu0
    %v1729 = vadd.f32 0.0, %v1728
    %v1730 = vpop.f32.mrf.mxu0
    %v1731 = vadd.f32 0.0, %v1730
    %1732 = vmatmul.bf16.gmra.mxu0 %v1201
    %v1733 = vpop.f32.mrf.mxu0
    %v1734 = vadd.f32 0.0, %v1733
    %v1735 = vpop.f32.mrf.mxu0
    %v1736 = vadd.f32 0.0, %v1735
    %1737 = vmatmul.bf16.gmra.mxu0 %v1208
    %v1738 = vpop.f32.mrf.mxu0
    %v1739 = vadd.f32 0.0, %v1738
    %v1740 = vpop.f32.mrf.mxu0
    %v1741 = vadd.f32 0.0, %v1740
    %1742 = vmatmul.bf16.gmra.mxu0 %v1215
    %v1743 = vpop.f32.mrf.mxu0
    %v1744 = vadd.f32 0.0, %v1743
    %v1745 = vpop.f32.mrf.mxu0
    %v1746 = vadd.f32 0.0, %v1745
    %1747 = vmatmul.bf16.gmra.mxu0 %v1222
    %v1748 = vpop.f32.mrf.mxu0
    %v1749 = vadd.f32 0.0, %v1748
    %v1750 = vpop.f32.mrf.mxu0
    %v1751 = vadd.f32 0.0, %v1750
    %1752 = vmatmul.bf16.gmra.mxu0 %v1229
    %v1753 = vpop.f32.mrf.mxu0
    %v1754 = vadd.f32 0.0, %v1753
    %v1755 = vpop.f32.mrf.mxu0
    %v1756 = vadd.f32 0.0, %v1755
    %1757 = vmatmul.bf16.gmra.mxu0 %v1236
    %v1758 = vpop.f32.mrf.mxu0
    %v1759 = vadd.f32 0.0, %v1758
    %v1760 = vpop.f32.mrf.mxu0
    %v1761 = vadd.f32 0.0, %v1760
    %1762 = vmatmul.bf16.gmra.mxu0 %v1243
    %v1763 = vpop.f32.mrf.mxu0
    %v1764 = vadd.f32 0.0, %v1763
    %v1765 = vpop.f32.mrf.mxu0
    %v1766 = vadd.f32 0.0, %v1765
    %1767 = vmatmul.bf16.gmra.mxu0 %v1250
    %v1768 = vpop.f32.mrf.mxu0
    %v1769 = vadd.f32 0.0, %v1768
    %v1770 = vpop.f32.mrf.mxu0
    %v1771 = vadd.f32 0.0, %v1770
    %1772 = vmatmul.bf16.gmra.mxu0 %v1257
    %v1773 = vpop.f32.mrf.mxu0
    %v1774 = vadd.f32 0.0, %v1773
    %v1775 = vpop.f32.mrf.mxu0
    %v1776 = vadd.f32 0.0, %v1775
    %1777 = vmatmul.bf16.gmra.mxu0 %v1264
    %v1778 = vpop.f32.mrf.mxu0
    %v1779 = vadd.f32 0.0, %v1778
    %v1780 = vpop.f32.mrf.mxu0
    %v1781 = vadd.f32 0.0, %v1780
    %1782 = vmatmul.bf16.gmra.mxu0 %v1271
    %v1783 = vpop.f32.mrf.mxu0
    %v1784 = vadd.f32 0.0, %v1783
    %v1785 = vpop.f32.mrf.mxu0
    %v1786 = vadd.f32 0.0, %v1785
    %1787 = vmatmul.bf16.gmra.mxu0 %v1278
    %v1788 = vpop.f32.mrf.mxu0
    %v1789 = vadd.f32 0.0, %v1788
    %v1790 = vpop.f32.mrf.mxu0
    %v1791 = vadd.f32 0.0, %v1790
    %1792 = vmatmul.bf16.gmra.mxu0 %v1285
    %v1793 = vpop.f32.mrf.mxu0
    %v1794 = vadd.f32 0.0, %v1793
    %v1795 = vpop.f32.mrf.mxu0
    %v1796 = vadd.f32 0.0, %v1795
    %1797 = vmatmul.bf16.gmra.mxu0 %v1292
    %v1798 = vpop.f32.mrf.mxu0
    %v1799 = vadd.f32 0.0, %v1798
    %v1800 = vpop.f32.mrf.mxu0
    %v1801 = vadd.f32 0.0, %v1800
    %1802 = vmatmul.bf16.gmra.mxu0 %v1299
    %v1803 = vpop.f32.mrf.mxu0
    %v1804 = vadd.f32 0.0, %v1803
    %v1805 = vpop.f32.mrf.mxu0
    %v1806 = vadd.f32 0.0, %v1805
    %1807 = vmatmul.bf16.gmra.mxu0 %v1306
    %v1808 = vpop.f32.mrf.mxu0
    %v1809 = vadd.f32 0.0, %v1808
    %v1810 = vpop.f32.mrf.mxu0
    %v1811 = vadd.f32 0.0, %v1810
    %1812 = vmatmul.bf16.gmra.mxu0 %v1313
    %v1813 = vpop.f32.mrf.mxu0
    %v1814 = vadd.f32 0.0, %v1813
    %v1815 = vpop.f32.mrf.mxu0
    %v1816 = vadd.f32 0.0, %v1815
    %1817 = vmatmul.bf16.gmra.mxu0 %v1320
    %v1818 = vpop.f32.mrf.mxu0
    %v1819 = vadd.f32 0.0, %v1818
    %v1820 = vpop.f32.mrf.mxu0
    %v1821 = vadd.f32 0.0, %v1820
    %1822 = vmatmul.bf16.gmra.mxu0 %v1327
    %v1823 = vpop.f32.mrf.mxu0
    %v1824 = vadd.f32 0.0, %v1823
    %v1825 = vpop.f32.mrf.mxu0
    %v1826 = vadd.f32 0.0, %v1825
    %1827 = vmatmul.bf16.gmra.mxu0 %v1334
    %v1828 = vpop.f32.mrf.mxu0
    %v1829 = vadd.f32 0.0, %v1828
    %v1830 = vpop.f32.mrf.mxu0
    %v1831 = vadd.f32 0.0, %v1830
    %1832 = vmatmul.bf16.gmra.mxu0 %v1341
    %v1833 = vpop.f32.mrf.mxu0
    %v1834 = vadd.f32 0.0, %v1833
    %v1835 = vpop.f32.mrf.mxu0
    %v1836 = vadd.f32 0.0, %v1835
    %1837 = vmatmul.bf16.gmra.mxu0 %v1348
    %v1838 = vpop.f32.mrf.mxu0
    %v1839 = vadd.f32 0.0, %v1838
    %v1840 = vpop.f32.mrf.mxu0
    %v1841 = vadd.f32 0.0, %v1840
    %1842 = vmatmul.bf16.gmra.mxu0 %v1355
    %v1843 = vpop.f32.mrf.mxu0
    %v1844 = vadd.f32 0.0, %v1843
    %v1845 = vpop.f32.mrf.mxu0
    %v1846 = vadd.f32 0.0, %v1845
    %1847 = vmatmul.bf16.gmra.mxu0 %v1362
    %v1848 = vpop.f32.mrf.mxu0
    %v1849 = vadd.f32 0.0, %v1848
    %v1850 = vpop.f32.mrf.mxu0
    %v1851 = vadd.f32 0.0, %v1850
    %1852 = vmatmul.bf16.gmra.mxu0 %v1369
    %v1853 = vpop.f32.mrf.mxu0
    %v1854 = vadd.f32 0.0, %v1853
    %v1855 = vpop.f32.mrf.mxu0
    %v1856 = vadd.f32 0.0, %v1855
    %1857 = vdwg.mxu0
    %1858 = vmatpush.bf16.xpose.msra.mxu0 %v186
    %1859 = vmatpush.bf16.xpose.msra.mxu0 %v179
    %1860 = vmatpush.bf16.xpose.msra.mxu0 %v172
    %1861 = vmatpush.bf16.xpose.msra.mxu0 %v165
    %1862 = vmatpush.bf16.xpose.msra.mxu0 %v158
    %1863 = vmatpush.bf16.xpose.msra.mxu0 %v151
    %1864 = vmatpush.bf16.xpose.msra.mxu0 %v144
    %1865 = vmatpush.bf16.xpose.msra.mxu0 %v137
    %1866 = vmatmul.bf16.gmra.mxu0 %v1153
    %v1867 = vpop.f32.mrf.mxu0
    %v1868 = vadd.f32 %v1699, %v1867
    %v1869 = vpop.f32.mrf.mxu0
    %v1870 = vadd.f32 %v1701, %v1869
    %1871 = vmatmul.bf16.gmra.mxu0 %v1160
    %v1872 = vpop.f32.mrf.mxu0
    %v1873 = vadd.f32 %v1704, %v1872
    %v1874 = vpop.f32.mrf.mxu0
    %v1875 = vadd.f32 %v1706, %v1874
    %1876 = vmatmul.bf16.gmra.mxu0 %v1167
    %v1877 = vpop.f32.mrf.mxu0
    %v1878 = vadd.f32 %v1709, %v1877
    %v1879 = vpop.f32.mrf.mxu0
    %v1880 = vadd.f32 %v1711, %v1879
    %1881 = vmatmul.bf16.gmra.mxu0 %v1174
    %v1882 = vpop.f32.mrf.mxu0
    %v1883 = vadd.f32 %v1714, %v1882
    %v1884 = vpop.f32.mrf.mxu0
    %v1885 = vadd.f32 %v1716, %v1884
    %1886 = vmatmul.bf16.gmra.mxu0 %v1181
    %v1887 = vpop.f32.mrf.mxu0
    %v1888 = vadd.f32 %v1719, %v1887
    %v1889 = vpop.f32.mrf.mxu0
    %v1890 = vadd.f32 %v1721, %v1889
    %1891 = vmatmul.bf16.gmra.mxu0 %v1188
    %v1892 = vpop.f32.mrf.mxu0
    %v1893 = vadd.f32 %v1724, %v1892
    %v1894 = vpop.f32.mrf.mxu0
    %v1895 = vadd.f32 %v1726, %v1894
    %1896 = vmatmul.bf16.gmra.mxu0 %v1195
    %v1897 = vpop.f32.mrf.mxu0
    %v1898 = vadd.f32 %v1729, %v1897
    %v1899 = vpop.f32.mrf.mxu0
    %v1900 = vadd.f32 %v1731, %v1899
    %1901 = vmatmul.bf16.gmra.mxu0 %v1202
    %v1902 = vpop.f32.mrf.mxu0
    %v1903 = vadd.f32 %v1734, %v1902
    %v1904 = vpop.f32.mrf.mxu0
    %v1905 = vadd.f32 %v1736, %v1904
    %1906 = vmatmul.bf16.gmra.mxu0 %v1209
    %v1907 = vpop.f32.mrf.mxu0
    %v1908 = vadd.f32 %v1739, %v1907
    %v1909 = vpop.f32.mrf.mxu0
    %v1910 = vadd.f32 %v1741, %v1909
    %1911 = vmatmul.bf16.gmra.mxu0 %v1216
    %v1912 = vpop.f32.mrf.mxu0
    %v1913 = vadd.f32 %v1744, %v1912
    %v1914 = vpop.f32.mrf.mxu0
    %v1915 = vadd.f32 %v1746, %v1914
    %1916 = vmatmul.bf16.gmra.mxu0 %v1223
    %v1917 = vpop.f32.mrf.mxu0
    %v1918 = vadd.f32 %v1749, %v1917
    %v1919 = vpop.f32.mrf.mxu0
    %v1920 = vadd.f32 %v1751, %v1919
    %1921 = vmatmul.bf16.gmra.mxu0 %v1230
    %v1922 = vpop.f32.mrf.mxu0
    %v1923 = vadd.f32 %v1754, %v1922
    %v1924 = vpop.f32.mrf.mxu0
    %v1925 = vadd.f32 %v1756, %v1924
    %1926 = vmatmul.bf16.gmra.mxu0 %v1237
    %v1927 = vpop.f32.mrf.mxu0
    %v1928 = vadd.f32 %v1759, %v1927
    %v1929 = vpop.f32.mrf.mxu0
    %v1930 = vadd.f32 %v1761, %v1929
    %1931 = vmatmul.bf16.gmra.mxu0 %v1244
    %v1932 = vpop.f32.mrf.mxu0
    %v1933 = vadd.f32 %v1764, %v1932
    %v1934 = vpop.f32.mrf.mxu0
    %v1935 = vadd.f32 %v1766, %v1934
    %1936 = vmatmul.bf16.gmra.mxu0 %v1251
    %v1937 = vpop.f32.mrf.mxu0
    %v1938 = vadd.f32 %v1769, %v1937
    %v1939 = vpop.f32.mrf.mxu0
    %v1940 = vadd.f32 %v1771, %v1939
    %1941 = vmatmul.bf16.gmra.mxu0 %v1258
    %v1942 = vpop.f32.mrf.mxu0
    %v1943 = vadd.f32 %v1774, %v1942
    %v1944 = vpop.f32.mrf.mxu0
    %v1945 = vadd.f32 %v1776, %v1944
    %1946 = vmatmul.bf16.gmra.mxu0 %v1265
    %v1947 = vpop.f32.mrf.mxu0
    %v1948 = vadd.f32 %v1779, %v1947
    %v1949 = vpop.f32.mrf.mxu0
    %v1950 = vadd.f32 %v1781, %v1949
    %1951 = vmatmul.bf16.gmra.mxu0 %v1272
    %v1952 = vpop.f32.mrf.mxu0
    %v1953 = vadd.f32 %v1784, %v1952
    %v1954 = vpop.f32.mrf.mxu0
    %v1955 = vadd.f32 %v1786, %v1954
    %1956 = vmatmul.bf16.gmra.mxu0 %v1279
    %v1957 = vpop.f32.mrf.mxu0
    %v1958 = vadd.f32 %v1789, %v1957
    %v1959 = vpop.f32.mrf.mxu0
    %v1960 = vadd.f32 %v1791, %v1959
    %1961 = vmatmul.bf16.gmra.mxu0 %v1286
    %v1962 = vpop.f32.mrf.mxu0
    %v1963 = vadd.f32 %v1794, %v1962
    %v1964 = vpop.f32.mrf.mxu0
    %v1965 = vadd.f32 %v1796, %v1964
    %1966 = vmatmul.bf16.gmra.mxu0 %v1293
    %v1967 = vpop.f32.mrf.mxu0
    %v1968 = vadd.f32 %v1799, %v1967
    %v1969 = vpop.f32.mrf.mxu0
    %v1970 = vadd.f32 %v1801, %v1969
    %1971 = vmatmul.bf16.gmra.mxu0 %v1300
    %v1972 = vpop.f32.mrf.mxu0
    %v1973 = vadd.f32 %v1804, %v1972
    %v1974 = vpop.f32.mrf.mxu0
    %v1975 = vadd.f32 %v1806, %v1974
    %1976 = vmatmul.bf16.gmra.mxu0 %v1307
    %v1977 = vpop.f32.mrf.mxu0
    %v1978 = vadd.f32 %v1809, %v1977
    %v1979 = vpop.f32.mrf.mxu0
    %v1980 = vadd.f32 %v1811, %v1979
    %1981 = vmatmul.bf16.gmra.mxu0 %v1314
    %v1982 = vpop.f32.mrf.mxu0
    %v1983 = vadd.f32 %v1814, %v1982
    %v1984 = vpop.f32.mrf.mxu0
    %v1985 = vadd.f32 %v1816, %v1984
    %1986 = vmatmul.bf16.gmra.mxu0 %v1321
    %v1987 = vpop.f32.mrf.mxu0
    %v1988 = vadd.f32 %v1819, %v1987
    %v1989 = vpop.f32.mrf.mxu0
    %v1990 = vadd.f32 %v1821, %v1989
    %1991 = vmatmul.bf16.gmra.mxu0 %v1328
    %v1992 = vpop.f32.mrf.mxu0
    %v1993 = vadd.f32 %v1824, %v1992
    %v1994 = vpop.f32.mrf.mxu0
    %v1995 = vadd.f32 %v1826, %v1994
    %1996 = vmatmul.bf16.gmra.mxu0 %v1335
    %v1997 = vpop.f32.mrf.mxu0
    %v1998 = vadd.f32 %v1829, %v1997
    %v1999 = vpop.f32.mrf.mxu0
    %v2000 = vadd.f32 %v1831, %v1999
    %2001 = vmatmul.bf16.gmra.mxu0 %v1342
    %v2002 = vpop.f32.mrf.mxu0
    %v2003 = vadd.f32 %v1834, %v2002
    %v2004 = vpop.f32.mrf.mxu0
    %v2005 = vadd.f32 %v1836, %v2004
    %2006 = vmatmul.bf16.gmra.mxu0 %v1349
    %v2007 = vpop.f32.mrf.mxu0
    %v2008 = vadd.f32 %v1839, %v2007
    %v2009 = vpop.f32.mrf.mxu0
    %v2010 = vadd.f32 %v1841, %v2009
    %2011 = vmatmul.bf16.gmra.mxu0 %v1356
    %v2012 = vpop.f32.mrf.mxu0
    %v2013 = vadd.f32 %v1844, %v2012
    %v2014 = vpop.f32.mrf.mxu0
    %v2015 = vadd.f32 %v1846, %v2014
    %2016 = vmatmul.bf16.gmra.mxu0 %v1363
    %v2017 = vpop.f32.mrf.mxu0
    %v2018 = vadd.f32 %v1849, %v2017
    %v2019 = vpop.f32.mrf.mxu0
    %v2020 = vadd.f32 %v1851, %v2019
    %2021 = vmatmul.bf16.gmra.mxu0 %v1370
    %v2022 = vpop.f32.mrf.mxu0
    %v2023 = vadd.f32 %v1854, %v2022
    %v2024 = vpop.f32.mrf.mxu0
    %v2025 = vadd.f32 %v1856, %v2024
    %2026 = vdwg.mxu0
    %2027 = vmatpush.bf16.xpose.msra.mxu0 %v187
    %2028 = vmatpush.bf16.xpose.msra.mxu0 %v180
    %2029 = vmatpush.bf16.xpose.msra.mxu0 %v173
    %2030 = vmatpush.bf16.xpose.msra.mxu0 %v166
    %2031 = vmatpush.bf16.xpose.msra.mxu0 %v159
    %2032 = vmatpush.bf16.xpose.msra.mxu0 %v152
    %2033 = vmatpush.bf16.xpose.msra.mxu0 %v145
    %2034 = vmatpush.bf16.xpose.msra.mxu0 %v138
    %2035 = vmatmul.bf16.gmra.mxu0 %v1154
    %v2036 = vpop.f32.mrf.mxu0
    %v2037 = vadd.f32 %v1868, %v2036
    %v2038 = vpop.f32.mrf.mxu0
    %v2039 = vadd.f32 %v1870, %v2038
    %2040 = vmatmul.bf16.gmra.mxu0 %v1161
    %v2041 = vpop.f32.mrf.mxu0
    %v2042 = vadd.f32 %v1873, %v2041
    %v2043 = vpop.f32.mrf.mxu0
    %v2044 = vadd.f32 %v1875, %v2043
    %2045 = vmatmul.bf16.gmra.mxu0 %v1168
    %v2046 = vpop.f32.mrf.mxu0
    %v2047 = vadd.f32 %v1878, %v2046
    %v2048 = vpop.f32.mrf.mxu0
    %v2049 = vadd.f32 %v1880, %v2048
    %2050 = vmatmul.bf16.gmra.mxu0 %v1175
    %v2051 = vpop.f32.mrf.mxu0
    %v2052 = vadd.f32 %v1883, %v2051
    %v2053 = vpop.f32.mrf.mxu0
    %v2054 = vadd.f32 %v1885, %v2053
    %2055 = vmatmul.bf16.gmra.mxu0 %v1182
    %v2056 = vpop.f32.mrf.mxu0
    %v2057 = vadd.f32 %v1888, %v2056
    %v2058 = vpop.f32.mrf.mxu0
    %v2059 = vadd.f32 %v1890, %v2058
    %2060 = vmatmul.bf16.gmra.mxu0 %v1189
    %v2061 = vpop.f32.mrf.mxu0
    %v2062 = vadd.f32 %v1893, %v2061
    %v2063 = vpop.f32.mrf.mxu0
    %v2064 = vadd.f32 %v1895, %v2063
    %2065 = vmatmul.bf16.gmra.mxu0 %v1196
    %v2066 = vpop.f32.mrf.mxu0
    %v2067 = vadd.f32 %v1898, %v2066
    %v2068 = vpop.f32.mrf.mxu0
    %v2069 = vadd.f32 %v1900, %v2068
    %2070 = vmatmul.bf16.gmra.mxu0 %v1203
    %v2071 = vpop.f32.mrf.mxu0
    %v2072 = vadd.f32 %v1903, %v2071
    %v2073 = vpop.f32.mrf.mxu0
    %v2074 = vadd.f32 %v1905, %v2073
    %2075 = vmatmul.bf16.gmra.mxu0 %v1210
    %v2076 = vpop.f32.mrf.mxu0
    %v2077 = vadd.f32 %v1908, %v2076
    %v2078 = vpop.f32.mrf.mxu0
    %v2079 = vadd.f32 %v1910, %v2078
    %2080 = vmatmul.bf16.gmra.mxu0 %v1217
    %v2081 = vpop.f32.mrf.mxu0
    %v2082 = vadd.f32 %v1913, %v2081
    %v2083 = vpop.f32.mrf.mxu0
    %v2084 = vadd.f32 %v1915, %v2083
    %2085 = vmatmul.bf16.gmra.mxu0 %v1224
    %v2086 = vpop.f32.mrf.mxu0
    %v2087 = vadd.f32 %v1918, %v2086
    %v2088 = vpop.f32.mrf.mxu0
    %v2089 = vadd.f32 %v1920, %v2088
    %2090 = vmatmul.bf16.gmra.mxu0 %v1231
    %v2091 = vpop.f32.mrf.mxu0
    %v2092 = vadd.f32 %v1923, %v2091
    %v2093 = vpop.f32.mrf.mxu0
    %v2094 = vadd.f32 %v1925, %v2093
    %2095 = vmatmul.bf16.gmra.mxu0 %v1238
    %v2096 = vpop.f32.mrf.mxu0
    %v2097 = vadd.f32 %v1928, %v2096
    %v2098 = vpop.f32.mrf.mxu0
    %v2099 = vadd.f32 %v1930, %v2098
    %2100 = vmatmul.bf16.gmra.mxu0 %v1245
    %v2101 = vpop.f32.mrf.mxu0
    %v2102 = vadd.f32 %v1933, %v2101
    %v2103 = vpop.f32.mrf.mxu0
    %v2104 = vadd.f32 %v1935, %v2103
    %2105 = vmatmul.bf16.gmra.mxu0 %v1252
    %v2106 = vpop.f32.mrf.mxu0
    %v2107 = vadd.f32 %v1938, %v2106
    %v2108 = vpop.f32.mrf.mxu0
    %v2109 = vadd.f32 %v1940, %v2108
    %2110 = vmatmul.bf16.gmra.mxu0 %v1259
    %v2111 = vpop.f32.mrf.mxu0
    %v2112 = vadd.f32 %v1943, %v2111
    %v2113 = vpop.f32.mrf.mxu0
    %v2114 = vadd.f32 %v1945, %v2113
    %2115 = vmatmul.bf16.gmra.mxu0 %v1266
    %v2116 = vpop.f32.mrf.mxu0
    %v2117 = vadd.f32 %v1948, %v2116
    %v2118 = vpop.f32.mrf.mxu0
    %v2119 = vadd.f32 %v1950, %v2118
    %2120 = vmatmul.bf16.gmra.mxu0 %v1273
    %v2121 = vpop.f32.mrf.mxu0
    %v2122 = vadd.f32 %v1953, %v2121
    %v2123 = vpop.f32.mrf.mxu0
    %v2124 = vadd.f32 %v1955, %v2123
    %2125 = vmatmul.bf16.gmra.mxu0 %v1280
    %v2126 = vpop.f32.mrf.mxu0
    %v2127 = vadd.f32 %v1958, %v2126
    %v2128 = vpop.f32.mrf.mxu0
    %v2129 = vadd.f32 %v1960, %v2128
    %2130 = vmatmul.bf16.gmra.mxu0 %v1287
    %v2131 = vpop.f32.mrf.mxu0
    %v2132 = vadd.f32 %v1963, %v2131
    %v2133 = vpop.f32.mrf.mxu0
    %v2134 = vadd.f32 %v1965, %v2133
    %2135 = vmatmul.bf16.gmra.mxu0 %v1294
    %v2136 = vpop.f32.mrf.mxu0
    %v2137 = vadd.f32 %v1968, %v2136
    %v2138 = vpop.f32.mrf.mxu0
    %v2139 = vadd.f32 %v1970, %v2138
    %2140 = vmatmul.bf16.gmra.mxu0 %v1301
    %v2141 = vpop.f32.mrf.mxu0
    %v2142 = vadd.f32 %v1973, %v2141
    %v2143 = vpop.f32.mrf.mxu0
    %v2144 = vadd.f32 %v1975, %v2143
    %2145 = vmatmul.bf16.gmra.mxu0 %v1308
    %v2146 = vpop.f32.mrf.mxu0
    %v2147 = vadd.f32 %v1978, %v2146
    %v2148 = vpop.f32.mrf.mxu0
    %v2149 = vadd.f32 %v1980, %v2148
    %2150 = vmatmul.bf16.gmra.mxu0 %v1315
    %v2151 = vpop.f32.mrf.mxu0
    %v2152 = vadd.f32 %v1983, %v2151
    %v2153 = vpop.f32.mrf.mxu0
    %v2154 = vadd.f32 %v1985, %v2153
    %2155 = vmatmul.bf16.gmra.mxu0 %v1322
    %v2156 = vpop.f32.mrf.mxu0
    %v2157 = vadd.f32 %v1988, %v2156
    %v2158 = vpop.f32.mrf.mxu0
    %v2159 = vadd.f32 %v1990, %v2158
    %2160 = vmatmul.bf16.gmra.mxu0 %v1329
    %v2161 = vpop.f32.mrf.mxu0
    %v2162 = vadd.f32 %v1993, %v2161
    %v2163 = vpop.f32.mrf.mxu0
    %v2164 = vadd.f32 %v1995, %v2163
    %2165 = vmatmul.bf16.gmra.mxu0 %v1336
    %v2166 = vpop.f32.mrf.mxu0
    %v2167 = vadd.f32 %v1998, %v2166
    %v2168 = vpop.f32.mrf.mxu0
    %v2169 = vadd.f32 %v2000, %v2168
    %2170 = vmatmul.bf16.gmra.mxu0 %v1343
    %v2171 = vpop.f32.mrf.mxu0
    %v2172 = vadd.f32 %v2003, %v2171
    %v2173 = vpop.f32.mrf.mxu0
    %v2174 = vadd.f32 %v2005, %v2173
    %2175 = vmatmul.bf16.gmra.mxu0 %v1350
    %v2176 = vpop.f32.mrf.mxu0
    %v2177 = vadd.f32 %v2008, %v2176
    %v2178 = vpop.f32.mrf.mxu0
    %v2179 = vadd.f32 %v2010, %v2178
    %2180 = vmatmul.bf16.gmra.mxu0 %v1357
    %v2181 = vpop.f32.mrf.mxu0
    %v2182 = vadd.f32 %v2013, %v2181
    %v2183 = vpop.f32.mrf.mxu0
    %v2184 = vadd.f32 %v2015, %v2183
    %2185 = vmatmul.bf16.gmra.mxu0 %v1364
    %v2186 = vpop.f32.mrf.mxu0
    %v2187 = vadd.f32 %v2018, %v2186
    %v2188 = vpop.f32.mrf.mxu0
    %v2189 = vadd.f32 %v2020, %v2188
    %2190 = vmatmul.bf16.gmra.mxu0 %v1371
    %v2191 = vpop.f32.mrf.mxu0
    %v2192 = vadd.f32 %v2023, %v2191
    %v2193 = vpop.f32.mrf.mxu0
    %v2194 = vadd.f32 %v2025, %v2193
    %2195 = vdwg.mxu0
    %2196 = vmatpush.bf16.xpose.msra.mxu0 %v188
    %2197 = vmatpush.bf16.xpose.msra.mxu0 %v181
    %2198 = vmatpush.bf16.xpose.msra.mxu0 %v174
    %2199 = vmatpush.bf16.xpose.msra.mxu0 %v167
    %2200 = vmatpush.bf16.xpose.msra.mxu0 %v160
    %2201 = vmatpush.bf16.xpose.msra.mxu0 %v153
    %2202 = vmatpush.bf16.xpose.msra.mxu0 %v146
    %2203 = vmatpush.bf16.xpose.msra.mxu0 %v139
    %2204 = vmatmul.bf16.gmra.mxu0 %v1155
    %v2205 = vpop.f32.mrf.mxu0
    %v2206 = vadd.f32 %v2037, %v2205
    %v2207 = vpop.f32.mrf.mxu0
    %v2208 = vadd.f32 %v2039, %v2207
    %2209 = vmatmul.bf16.gmra.mxu0 %v1162
    %v2210 = vpop.f32.mrf.mxu0
    %v2211 = vadd.f32 %v2042, %v2210
    %v2212 = vpop.f32.mrf.mxu0
    %v2213 = vadd.f32 %v2044, %v2212
    %2214 = vmatmul.bf16.gmra.mxu0 %v1169
    %v2215 = vpop.f32.mrf.mxu0
    %v2216 = vadd.f32 %v2047, %v2215
    %v2217 = vpop.f32.mrf.mxu0
    %v2218 = vadd.f32 %v2049, %v2217
    %2219 = vmatmul.bf16.gmra.mxu0 %v1176
    %v2220 = vpop.f32.mrf.mxu0
    %v2221 = vadd.f32 %v2052, %v2220
    %v2222 = vpop.f32.mrf.mxu0
    %v2223 = vadd.f32 %v2054, %v2222
    %2224 = vmatmul.bf16.gmra.mxu0 %v1183
    %v2225 = vpop.f32.mrf.mxu0
    %v2226 = vadd.f32 %v2057, %v2225
    %v2227 = vpop.f32.mrf.mxu0
    %v2228 = vadd.f32 %v2059, %v2227
    %2229 = vmatmul.bf16.gmra.mxu0 %v1190
    %v2230 = vpop.f32.mrf.mxu0
    %v2231 = vadd.f32 %v2062, %v2230
    %v2232 = vpop.f32.mrf.mxu0
    %v2233 = vadd.f32 %v2064, %v2232
    %2234 = vmatmul.bf16.gmra.mxu0 %v1197
    %v2235 = vpop.f32.mrf.mxu0
    %v2236 = vadd.f32 %v2067, %v2235
    %v2237 = vpop.f32.mrf.mxu0
    %v2238 = vadd.f32 %v2069, %v2237
    %2239 = vmatmul.bf16.gmra.mxu0 %v1204
    %v2240 = vpop.f32.mrf.mxu0
    %v2241 = vadd.f32 %v2072, %v2240
    %v2242 = vpop.f32.mrf.mxu0
    %v2243 = vadd.f32 %v2074, %v2242
    %2244 = vmatmul.bf16.gmra.mxu0 %v1211
    %v2245 = vpop.f32.mrf.mxu0
    %v2246 = vadd.f32 %v2077, %v2245
    %v2247 = vpop.f32.mrf.mxu0
    %v2248 = vadd.f32 %v2079, %v2247
    %2249 = vmatmul.bf16.gmra.mxu0 %v1218
    %v2250 = vpop.f32.mrf.mxu0
    %v2251 = vadd.f32 %v2082, %v2250
    %v2252 = vpop.f32.mrf.mxu0
    %v2253 = vadd.f32 %v2084, %v2252
    %2254 = vmatmul.bf16.gmra.mxu0 %v1225
    %v2255 = vpop.f32.mrf.mxu0
    %v2256 = vadd.f32 %v2087, %v2255
    %v2257 = vpop.f32.mrf.mxu0
    %v2258 = vadd.f32 %v2089, %v2257
    %2259 = vmatmul.bf16.gmra.mxu0 %v1232
    %v2260 = vpop.f32.mrf.mxu0
    %v2261 = vadd.f32 %v2092, %v2260
    %v2262 = vpop.f32.mrf.mxu0
    %v2263 = vadd.f32 %v2094, %v2262
    %2264 = vmatmul.bf16.gmra.mxu0 %v1239
    %v2265 = vpop.f32.mrf.mxu0
    %v2266 = vadd.f32 %v2097, %v2265
    %v2267 = vpop.f32.mrf.mxu0
    %v2268 = vadd.f32 %v2099, %v2267
    %2269 = vmatmul.bf16.gmra.mxu0 %v1246
    %v2270 = vpop.f32.mrf.mxu0
    %v2271 = vadd.f32 %v2102, %v2270
    %v2272 = vpop.f32.mrf.mxu0
    %v2273 = vadd.f32 %v2104, %v2272
    %2274 = vmatmul.bf16.gmra.mxu0 %v1253
    %v2275 = vpop.f32.mrf.mxu0
    %v2276 = vadd.f32 %v2107, %v2275
    %v2277 = vpop.f32.mrf.mxu0
    %v2278 = vadd.f32 %v2109, %v2277
    %2279 = vmatmul.bf16.gmra.mxu0 %v1260
    %v2280 = vpop.f32.mrf.mxu0
    %v2281 = vadd.f32 %v2112, %v2280
    %v2282 = vpop.f32.mrf.mxu0
    %v2283 = vadd.f32 %v2114, %v2282
    %2284 = vmatmul.bf16.gmra.mxu0 %v1267
    %v2285 = vpop.f32.mrf.mxu0
    %v2286 = vadd.f32 %v2117, %v2285
    %v2287 = vpop.f32.mrf.mxu0
    %v2288 = vadd.f32 %v2119, %v2287
    %2289 = vmatmul.bf16.gmra.mxu0 %v1274
    %v2290 = vpop.f32.mrf.mxu0
    %v2291 = vadd.f32 %v2122, %v2290
    %v2292 = vpop.f32.mrf.mxu0
    %v2293 = vadd.f32 %v2124, %v2292
    %2294 = vmatmul.bf16.gmra.mxu0 %v1281
    %v2295 = vpop.f32.mrf.mxu0
    %v2296 = vadd.f32 %v2127, %v2295
    %v2297 = vpop.f32.mrf.mxu0
    %v2298 = vadd.f32 %v2129, %v2297
    %2299 = vmatmul.bf16.gmra.mxu0 %v1288
    %v2300 = vpop.f32.mrf.mxu0
    %v2301 = vadd.f32 %v2132, %v2300
    %v2302 = vpop.f32.mrf.mxu0
    %v2303 = vadd.f32 %v2134, %v2302
    %2304 = vmatmul.bf16.gmra.mxu0 %v1295
    %v2305 = vpop.f32.mrf.mxu0
    %v2306 = vadd.f32 %v2137, %v2305
    %v2307 = vpop.f32.mrf.mxu0
    %v2308 = vadd.f32 %v2139, %v2307
    %2309 = vmatmul.bf16.gmra.mxu0 %v1302
    %v2310 = vpop.f32.mrf.mxu0
    %v2311 = vadd.f32 %v2142, %v2310
    %v2312 = vpop.f32.mrf.mxu0
    %v2313 = vadd.f32 %v2144, %v2312
    %2314 = vmatmul.bf16.gmra.mxu0 %v1309
    %v2315 = vpop.f32.mrf.mxu0
    %v2316 = vadd.f32 %v2147, %v2315
    %v2317 = vpop.f32.mrf.mxu0
    %v2318 = vadd.f32 %v2149, %v2317
    %2319 = vmatmul.bf16.gmra.mxu0 %v1316
    %v2320 = vpop.f32.mrf.mxu0
    %v2321 = vadd.f32 %v2152, %v2320
    %v2322 = vpop.f32.mrf.mxu0
    %v2323 = vadd.f32 %v2154, %v2322
    %2324 = vmatmul.bf16.gmra.mxu0 %v1323
    %v2325 = vpop.f32.mrf.mxu0
    %v2326 = vadd.f32 %v2157, %v2325
    %v2327 = vpop.f32.mrf.mxu0
    %v2328 = vadd.f32 %v2159, %v2327
    %2329 = vmatmul.bf16.gmra.mxu0 %v1330
    %v2330 = vpop.f32.mrf.mxu0
    %v2331 = vadd.f32 %v2162, %v2330
    %v2332 = vpop.f32.mrf.mxu0
    %v2333 = vadd.f32 %v2164, %v2332
    %2334 = vmatmul.bf16.gmra.mxu0 %v1337
    %v2335 = vpop.f32.mrf.mxu0
    %v2336 = vadd.f32 %v2167, %v2335
    %v2337 = vpop.f32.mrf.mxu0
    %v2338 = vadd.f32 %v2169, %v2337
    %2339 = vmatmul.bf16.gmra.mxu0 %v1344
    %v2340 = vpop.f32.mrf.mxu0
    %v2341 = vadd.f32 %v2172, %v2340
    %v2342 = vpop.f32.mrf.mxu0
    %v2343 = vadd.f32 %v2174, %v2342
    %2344 = vmatmul.bf16.gmra.mxu0 %v1351
    %v2345 = vpop.f32.mrf.mxu0
    %v2346 = vadd.f32 %v2177, %v2345
    %v2347 = vpop.f32.mrf.mxu0
    %v2348 = vadd.f32 %v2179, %v2347
    %2349 = vmatmul.bf16.gmra.mxu0 %v1358
    %v2350 = vpop.f32.mrf.mxu0
    %v2351 = vadd.f32 %v2182, %v2350
    %v2352 = vpop.f32.mrf.mxu0
    %v2353 = vadd.f32 %v2184, %v2352
    %2354 = vmatmul.bf16.gmra.mxu0 %v1365
    %v2355 = vpop.f32.mrf.mxu0
    %v2356 = vadd.f32 %v2187, %v2355
    %v2357 = vpop.f32.mrf.mxu0
    %v2358 = vadd.f32 %v2189, %v2357
    %2359 = vmatmul.bf16.gmra.mxu0 %v1372
    %v2360 = vpop.f32.mrf.mxu0
    %v2361 = vadd.f32 %v2192, %v2360
    %v2362 = vpop.f32.mrf.mxu0
    %v2363 = vadd.f32 %v2194, %v2362
    %2364 = vdwg.mxu0
    %2365 = vmatpush.bf16.xpose.msra.mxu0 %v189
    %2366 = vmatpush.bf16.xpose.msra.mxu0 %v182
    %2367 = vmatpush.bf16.xpose.msra.mxu0 %v175
    %2368 = vmatpush.bf16.xpose.msra.mxu0 %v168
    %2369 = vmatpush.bf16.xpose.msra.mxu0 %v161
    %2370 = vmatpush.bf16.xpose.msra.mxu0 %v154
    %2371 = vmatpush.bf16.xpose.msra.mxu0 %v147
    %2372 = vmatpush.bf16.xpose.msra.mxu0 %v140
    %2373 = vmatmul.bf16.gmra.mxu0 %v1156
    %v2374 = vpop.f32.mrf.mxu0
    %v2375 = vadd.f32 %v2206, %v2374
    %v2376 = vpop.f32.mrf.mxu0
    %v2377 = vadd.f32 %v2208, %v2376
    %2378 = vmatmul.bf16.gmra.mxu0 %v1163
    %v2379 = vpop.f32.mrf.mxu0
    %v2380 = vadd.f32 %v2211, %v2379
    %v2381 = vpop.f32.mrf.mxu0
    %v2382 = vadd.f32 %v2213, %v2381
    %2383 = vmatmul.bf16.gmra.mxu0 %v1170
    %v2384 = vpop.f32.mrf.mxu0
    %v2385 = vadd.f32 %v2216, %v2384
    %v2386 = vpop.f32.mrf.mxu0
    %v2387 = vadd.f32 %v2218, %v2386
    %2388 = vmatmul.bf16.gmra.mxu0 %v1177
    %v2389 = vpop.f32.mrf.mxu0
    %v2390 = vadd.f32 %v2221, %v2389
    %v2391 = vpop.f32.mrf.mxu0
    %v2392 = vadd.f32 %v2223, %v2391
    %2393 = vmatmul.bf16.gmra.mxu0 %v1184
    %v2394 = vpop.f32.mrf.mxu0
    %v2395 = vadd.f32 %v2226, %v2394
    %v2396 = vpop.f32.mrf.mxu0
    %v2397 = vadd.f32 %v2228, %v2396
    %2398 = vmatmul.bf16.gmra.mxu0 %v1191
    %v2399 = vpop.f32.mrf.mxu0
    %v2400 = vadd.f32 %v2231, %v2399
    %v2401 = vpop.f32.mrf.mxu0
    %v2402 = vadd.f32 %v2233, %v2401
    %2403 = vmatmul.bf16.gmra.mxu0 %v1198
    %v2404 = vpop.f32.mrf.mxu0
    %v2405 = vadd.f32 %v2236, %v2404
    %v2406 = vpop.f32.mrf.mxu0
    %v2407 = vadd.f32 %v2238, %v2406
    %2408 = vmatmul.bf16.gmra.mxu0 %v1205
    %v2409 = vpop.f32.mrf.mxu0
    %v2410 = vadd.f32 %v2241, %v2409
    %v2411 = vpop.f32.mrf.mxu0
    %v2412 = vadd.f32 %v2243, %v2411
    %2413 = vmatmul.bf16.gmra.mxu0 %v1212
    %v2414 = vpop.f32.mrf.mxu0
    %v2415 = vadd.f32 %v2246, %v2414
    %v2416 = vpop.f32.mrf.mxu0
    %v2417 = vadd.f32 %v2248, %v2416
    %2418 = vmatmul.bf16.gmra.mxu0 %v1219
    %v2419 = vpop.f32.mrf.mxu0
    %v2420 = vadd.f32 %v2251, %v2419
    %v2421 = vpop.f32.mrf.mxu0
    %v2422 = vadd.f32 %v2253, %v2421
    %2423 = vmatmul.bf16.gmra.mxu0 %v1226
    %v2424 = vpop.f32.mrf.mxu0
    %v2425 = vadd.f32 %v2256, %v2424
    %v2426 = vpop.f32.mrf.mxu0
    %v2427 = vadd.f32 %v2258, %v2426
    %2428 = vmatmul.bf16.gmra.mxu0 %v1233
    %v2429 = vpop.f32.mrf.mxu0
    %v2430 = vadd.f32 %v2261, %v2429
    %v2431 = vpop.f32.mrf.mxu0
    %v2432 = vadd.f32 %v2263, %v2431
    %2433 = vmatmul.bf16.gmra.mxu0 %v1240
    %v2434 = vpop.f32.mrf.mxu0
    %v2435 = vadd.f32 %v2266, %v2434
    %v2436 = vpop.f32.mrf.mxu0
    %v2437 = vadd.f32 %v2268, %v2436
    %2438 = vmatmul.bf16.gmra.mxu0 %v1247
    %v2439 = vpop.f32.mrf.mxu0
    %v2440 = vadd.f32 %v2271, %v2439
    %v2441 = vpop.f32.mrf.mxu0
    %v2442 = vadd.f32 %v2273, %v2441
    %2443 = vmatmul.bf16.gmra.mxu0 %v1254
    %v2444 = vpop.f32.mrf.mxu0
    %v2445 = vadd.f32 %v2276, %v2444
    %v2446 = vpop.f32.mrf.mxu0
    %v2447 = vadd.f32 %v2278, %v2446
    %2448 = vmatmul.bf16.gmra.mxu0 %v1261
    %v2449 = vpop.f32.mrf.mxu0
    %v2450 = vadd.f32 %v2281, %v2449
    %v2451 = vpop.f32.mrf.mxu0
    %v2452 = vadd.f32 %v2283, %v2451
    %2453 = vmatmul.bf16.gmra.mxu0 %v1268
    %v2454 = vpop.f32.mrf.mxu0
    %v2455 = vadd.f32 %v2286, %v2454
    %v2456 = vpop.f32.mrf.mxu0
    %v2457 = vadd.f32 %v2288, %v2456
    %2458 = vmatmul.bf16.gmra.mxu0 %v1275
    %v2459 = vpop.f32.mrf.mxu0
    %v2460 = vadd.f32 %v2291, %v2459
    %v2461 = vpop.f32.mrf.mxu0
    %v2462 = vadd.f32 %v2293, %v2461
    %2463 = vmatmul.bf16.gmra.mxu0 %v1282
    %v2464 = vpop.f32.mrf.mxu0
    %v2465 = vadd.f32 %v2296, %v2464
    %v2466 = vpop.f32.mrf.mxu0
    %v2467 = vadd.f32 %v2298, %v2466
    %2468 = vmatmul.bf16.gmra.mxu0 %v1289
    %v2469 = vpop.f32.mrf.mxu0
    %v2470 = vadd.f32 %v2301, %v2469
    %v2471 = vpop.f32.mrf.mxu0
    %v2472 = vadd.f32 %v2303, %v2471
    %2473 = vmatmul.bf16.gmra.mxu0 %v1296
    %v2474 = vpop.f32.mrf.mxu0
    %v2475 = vadd.f32 %v2306, %v2474
    %v2476 = vpop.f32.mrf.mxu0
    %v2477 = vadd.f32 %v2308, %v2476
    %2478 = vmatmul.bf16.gmra.mxu0 %v1303
    %v2479 = vpop.f32.mrf.mxu0
    %v2480 = vadd.f32 %v2311, %v2479
    %v2481 = vpop.f32.mrf.mxu0
    %v2482 = vadd.f32 %v2313, %v2481
    %2483 = vmatmul.bf16.gmra.mxu0 %v1310
    %v2484 = vpop.f32.mrf.mxu0
    %v2485 = vadd.f32 %v2316, %v2484
    %v2486 = vpop.f32.mrf.mxu0
    %v2487 = vadd.f32 %v2318, %v2486
    %2488 = vmatmul.bf16.gmra.mxu0 %v1317
    %v2489 = vpop.f32.mrf.mxu0
    %v2490 = vadd.f32 %v2321, %v2489
    %v2491 = vpop.f32.mrf.mxu0
    %v2492 = vadd.f32 %v2323, %v2491
    %2493 = vmatmul.bf16.gmra.mxu0 %v1324
    %v2494 = vpop.f32.mrf.mxu0
    %v2495 = vadd.f32 %v2326, %v2494
    %v2496 = vpop.f32.mrf.mxu0
    %v2497 = vadd.f32 %v2328, %v2496
    %2498 = vmatmul.bf16.gmra.mxu0 %v1331
    %v2499 = vpop.f32.mrf.mxu0
    %v2500 = vadd.f32 %v2331, %v2499
    %v2501 = vpop.f32.mrf.mxu0
    %v2502 = vadd.f32 %v2333, %v2501
    %2503 = vmatmul.bf16.gmra.mxu0 %v1338
    %v2504 = vpop.f32.mrf.mxu0
    %v2505 = vadd.f32 %v2336, %v2504
    %v2506 = vpop.f32.mrf.mxu0
    %v2507 = vadd.f32 %v2338, %v2506
    %2508 = vmatmul.bf16.gmra.mxu0 %v1345
    %v2509 = vpop.f32.mrf.mxu0
    %v2510 = vadd.f32 %v2341, %v2509
    %v2511 = vpop.f32.mrf.mxu0
    %v2512 = vadd.f32 %v2343, %v2511
    %2513 = vmatmul.bf16.gmra.mxu0 %v1352
    %v2514 = vpop.f32.mrf.mxu0
    %v2515 = vadd.f32 %v2346, %v2514
    %v2516 = vpop.f32.mrf.mxu0
    %v2517 = vadd.f32 %v2348, %v2516
    %2518 = vmatmul.bf16.gmra.mxu0 %v1359
    %v2519 = vpop.f32.mrf.mxu0
    %v2520 = vadd.f32 %v2351, %v2519
    %v2521 = vpop.f32.mrf.mxu0
    %v2522 = vadd.f32 %v2353, %v2521
    %2523 = vmatmul.bf16.gmra.mxu0 %v1366
    %v2524 = vpop.f32.mrf.mxu0
    %v2525 = vadd.f32 %v2356, %v2524
    %v2526 = vpop.f32.mrf.mxu0
    %v2527 = vadd.f32 %v2358, %v2526
    %2528 = vmatmul.bf16.gmra.mxu0 %v1373
    %v2529 = vpop.f32.mrf.mxu0
    %v2530 = vadd.f32 %v2361, %v2529
    %v2531 = vpop.f32.mrf.mxu0
    %v2532 = vadd.f32 %v2363, %v2531
    %2533 = vdwg.mxu0
    %2534 = vmatpush.bf16.xpose.msra.mxu0 %v190
    %2535 = vmatpush.bf16.xpose.msra.mxu0 %v183
    %2536 = vmatpush.bf16.xpose.msra.mxu0 %v176
    %2537 = vmatpush.bf16.xpose.msra.mxu0 %v169
    %2538 = vmatpush.bf16.xpose.msra.mxu0 %v162
    %2539 = vmatpush.bf16.xpose.msra.mxu0 %v155
    %2540 = vmatpush.bf16.xpose.msra.mxu0 %v148
    %2541 = vmatpush.bf16.xpose.msra.mxu0 %v141
    %2542 = vmatmul.bf16.gmra.mxu0 %v1157
    %v2543 = vpop.f32.mrf.mxu0
    %v2544 = vadd.f32 %v2375, %v2543
    %v2545 = vpop.f32.mrf.mxu0
    %v2546 = vadd.f32 %v2377, %v2545
    %2547 = vmatmul.bf16.gmra.mxu0 %v1164
    %v2548 = vpop.f32.mrf.mxu0
    %v2549 = vadd.f32 %v2380, %v2548
    %v2550 = vpop.f32.mrf.mxu0
    %v2551 = vadd.f32 %v2382, %v2550
    %2552 = vmatmul.bf16.gmra.mxu0 %v1171
    %v2553 = vpop.f32.mrf.mxu0
    %v2554 = vadd.f32 %v2385, %v2553
    %v2555 = vpop.f32.mrf.mxu0
    %v2556 = vadd.f32 %v2387, %v2555
    %2557 = vmatmul.bf16.gmra.mxu0 %v1178
    %v2558 = vpop.f32.mrf.mxu0
    %v2559 = vadd.f32 %v2390, %v2558
    %v2560 = vpop.f32.mrf.mxu0
    %v2561 = vadd.f32 %v2392, %v2560
    %2562 = vmatmul.bf16.gmra.mxu0 %v1185
    %v2563 = vpop.f32.mrf.mxu0
    %v2564 = vadd.f32 %v2395, %v2563
    %v2565 = vpop.f32.mrf.mxu0
    %v2566 = vadd.f32 %v2397, %v2565
    %2567 = vmatmul.bf16.gmra.mxu0 %v1192
    %v2568 = vpop.f32.mrf.mxu0
    %v2569 = vadd.f32 %v2400, %v2568
    %v2570 = vpop.f32.mrf.mxu0
    %v2571 = vadd.f32 %v2402, %v2570
    %2572 = vmatmul.bf16.gmra.mxu0 %v1199
    %v2573 = vpop.f32.mrf.mxu0
    %v2574 = vadd.f32 %v2405, %v2573
    %v2575 = vpop.f32.mrf.mxu0
    %v2576 = vadd.f32 %v2407, %v2575
    %2577 = vmatmul.bf16.gmra.mxu0 %v1206
    %v2578 = vpop.f32.mrf.mxu0
    %v2579 = vadd.f32 %v2410, %v2578
    %v2580 = vpop.f32.mrf.mxu0
    %v2581 = vadd.f32 %v2412, %v2580
    %2582 = vmatmul.bf16.gmra.mxu0 %v1213
    %v2583 = vpop.f32.mrf.mxu0
    %v2584 = vadd.f32 %v2415, %v2583
    %v2585 = vpop.f32.mrf.mxu0
    %v2586 = vadd.f32 %v2417, %v2585
    %2587 = vmatmul.bf16.gmra.mxu0 %v1220
    %v2588 = vpop.f32.mrf.mxu0
    %v2589 = vadd.f32 %v2420, %v2588
    %v2590 = vpop.f32.mrf.mxu0
    %v2591 = vadd.f32 %v2422, %v2590
    %2592 = vmatmul.bf16.gmra.mxu0 %v1227
    %v2593 = vpop.f32.mrf.mxu0
    %v2594 = vadd.f32 %v2425, %v2593
    %v2595 = vpop.f32.mrf.mxu0
    %v2596 = vadd.f32 %v2427, %v2595
    %2597 = vmatmul.bf16.gmra.mxu0 %v1234
    %v2598 = vpop.f32.mrf.mxu0
    %v2599 = vadd.f32 %v2430, %v2598
    %v2600 = vpop.f32.mrf.mxu0
    %v2601 = vadd.f32 %v2432, %v2600
    %2602 = vmatmul.bf16.gmra.mxu0 %v1241
    %v2603 = vpop.f32.mrf.mxu0
    %v2604 = vadd.f32 %v2435, %v2603
    %v2605 = vpop.f32.mrf.mxu0
    %v2606 = vadd.f32 %v2437, %v2605
    %2607 = vmatmul.bf16.gmra.mxu0 %v1248
    %v2608 = vpop.f32.mrf.mxu0
    %v2609 = vadd.f32 %v2440, %v2608
    %v2610 = vpop.f32.mrf.mxu0
    %v2611 = vadd.f32 %v2442, %v2610
    %2612 = vmatmul.bf16.gmra.mxu0 %v1255
    %v2613 = vpop.f32.mrf.mxu0
    %v2614 = vadd.f32 %v2445, %v2613
    %v2615 = vpop.f32.mrf.mxu0
    %v2616 = vadd.f32 %v2447, %v2615
    %2617 = vmatmul.bf16.gmra.mxu0 %v1262
    %v2618 = vpop.f32.mrf.mxu0
    %v2619 = vadd.f32 %v2450, %v2618
    %v2620 = vpop.f32.mrf.mxu0
    %v2621 = vadd.f32 %v2452, %v2620
    %2622 = vmatmul.bf16.gmra.mxu0 %v1269
    %v2623 = vpop.f32.mrf.mxu0
    %v2624 = vadd.f32 %v2455, %v2623
    %v2625 = vpop.f32.mrf.mxu0
    %v2626 = vadd.f32 %v2457, %v2625
    %2627 = vmatmul.bf16.gmra.mxu0 %v1276
    %v2628 = vpop.f32.mrf.mxu0
    %v2629 = vadd.f32 %v2460, %v2628
    %v2630 = vpop.f32.mrf.mxu0
    %v2631 = vadd.f32 %v2462, %v2630
    %2632 = vmatmul.bf16.gmra.mxu0 %v1283
    %v2633 = vpop.f32.mrf.mxu0
    %v2634 = vadd.f32 %v2465, %v2633
    %v2635 = vpop.f32.mrf.mxu0
    %v2636 = vadd.f32 %v2467, %v2635
    %2637 = vmatmul.bf16.gmra.mxu0 %v1290
    %v2638 = vpop.f32.mrf.mxu0
    %v2639 = vadd.f32 %v2470, %v2638
    %v2640 = vpop.f32.mrf.mxu0
    %v2641 = vadd.f32 %v2472, %v2640
    %2642 = vmatmul.bf16.gmra.mxu0 %v1297
    %v2643 = vpop.f32.mrf.mxu0
    %v2644 = vadd.f32 %v2475, %v2643
    %v2645 = vpop.f32.mrf.mxu0
    %v2646 = vadd.f32 %v2477, %v2645
    %2647 = vmatmul.bf16.gmra.mxu0 %v1304
    %v2648 = vpop.f32.mrf.mxu0
    %v2649 = vadd.f32 %v2480, %v2648
    %v2650 = vpop.f32.mrf.mxu0
    %v2651 = vadd.f32 %v2482, %v2650
    %2652 = vmatmul.bf16.gmra.mxu0 %v1311
    %v2653 = vpop.f32.mrf.mxu0
    %v2654 = vadd.f32 %v2485, %v2653
    %v2655 = vpop.f32.mrf.mxu0
    %v2656 = vadd.f32 %v2487, %v2655
    %2657 = vmatmul.bf16.gmra.mxu0 %v1318
    %v2658 = vpop.f32.mrf.mxu0
    %v2659 = vadd.f32 %v2490, %v2658
    %v2660 = vpop.f32.mrf.mxu0
    %v2661 = vadd.f32 %v2492, %v2660
    %2662 = vmatmul.bf16.gmra.mxu0 %v1325
    %v2663 = vpop.f32.mrf.mxu0
    %v2664 = vadd.f32 %v2495, %v2663
    %v2665 = vpop.f32.mrf.mxu0
    %v2666 = vadd.f32 %v2497, %v2665
    %2667 = vmatmul.bf16.gmra.mxu0 %v1332
    %v2668 = vpop.f32.mrf.mxu0
    %v2669 = vadd.f32 %v2500, %v2668
    %v2670 = vpop.f32.mrf.mxu0
    %v2671 = vadd.f32 %v2502, %v2670
    %2672 = vmatmul.bf16.gmra.mxu0 %v1339
    %v2673 = vpop.f32.mrf.mxu0
    %v2674 = vadd.f32 %v2505, %v2673
    %v2675 = vpop.f32.mrf.mxu0
    %v2676 = vadd.f32 %v2507, %v2675
    %2677 = vmatmul.bf16.gmra.mxu0 %v1346
    %v2678 = vpop.f32.mrf.mxu0
    %v2679 = vadd.f32 %v2510, %v2678
    %v2680 = vpop.f32.mrf.mxu0
    %v2681 = vadd.f32 %v2512, %v2680
    %2682 = vmatmul.bf16.gmra.mxu0 %v1353
    %v2683 = vpop.f32.mrf.mxu0
    %v2684 = vadd.f32 %v2515, %v2683
    %v2685 = vpop.f32.mrf.mxu0
    %v2686 = vadd.f32 %v2517, %v2685
    %2687 = vmatmul.bf16.gmra.mxu0 %v1360
    %v2688 = vpop.f32.mrf.mxu0
    %v2689 = vadd.f32 %v2520, %v2688
    %v2690 = vpop.f32.mrf.mxu0
    %v2691 = vadd.f32 %v2522, %v2690
    %2692 = vmatmul.bf16.gmra.mxu0 %v1367
    %v2693 = vpop.f32.mrf.mxu0
    %v2694 = vadd.f32 %v2525, %v2693
    %v2695 = vpop.f32.mrf.mxu0
    %v2696 = vadd.f32 %v2527, %v2695
    %2697 = vmatmul.bf16.gmra.mxu0 %v1374
    %v2698 = vpop.f32.mrf.mxu0
    %v2699 = vadd.f32 %v2530, %v2698
    %v2700 = vpop.f32.mrf.mxu0
    %v2701 = vadd.f32 %v2532, %v2700
    %2702 = vdwg.mxu0
    %2703 = vmatpush.bf16.xpose.msra.mxu0 %v1687
    %2704 = vmatpush.bf16.xpose.msra.mxu0 %v1684
    %2705 = vmatpush.bf16.xpose.msra.mxu0 %v1681
    %2706 = vmatpush.bf16.xpose.msra.mxu0 %v1678
    %2707 = vmatpush.bf16.xpose.msra.mxu0 %v1675
    %2708 = vmatpush.bf16.xpose.msra.mxu0 %v1672
    %2709 = vmatpush.bf16.xpose.msra.mxu0 %v1669
    %2710 = vmatpush.bf16.xpose.msra.mxu0 %v1666
    %2711 = vmatmul.bf16.gmra.mxu0 %v1570
    %v2712 = vpop.f32.mrf.mxu0
    %v2713 = vadd.f32 %v2544, %v2712
    %v2714 = vpop.f32.mrf.mxu0
    %v2715 = vadd.f32 %v2546, %v2714
    %2716 = vmatmul.bf16.gmra.mxu0 %v1573
    %v2717 = vpop.f32.mrf.mxu0
    %v2718 = vadd.f32 %v2549, %v2717
    %v2719 = vpop.f32.mrf.mxu0
    %v2720 = vadd.f32 %v2551, %v2719
    %2721 = vmatmul.bf16.gmra.mxu0 %v1576
    %v2722 = vpop.f32.mrf.mxu0
    %v2723 = vadd.f32 %v2554, %v2722
    %v2724 = vpop.f32.mrf.mxu0
    %v2725 = vadd.f32 %v2556, %v2724
    %2726 = vmatmul.bf16.gmra.mxu0 %v1579
    %v2727 = vpop.f32.mrf.mxu0
    %v2728 = vadd.f32 %v2559, %v2727
    %v2729 = vpop.f32.mrf.mxu0
    %v2730 = vadd.f32 %v2561, %v2729
    %2731 = vmatmul.bf16.gmra.mxu0 %v1582
    %v2732 = vpop.f32.mrf.mxu0
    %v2733 = vadd.f32 %v2564, %v2732
    %v2734 = vpop.f32.mrf.mxu0
    %v2735 = vadd.f32 %v2566, %v2734
    %2736 = vmatmul.bf16.gmra.mxu0 %v1585
    %v2737 = vpop.f32.mrf.mxu0
    %v2738 = vadd.f32 %v2569, %v2737
    %v2739 = vpop.f32.mrf.mxu0
    %v2740 = vadd.f32 %v2571, %v2739
    %2741 = vmatmul.bf16.gmra.mxu0 %v1588
    %v2742 = vpop.f32.mrf.mxu0
    %v2743 = vadd.f32 %v2574, %v2742
    %v2744 = vpop.f32.mrf.mxu0
    %v2745 = vadd.f32 %v2576, %v2744
    %2746 = vmatmul.bf16.gmra.mxu0 %v1591
    %v2747 = vpop.f32.mrf.mxu0
    %v2748 = vadd.f32 %v2579, %v2747
    %v2749 = vpop.f32.mrf.mxu0
    %v2750 = vadd.f32 %v2581, %v2749
    %2751 = vmatmul.bf16.gmra.mxu0 %v1594
    %v2752 = vpop.f32.mrf.mxu0
    %v2753 = vadd.f32 %v2584, %v2752
    %v2754 = vpop.f32.mrf.mxu0
    %v2755 = vadd.f32 %v2586, %v2754
    %2756 = vmatmul.bf16.gmra.mxu0 %v1597
    %v2757 = vpop.f32.mrf.mxu0
    %v2758 = vadd.f32 %v2589, %v2757
    %v2759 = vpop.f32.mrf.mxu0
    %v2760 = vadd.f32 %v2591, %v2759
    %2761 = vmatmul.bf16.gmra.mxu0 %v1600
    %v2762 = vpop.f32.mrf.mxu0
    %v2763 = vadd.f32 %v2594, %v2762
    %v2764 = vpop.f32.mrf.mxu0
    %v2765 = vadd.f32 %v2596, %v2764
    %2766 = vmatmul.bf16.gmra.mxu0 %v1603
    %v2767 = vpop.f32.mrf.mxu0
    %v2768 = vadd.f32 %v2599, %v2767
    %v2769 = vpop.f32.mrf.mxu0
    %v2770 = vadd.f32 %v2601, %v2769
    %2771 = vmatmul.bf16.gmra.mxu0 %v1606
    %v2772 = vpop.f32.mrf.mxu0
    %v2773 = vadd.f32 %v2604, %v2772
    %v2774 = vpop.f32.mrf.mxu0
    %v2775 = vadd.f32 %v2606, %v2774
    %2776 = vmatmul.bf16.gmra.mxu0 %v1609
    %v2777 = vpop.f32.mrf.mxu0
    %v2778 = vadd.f32 %v2609, %v2777
    %v2779 = vpop.f32.mrf.mxu0
    %v2780 = vadd.f32 %v2611, %v2779
    %2781 = vmatmul.bf16.gmra.mxu0 %v1612
    %v2782 = vpop.f32.mrf.mxu0
    %v2783 = vadd.f32 %v2614, %v2782
    %v2784 = vpop.f32.mrf.mxu0
    %v2785 = vadd.f32 %v2616, %v2784
    %2786 = vmatmul.bf16.gmra.mxu0 %v1615
    %v2787 = vpop.f32.mrf.mxu0
    %v2788 = vadd.f32 %v2619, %v2787
    %v2789 = vpop.f32.mrf.mxu0
    %v2790 = vadd.f32 %v2621, %v2789
    %2791 = vmatmul.bf16.gmra.mxu0 %v1618
    %v2792 = vpop.f32.mrf.mxu0
    %v2793 = vadd.f32 %v2624, %v2792
    %v2794 = vpop.f32.mrf.mxu0
    %v2795 = vadd.f32 %v2626, %v2794
    %2796 = vmatmul.bf16.gmra.mxu0 %v1621
    %v2797 = vpop.f32.mrf.mxu0
    %v2798 = vadd.f32 %v2629, %v2797
    %v2799 = vpop.f32.mrf.mxu0
    %v2800 = vadd.f32 %v2631, %v2799
    %2801 = vmatmul.bf16.gmra.mxu0 %v1624
    %v2802 = vpop.f32.mrf.mxu0
    %v2803 = vadd.f32 %v2634, %v2802
    %v2804 = vpop.f32.mrf.mxu0
    %v2805 = vadd.f32 %v2636, %v2804
    %2806 = vmatmul.bf16.gmra.mxu0 %v1627
    %v2807 = vpop.f32.mrf.mxu0
    %v2808 = vadd.f32 %v2639, %v2807
    %v2809 = vpop.f32.mrf.mxu0
    %v2810 = vadd.f32 %v2641, %v2809
    %2811 = vmatmul.bf16.gmra.mxu0 %v1630
    %v2812 = vpop.f32.mrf.mxu0
    %v2813 = vadd.f32 %v2644, %v2812
    %v2814 = vpop.f32.mrf.mxu0
    %v2815 = vadd.f32 %v2646, %v2814
    %2816 = vmatmul.bf16.gmra.mxu0 %v1633
    %v2817 = vpop.f32.mrf.mxu0
    %v2818 = vadd.f32 %v2649, %v2817
    %v2819 = vpop.f32.mrf.mxu0
    %v2820 = vadd.f32 %v2651, %v2819
    %2821 = vmatmul.bf16.gmra.mxu0 %v1636
    %v2822 = vpop.f32.mrf.mxu0
    %v2823 = vadd.f32 %v2654, %v2822
    %v2824 = vpop.f32.mrf.mxu0
    %v2825 = vadd.f32 %v2656, %v2824
    %2826 = vmatmul.bf16.gmra.mxu0 %v1639
    %v2827 = vpop.f32.mrf.mxu0
    %v2828 = vadd.f32 %v2659, %v2827
    %v2829 = vpop.f32.mrf.mxu0
    %v2830 = vadd.f32 %v2661, %v2829
    %2831 = vmatmul.bf16.gmra.mxu0 %v1642
    %v2832 = vpop.f32.mrf.mxu0
    %v2833 = vadd.f32 %v2664, %v2832
    %v2834 = vpop.f32.mrf.mxu0
    %v2835 = vadd.f32 %v2666, %v2834
    %2836 = vmatmul.bf16.gmra.mxu0 %v1645
    %v2837 = vpop.f32.mrf.mxu0
    %v2838 = vadd.f32 %v2669, %v2837
    %v2839 = vpop.f32.mrf.mxu0
    %v2840 = vadd.f32 %v2671, %v2839
    %2841 = vmatmul.bf16.gmra.mxu0 %v1648
    %v2842 = vpop.f32.mrf.mxu0
    %v2843 = vadd.f32 %v2674, %v2842
    %v2844 = vpop.f32.mrf.mxu0
    %v2845 = vadd.f32 %v2676, %v2844
    %2846 = vmatmul.bf16.gmra.mxu0 %v1651
    %v2847 = vpop.f32.mrf.mxu0
    %v2848 = vadd.f32 %v2679, %v2847
    %v2849 = vpop.f32.mrf.mxu0
    %v2850 = vadd.f32 %v2681, %v2849
    %2851 = vmatmul.bf16.gmra.mxu0 %v1654
    %v2852 = vpop.f32.mrf.mxu0
    %v2853 = vadd.f32 %v2684, %v2852
    %v2854 = vpop.f32.mrf.mxu0
    %v2855 = vadd.f32 %v2686, %v2854
    %2856 = vmatmul.bf16.gmra.mxu0 %v1657
    %v2857 = vpop.f32.mrf.mxu0
    %v2858 = vadd.f32 %v2689, %v2857
    %v2859 = vpop.f32.mrf.mxu0
    %v2860 = vadd.f32 %v2691, %v2859
    %2861 = vmatmul.bf16.gmra.mxu0 %v1660
    %v2862 = vpop.f32.mrf.mxu0
    %v2863 = vadd.f32 %v2694, %v2862
    %v2864 = vpop.f32.mrf.mxu0
    %v2865 = vadd.f32 %v2696, %v2864
    %2866 = vmatmul.bf16.gmra.mxu0 %v1663
    %v2867 = vpop.f32.mrf.mxu0
    %v2868 = vadd.f32 %v2699, %v2867
    %v2869 = vpop.f32.mrf.mxu0
    %v2870 = vadd.f32 %v2701, %v2869
    %2871 = vdwg.mxu0
    %v2872 = vmax.f32 %v2713, %v2793
    %v2873 = vmax.f32 %v2715, %v2795
    %v2874 = vmax.f32 %v2718, %v2798
    %v2875 = vmax.f32 %v2720, %v2800
    %v2876 = vmax.f32 %v2723, %v2803
    %v2877 = vmax.f32 %v2725, %v2805
    %v2878 = vmax.f32 %v2728, %v2808
    %v2879 = vmax.f32 %v2730, %v2810
    %v2880 = vmax.f32 %v2733, %v2813
    %v2881 = vmax.f32 %v2735, %v2815
    %v2882 = vmax.f32 %v2738, %v2818
    %v2883 = vmax.f32 %v2740, %v2820
    %v2884 = vmax.f32 %v2743, %v2823
    %v2885 = vmax.f32 %v2745, %v2825
    %v2886 = vmax.f32 %v2748, %v2828
    %v2887 = vmax.f32 %v2750, %v2830
    %v2888 = vmax.f32 %v2753, %v2833
    %v2889 = vmax.f32 %v2755, %v2835
    %v2890 = vmax.f32 %v2758, %v2838
    %v2891 = vmax.f32 %v2760, %v2840
    %v2892 = vmax.f32 %v2763, %v2843
    %v2893 = vmax.f32 %v2765, %v2845
    %v2894 = vmax.f32 %v2768, %v2848
    %v2895 = vmax.f32 %v2770, %v2850
    %v2896 = vmax.f32 %v2773, %v2853
    %v2897 = vmax.f32 %v2775, %v2855
    %v2898 = vmax.f32 %v2778, %v2858
    %v2899 = vmax.f32 %v2780, %v2860
    %v2900 = vmax.f32 %v2783, %v2863
    %v2901 = vmax.f32 %v2785, %v2865
    %v2902 = vmax.f32 %v2788, %v2868
    %v2903 = vmax.f32 %v2790, %v2870
    %v2904 = vmax.f32 %v2872, %v2888
    %v2905 = vmax.f32 %v2873, %v2889
    %v2906 = vmax.f32 %v2874, %v2890
    %v2907 = vmax.f32 %v2875, %v2891
    %v2908 = vmax.f32 %v2876, %v2892
    %v2909 = vmax.f32 %v2877, %v2893
    %v2910 = vmax.f32 %v2878, %v2894
    %v2911 = vmax.f32 %v2879, %v2895
    %v2912 = vmax.f32 %v2880, %v2896
    %v2913 = vmax.f32 %v2881, %v2897
    %v2914 = vmax.f32 %v2882, %v2898
    %v2915 = vmax.f32 %v2883, %v2899
    %v2916 = vmax.f32 %v2884, %v2900
    %v2917 = vmax.f32 %v2885, %v2901
    %v2918 = vmax.f32 %v2886, %v2902
    %v2919 = vmax.f32 %v2887, %v2903
    %v2920 = vmax.f32 %v2904, %v2912
    %v2921 = vmax.f32 %v2905, %v2913
    %v2922 = vmax.f32 %v2906, %v2914
    %v2923 = vmax.f32 %v2907, %v2915
    %v2924 = vmax.f32 %v2908, %v2916
    %v2925 = vmax.f32 %v2909, %v2917
    %v2926 = vmax.f32 %v2910, %v2918
    %v2927 = vmax.f32 %v2911, %v2919
    %v2928 = vmax.f32 %v2920, %v2924
    %v2929 = vmax.f32 %v2921, %v2925
    %v2930 = vmax.f32 %v2922, %v2926
    %v2931 = vmax.f32 %v2923, %v2927
    %v2932 = vld [vmem:[#allocation2] sm:$0x1]
    %v2934 = vperm.slane %v2932, 0
    %2935 = vset.pattern.permute.xlu0 0
    %2936 = vperm.xlu0 %2935, %v2934
    %v2937 = vpop.permute.xlu0 %2936
    %v2939 = vadd.f32 %v2928, %v2937
    %v2940 = vadd.f32 %v2929, %v2937
    %v2941 = vadd.f32 %v2930, %v2937
    %v2942 = vadd.f32 %v2931, %v2937
    %v2943 = vmax.f32 %v2939, 0.0
    %v2944 = vmax.f32 %v2940, 0.0
    %v2945 = vmax.f32 %v2941, 0.0
    %v2946 = vmax.f32 %v2942, 0.0
    %v2947 = vpack.c.bf16 %v2944, %v2943
    %v2948 = vpack.c.bf16 %v2946, %v2945
    %v2949 = vld [vmem:[%s2] sm:$0xf]
    %v2950 = vld [vmem:[%s2 + $0x4] sm:$0x1]
    %v2951 = vld [vmem:[%s3] sm:$0xff]
    %v2952 = vld [vmem:[%s3 + $0x8] sm:$0x3]
    %2954 = vset.pattern.permute.xlu0 0
    %2955 = vperm.xlu0 %2954, %v2951
    %v2956 = vpop.permute.xlu0 %2955
    %2959 = vset.pattern.permute.xlu0 0
    %2960 = vperm.xlu0 %2959, %v2952
    %v2961 = vpop.permute.xlu0 %2960
    %v2965 = vunpack.c.l.b16 %v2949
    %v2966 = vunpack.c.l.b16 %v2950
    %v2967 = vpack.c.b16 %v2966, %v2965
    %vm2968 = vcmask 261120
    %v2970 = vsel %vm2968, %v2967, 0
    %2972 = vmatpush.bf16.msra.mxu0 0
    %2973 = vmatpush.bf16.msra.mxu0 0
    %2974 = vmatpush.bf16.msra.mxu0 0
    %2975 = vmatpush.bf16.msra.mxu0 0
    %2976 = vmatpush.bf16.msra.mxu0 0
    %2977 = vmatpush.bf16.msra.mxu0 0
    %2978 = vmatpush.bf16.msra.mxu0 %v2948
    %2979 = vmatpush.bf16.msra.mxu0 %v2947
    %2980 = vmatmul.bf16.gmra.mxu0 %v2970
    %v2981 = vpop.f32.mrf.mxu0
    %v2982 = vadd.f32 %v2956, %v2981
    %v2983 = vpop.f32.mrf.mxu0
    %v2984 = vadd.f32 %v2961, %v2983
    %2985 = vdwg.mxu0
    %2986 = vst [vmem:[#allocation3] sm:$0xff] %v2982
    %2987 = vst [vmem:[#allocation3 + $0x8] sm:$0x3] %v2984
    // Predicated region
    $region22: #{tpu_custom_call.1} parent=1 // pred_check
      _
    $region23: #{tpu_custom_call.1} parent=1 // pred_check_branch
      %2989 = sbr.rel (0) target = $region25
    $region24: #{tpu_custom_call.1} parent=1 // pred_region
      %2991 = vsyncadd [#allocation4], 0
      %s2992 = sshll.u32 [#allocation3], 4
      %s2993 = int_to_ptr.vmem [resolvable:$true] %s2992
      %s2994 = sshll.u32 %s5, 4
      %s2995 = int_to_ptr.hbm [resolvable:$true] %s2994
      %3000 = dma.vmem_to_hbm [thread:$0]  %s2993, 256, %s2995, [#allocation4], 128, 128, 8
    $region25: #{tpu_custom_call.1} parent=1 // pred_fallthru
      _
    // Predicated region
    $region26: #{tpu_custom_call.1} parent=1 // pred_check
      _
    $region27: #{tpu_custom_call.1} parent=1 // pred_check_branch
      %3002 = sbr.rel (0) target = $region29
    $region28: #{tpu_custom_call.1} parent=1 // pred_region
      %3004 = dma.done [#allocation4], 256
    $region29: #{tpu_custom_call.1} parent=1 // pred_fallthru
      _
    %3005 = vsyncpa [#allocation4], 1

// kernel: tpu_custom_call.1
$region0: #{tpu_custom_call.1}
  #allocation0 [shape = 'u32[]', space=smem, size = 0x4, offset = 0x4, fixed_abs, tag = 'smem constant byte address 0x4 - core index']
  #allocation1 [shape = 'u32[72,128]{1,0:T(1,128)}', space=vmem, size = 0x9000, scoped, tag = 'internal scratch']
  #allocation2 [shape = 'f32[1,1]{1,0:T(1,128)S(1)}', space=vmem, size = 0x200, scoped, tag = 'scoped memory for tpu_custom_call.1']
  %s0 = inlined_call_operand.vmem [shape: f32[128,784], index: 0, kind: input, shape index: {}]
  %s1 = inlined_call_operand.vmem [shape: bf16[512,784], index: 1, kind: input, shape index: {}]
  %s2 = inlined_call_operand.vmem [shape: bf16[10,32], index: 2, kind: input, shape index: {}]
  %s3 = inlined_call_operand.vmem [shape: f32[10,1], index: 3, kind: input, shape index: {}]
  %s4 = inlined_call_operand.<no memory space> [shape: f32[1,1], index: 4, kind: input, shape index: {}]
  %s5 = inlined_call_operand.hbm [shape: f32[10,128], index: 5, kind: output, shape index: {}]
  %s6 = sld [smem:[#allocation0]]
  $region30: #{tpu_custom_call.1} parent=0
    _
  %s8 = ssub.s32 1, %s6
  %s9 = scalar_select 0, %s8, %s6
  %v10 = vstv %s4
  %11 = vst [vmem:[#allocation2] sm:$0x1] %v10
  $region1: #{tpu_custom_call.1} parent=0
    #allocation3 [shape = 'u8[8192]{0}', space=vmem, size = 0x2000, scoped, tag = 'output window, operand 0, single buffered']
    #allocation4 [shape = 's32[1]{0}', space=sflag, size = 0x4, scoped, tag = 'scoped memory for tpu_custom_call.1']
    %12 = vsyncpa [#allocation4], 0
    // Predicated region
    $region2: #{tpu_custom_call.1} parent=1 // pred_check
      _
    $region3: #{tpu_custom_call.1} parent=1 // pred_check_branch
      %14 = sbr.rel (0) target = $region5
    $region4: #{tpu_custom_call.1} parent=1 // pred_region
      _
    $region5: #{tpu_custom_call.1} parent=1 // pred_fallthru
      _
    // Predicated region
    $region6: #{tpu_custom_call.1} parent=1 // pred_check
      _
    $region7: #{tpu_custom_call.1} parent=1 // pred_check_branch
      %16 = sbr.rel (0) target = $region9
    $region8: #{tpu_custom_call.1} parent=1 // pred_region
      _
    $region9: #{tpu_custom_call.1} parent=1 // pred_fallthru
      _
    // Predicated region
    $region10: #{tpu_custom_call.1} parent=1 // pred_check
      _
    $region11: #{tpu_custom_call.1} parent=1 // pred_check_branch
      %18 = sbr.rel (0) target = $region13
    $region12: #{tpu_custom_call.1} parent=1 // pred_region
      _
    $region13: #{tpu_custom_call.1} parent=1 // pred_fallthru
      _
    // Predicated region
    $region14: #{tpu_custom_call.1} parent=1 // pred_check
      _
    $region15: #{tpu_custom_call.1} parent=1 // pred_check_branch
      %20 = sbr.rel (0) target = $region17
    $region16: #{tpu_custom_call.1} parent=1 // pred_region
      _
    $region17: #{tpu_custom_call.1} parent=1 // pred_fallthru
      _
    // Predicated region
    $region18: #{tpu_custom_call.1} parent=1 // pred_check
      _
    $region19: #{tpu_custom_call.1} parent=1 // pred_check_branch
      %22 = sbr.rel (0) target = $region21
    $region20: #{tpu_custom_call.1} parent=1 // pred_region
      _
    $region21: #{tpu_custom_call.1} parent=1 // pred_fallthru
      _
    %v24 = vld [vmem:[%s0] sm:$0xff]
    %v25 = vld [vmem:[%s0 + $0x8] sm:$0xff]
    %v26 = vld [vmem:[%s0 + $0x10] sm:$0xff]
    %v27 = vld [vmem:[%s0 + $0x18] sm:$0xff]
    %v28 = vld [vmem:[%s0 + $0x20] sm:$0xff]
    %v29 = vld [vmem:[%s0 + $0x28] sm:$0xff]
    %v30 = vld [vmem:[%s0 + $0x30] sm:$0xff]
    %v31 = vld [vmem:[%s0 + $0x38] sm:$0xff]
    %v32 = vld [vmem:[%s0 + $0x40] sm:$0xff]
    %v33 = vld [vmem:[%s0 + $0x48] sm:$0xff]
    %v34 = vld [vmem:[%s0 + $0x50] sm:$0xff]
    %v35 = vld [vmem:[%s0 + $0x58] sm:$0xff]
    %v36 = vld [vmem:[%s0 + $0x60] sm:$0xff]
    %v37 = vld [vmem:[%s0 + $0x68] sm:$0xff]
    %v38 = vld [vmem:[%s0 + $0x70] sm:$0xff]
    %v39 = vld [vmem:[%s0 + $0x78] sm:$0xff]
    %v40 = vld [vmem:[%s0 + $0x80] sm:$0xff]
    %v41 = vld [vmem:[%s0 + $0x88] sm:$0xff]
    %v42 = vld [vmem:[%s0 + $0x90] sm:$0xff]
    %v43 = vld [vmem:[%s0 + $0x98] sm:$0xff]
    %v44 = vld [vmem:[%s0 + $0xa0] sm:$0xff]
    %v45 = vld [vmem:[%s0 + $0xa8] sm:$0xff]
    %v46 = vld [vmem:[%s0 + $0xb0] sm:$0xff]
    %v47 = vld [vmem:[%s0 + $0xb8] sm:$0xff]
    %v48 = vld [vmem:[%s0 + $0xc0] sm:$0xff]
    %v49 = vld [vmem:[%s0 + $0xc8] sm:$0xff]
    %v50 = vld [vmem:[%s0 + $0xd0] sm:$0xff]
    %v51 = vld [vmem:[%s0 + $0xd8] sm:$0xff]
    %v52 = vld [vmem:[%s0 + $0xe0] sm:$0xff]
    %v53 = vld [vmem:[%s0 + $0xe8] sm:$0xff]
    %v54 = vld [vmem:[%s0 + $0xf0] sm:$0xff]
    %v55 = vld [vmem:[%s0 + $0xf8] sm:$0xff]
    %v56 = vld [vmem:[%s0 + $0x100] sm:$0xff]
    %v57 = vld [vmem:[%s0 + $0x108] sm:$0xff]
    %v58 = vld [vmem:[%s0 + $0x110] sm:$0xff]
    %v59 = vld [vmem:[%s0 + $0x118] sm:$0xff]
    %v60 = vld [vmem:[%s0 + $0x120] sm:$0xff]
    %v61 = vld [vmem:[%s0 + $0x128] sm:$0xff]
    %v62 = vld [vmem:[%s0 + $0x130] sm:$0xff]
    %v63 = vld [vmem:[%s0 + $0x138] sm:$0xff]
    %v64 = vld [vmem:[%s0 + $0x140] sm:$0xff]
    %v65 = vld [vmem:[%s0 + $0x148] sm:$0xff]
    %v66 = vld [vmem:[%s0 + $0x150] sm:$0xff]
    %v67 = vld [vmem:[%s0 + $0x158] sm:$0xff]
    %v68 = vld [vmem:[%s0 + $0x160] sm:$0xff]
    %v69 = vld [vmem:[%s0 + $0x168] sm:$0xff]
    %v70 = vld [vmem:[%s0 + $0x170] sm:$0xff]
    %v71 = vld [vmem:[%s0 + $0x178] sm:$0xff]
    %v72 = vld [vmem:[%s0 + $0x180] sm:$0xff]
    %v73 = vld [vmem:[%s0 + $0x188] sm:$0xff]
    %v74 = vld [vmem:[%s0 + $0x190] sm:$0xff]
    %v75 = vld [vmem:[%s0 + $0x198] sm:$0xff]
    %v76 = vld [vmem:[%s0 + $0x1a0] sm:$0xff]
    %v77 = vld [vmem:[%s0 + $0x1a8] sm:$0xff]
    %v78 = vld [vmem:[%s0 + $0x1b0] sm:$0xff]
    %v79 = vld [vmem:[%s0 + $0x1b8] sm:$0xff]
    %v80 = vld [vmem:[%s0 + $0x1c0] sm:$0xff]
    %v81 = vld [vmem:[%s0 + $0x1c8] sm:$0xff]
    %v82 = vld [vmem:[%s0 + $0x1d0] sm:$0xff]
    %v83 = vld [vmem:[%s0 + $0x1d8] sm:$0xff]
    %v84 = vld [vmem:[%s0 + $0x1e0] sm:$0xff]
    %v85 = vld [vmem:[%s0 + $0x1e8] sm:$0xff]
    %v86 = vld [vmem:[%s0 + $0x1f0] sm:$0xff]
    %v87 = vld [vmem:[%s0 + $0x1f8] sm:$0xff]
    %v88 = vld [vmem:[%s0 + $0x200] sm:$0xff]
    %v89 = vld [vmem:[%s0 + $0x208] sm:$0xff]
    %v90 = vld [vmem:[%s0 + $0x210] sm:$0xff]
    %v91 = vld [vmem:[%s0 + $0x218] sm:$0xff]
    %v92 = vld [vmem:[%s0 + $0x220] sm:$0xff]
    %v93 = vld [vmem:[%s0 + $0x228] sm:$0xff]
    %v94 = vld [vmem:[%s0 + $0x230] sm:$0xff]
    %v95 = vld [vmem:[%s0 + $0x238] sm:$0xff]
    %v96 = vld [vmem:[%s0 + $0x240] sm:$0xff]
    %v97 = vld [vmem:[%s0 + $0x248] sm:$0xff]
    %v98 = vld [vmem:[%s0 + $0x250] sm:$0xff]
    %v99 = vld [vmem:[%s0 + $0x258] sm:$0xff]
    %v100 = vld [vmem:[%s0 + $0x260] sm:$0xff]
    %v101 = vld [vmem:[%s0 + $0x268] sm:$0xff]
    %v102 = vld [vmem:[%s0 + $0x270] sm:$0xff]
    %v103 = vld [vmem:[%s0 + $0x278] sm:$0xff]
    %v104 = vld [vmem:[%s0 + $0x280] sm:$0xff]
    %v105 = vld [vmem:[%s0 + $0x288] sm:$0xff]
    %v106 = vld [vmem:[%s0 + $0x290] sm:$0xff]
    %v107 = vld [vmem:[%s0 + $0x298] sm:$0xff]
    %v108 = vld [vmem:[%s0 + $0x2a0] sm:$0xff]
    %v109 = vld [vmem:[%s0 + $0x2a8] sm:$0xff]
    %v110 = vld [vmem:[%s0 + $0x2b0] sm:$0xff]
    %v111 = vld [vmem:[%s0 + $0x2b8] sm:$0xff]
    %v112 = vld [vmem:[%s0 + $0x2c0] sm:$0xff]
    %v113 = vld [vmem:[%s0 + $0x2c8] sm:$0xff]
    %v114 = vld [vmem:[%s0 + $0x2d0] sm:$0xff]
    %v115 = vld [vmem:[%s0 + $0x2d8] sm:$0xff]
    %v116 = vld [vmem:[%s0 + $0x2e0] sm:$0xff]
    %v117 = vld [vmem:[%s0 + $0x2e8] sm:$0xff]
    %v118 = vld [vmem:[%s0 + $0x2f0] sm:$0xff]
    %v119 = vld [vmem:[%s0 + $0x2f8] sm:$0xff]
    %v120 = vld [vmem:[%s0 + $0x300] sm:$0xff]
    %v121 = vld [vmem:[%s0 + $0x308] sm:$0xff]
    %v122 = vld [vmem:[%s0 + $0x310] sm:$0xff]
    %v123 = vld [vmem:[%s0 + $0x318] sm:$0xff]
    %v124 = vld [vmem:[%s0 + $0x320] sm:$0xff]
    %v125 = vld [vmem:[%s0 + $0x328] sm:$0xff]
    %v126 = vld [vmem:[%s0 + $0x330] sm:$0xff]
    %v127 = vld [vmem:[%s0 + $0x338] sm:$0xff]
    %v128 = vld [vmem:[%s0 + $0x340] sm:$0xff]
    %v129 = vld [vmem:[%s0 + $0x348] sm:$0xff]
    %v130 = vld [vmem:[%s0 + $0x350] sm:$0xff]
    %v131 = vld [vmem:[%s0 + $0x358] sm:$0xff]
    %v132 = vld [vmem:[%s0 + $0x360] sm:$0xff]
    %v133 = vld [vmem:[%s0 + $0x368] sm:$0xff]
    %v134 = vld [vmem:[%s0 + $0x370] sm:$0xff]
    %v135 = vld [vmem:[%s0 + $0x378] sm:$0xff]
    %v136 = vpack.c.bf16 %v31, %v24
    %v137 = vpack.c.bf16 %v32, %v25
    %v138 = vpack.c.bf16 %v33, %v26
    %v139 = vpack.c.bf16 %v34, %v27
    %v140 = vpack.c.bf16 %v35, %v28
    %v141 = vpack.c.bf16 %v36, %v29
    %v142 = vpack.c.bf16 %v37, %v30
    %v143 = vpack.c.bf16 %v45, %v38
    %v144 = vpack.c.bf16 %v46, %v39
    %v145 = vpack.c.bf16 %v47, %v40
    %v146 = vpack.c.bf16 %v48, %v41
    %v147 = vpack.c.bf16 %v49, %v42
    %v148 = vpack.c.bf16 %v50, %v43
    %v149 = vpack.c.bf16 %v51, %v44
    %v150 = vpack.c.bf16 %v59, %v52
    %v151 = vpack.c.bf16 %v60, %v53
    %v152 = vpack.c.bf16 %v61, %v54
    %v153 = vpack.c.bf16 %v62, %v55
    %v154 = vpack.c.bf16 %v63, %v56
    %v155 = vpack.c.bf16 %v64, %v57
    %v156 = vpack.c.bf16 %v65, %v58
    %v157 = vpack.c.bf16 %v73, %v66
    %v158 = vpack.c.bf16 %v74, %v67
    %v159 = vpack.c.bf16 %v75, %v68
    %v160 = vpack.c.bf16 %v76, %v69
    %v161 = vpack.c.bf16 %v77, %v70
    %v162 = vpack.c.bf16 %v78, %v71
    %v163 = vpack.c.bf16 %v79, %v72
    %v164 = vpack.c.bf16 %v87, %v80
    %v165 = vpack.c.bf16 %v88, %v81
    %v166 = vpack.c.bf16 %v89, %v82
    %v167 = vpack.c.bf16 %v90, %v83
    %v168 = vpack.c.bf16 %v91, %v84
    %v169 = vpack.c.bf16 %v92, %v85
    %v170 = vpack.c.bf16 %v93, %v86
    %v171 = vpack.c.bf16 %v101, %v94
    %v172 = vpack.c.bf16 %v102, %v95
    %v173 = vpack.c.bf16 %v103, %v96
    %v174 = vpack.c.bf16 %v104, %v97
    %v175 = vpack.c.bf16 %v105, %v98
    %v176 = vpack.c.bf16 %v106, %v99
    %v177 = vpack.c.bf16 %v107, %v100
    %v178 = vpack.c.bf16 %v115, %v108
    %v179 = vpack.c.bf16 %v116, %v109
    %v180 = vpack.c.bf16 %v117, %v110
    %v181 = vpack.c.bf16 %v118, %v111
    %v182 = vpack.c.bf16 %v119, %v112
    %v183 = vpack.c.bf16 %v120, %v113
    %v184 = vpack.c.bf16 %v121, %v114
    %v185 = vpack.c.bf16 %v129, %v122
    %v186 = vpack.c.bf16 %v130, %v123
    %v187 = vpack.c.bf16 %v131, %v124
    %v188 = vpack.c.bf16 %v132, %v125
    %v189 = vpack.c.bf16 %v133, %v126
    %v190 = vpack.c.bf16 %v134, %v127
    %v191 = vpack.c.bf16 %v135, %v128
    %v192 = vld [vmem:[%s1] sm:$0xff]
    %v193 = vld [vmem:[%s1 + $0x8] sm:$0xff]
    %v194 = vld [vmem:[%s1 + $0x10] sm:$0xff]
    %v195 = vld [vmem:[%s1 + $0x18] sm:$0xf]
    %v196 = vld [vmem:[%s1 + $0x1c] sm:$0xff]
    %v197 = vld [vmem:[%s1 + $0x24] sm:$0xff]
    %v198 = vld [vmem:[%s1 + $0x2c] sm:$0xff]
    %v199 = vld [vmem:[%s1 + $0x34] sm:$0xf]
    %v200 = vld [vmem:[%s1 + $0x38] sm:$0xff]
    %v201 = vld [vmem:[%s1 + $0x40] sm:$0xff]
    %v202 = vld [vmem:[%s1 + $0x48] sm:$0xff]
    %v203 = vld [vmem:[%s1 + $0x50] sm:$0xf]
    %v204 = vld [vmem:[%s1 + $0x54] sm:$0xff]
    %v205 = vld [vmem:[%s1 + $0x5c] sm:$0xff]
    %v206 = vld [vmem:[%s1 + $0x64] sm:$0xff]
    %v207 = vld [vmem:[%s1 + $0x6c] sm:$0xf]
    %v208 = vld [vmem:[%s1 + $0x70] sm:$0xff]
    %v209 = vld [vmem:[%s1 + $0x78] sm:$0xff]
    %v210 = vld [vmem:[%s1 + $0x80] sm:$0xff]
    %v211 = vld [vmem:[%s1 + $0x88] sm:$0xf]
    %v212 = vld [vmem:[%s1 + $0x8c] sm:$0xff]
    %v213 = vld [vmem:[%s1 + $0x94] sm:$0xff]
    %v214 = vld [vmem:[%s1 + $0x9c] sm:$0xff]
    %v215 = vld [vmem:[%s1 + $0xa4] sm:$0xf]
    %v216 = vld [vmem:[%s1 + $0xa8] sm:$0xff]
    %v217 = vld [vmem:[%s1 + $0xb0] sm:$0xff]
    %v218 = vld [vmem:[%s1 + $0xb8] sm:$0xff]
    %v219 = vld [vmem:[%s1 + $0xc0] sm:$0xf]
    %v220 = vld [vmem:[%s1 + $0xc4] sm:$0xff]
    %v221 = vld [vmem:[%s1 + $0xcc] sm:$0xff]
    %v222 = vld [vmem:[%s1 + $0xd4] sm:$0xff]
    %v223 = vld [vmem:[%s1 + $0xdc] sm:$0xf]
    %v224 = vld [vmem:[%s1 + $0xe0] sm:$0xff]
    %v225 = vld [vmem:[%s1 + $0xe8] sm:$0xff]
    %v226 = vld [vmem:[%s1 + $0xf0] sm:$0xff]
    %v227 = vld [vmem:[%s1 + $0xf8] sm:$0xf]
    %v228 = vld [vmem:[%s1 + $0xfc] sm:$0xff]
    %v229 = vld [vmem:[%s1 + $0x104] sm:$0xff]
    %v230 = vld [vmem:[%s1 + $0x10c] sm:$0xff]
    %v231 = vld [vmem:[%s1 + $0x114] sm:$0xf]
    %v232 = vld [vmem:[%s1 + $0x118] sm:$0xff]
    %v233 = vld [vmem:[%s1 + $0x120] sm:$0xff]
    %v234 = vld [vmem:[%s1 + $0x128] sm:$0xff]
    %v235 = vld [vmem:[%s1 + $0x130] sm:$0xf]
    %v236 = vld [vmem:[%s1 + $0x134] sm:$0xff]
    %v237 = vld [vmem:[%s1 + $0x13c] sm:$0xff]
    %v238 = vld [vmem:[%s1 + $0x144] sm:$0xff]
    %v239 = vld [vmem:[%s1 + $0x14c] sm:$0xf]
    %v240 = vld [vmem:[%s1 + $0x150] sm:$0xff]
    %v241 = vld [vmem:[%s1 + $0x158] sm:$0xff]
    %v242 = vld [vmem:[%s1 + $0x160] sm:$0xff]
    %v243 = vld [vmem:[%s1 + $0x168] sm:$0xf]
    %v244 = vld [vmem:[%s1 + $0x16c] sm:$0xff]
    %v245 = vld [vmem:[%s1 + $0x174] sm:$0xff]
    %v246 = vld [vmem:[%s1 + $0x17c] sm:$0xff]
    %v247 = vld [vmem:[%s1 + $0x184] sm:$0xf]
    %v248 = vld [vmem:[%s1 + $0x188] sm:$0xff]
    %v249 = vld [vmem:[%s1 + $0x190] sm:$0xff]
    %v250 = vld [vmem:[%s1 + $0x198] sm:$0xff]
    %v251 = vld [vmem:[%s1 + $0x1a0] sm:$0xf]
    %v252 = vld [vmem:[%s1 + $0x1a4] sm:$0xff]
    %v253 = vld [vmem:[%s1 + $0x1ac] sm:$0xff]
    %v254 = vld [vmem:[%s1 + $0x1b4] sm:$0xff]
    %v255 = vld [vmem:[%s1 + $0x1bc] sm:$0xf]
    %v256 = vld [vmem:[%s1 + $0x1c0] sm:$0xff]
    %v257 = vld [vmem:[%s1 + $0x1c8] sm:$0xff]
    %v258 = vld [vmem:[%s1 + $0x1d0] sm:$0xff]
    %v259 = vld [vmem:[%s1 + $0x1d8] sm:$0xf]
    %v260 = vld [vmem:[%s1 + $0x1dc] sm:$0xff]
    %v261 = vld [vmem:[%s1 + $0x1e4] sm:$0xff]
    %v262 = vld [vmem:[%s1 + $0x1ec] sm:$0xff]
    %v263 = vld [vmem:[%s1 + $0x1f4] sm:$0xf]
    %v264 = vld [vmem:[%s1 + $0x1f8] sm:$0xff]
    %v265 = vld [vmem:[%s1 + $0x200] sm:$0xff]
    %v266 = vld [vmem:[%s1 + $0x208] sm:$0xff]
    %v267 = vld [vmem:[%s1 + $0x210] sm:$0xf]
    %v268 = vld [vmem:[%s1 + $0x214] sm:$0xff]
    %v269 = vld [vmem:[%s1 + $0x21c] sm:$0xff]
    %v270 = vld [vmem:[%s1 + $0x224] sm:$0xff]
    %v271 = vld [vmem:[%s1 + $0x22c] sm:$0xf]
    %v272 = vld [vmem:[%s1 + $0x230] sm:$0xff]
    %v273 = vld [vmem:[%s1 + $0x238] sm:$0xff]
    %v274 = vld [vmem:[%s1 + $0x240] sm:$0xff]
    %v275 = vld [vmem:[%s1 + $0x248] sm:$0xf]
    %v276 = vld [vmem:[%s1 + $0x24c] sm:$0xff]
    %v277 = vld [vmem:[%s1 + $0x254] sm:$0xff]
    %v278 = vld [vmem:[%s1 + $0x25c] sm:$0xff]
    %v279 = vld [vmem:[%s1 + $0x264] sm:$0xf]
    %v280 = vld [vmem:[%s1 + $0x268] sm:$0xff]
    %v281 = vld [vmem:[%s1 + $0x270] sm:$0xff]
    %v282 = vld [vmem:[%s1 + $0x278] sm:$0xff]
    %v283 = vld [vmem:[%s1 + $0x280] sm:$0xf]
    %v284 = vld [vmem:[%s1 + $0x284] sm:$0xff]
    %v285 = vld [vmem:[%s1 + $0x28c] sm:$0xff]
    %v286 = vld [vmem:[%s1 + $0x294] sm:$0xff]
    %v287 = vld [vmem:[%s1 + $0x29c] sm:$0xf]
    %v288 = vld [vmem:[%s1 + $0x2a0] sm:$0xff]
    %v289 = vld [vmem:[%s1 + $0x2a8] sm:$0xff]
    %v290 = vld [vmem:[%s1 + $0x2b0] sm:$0xff]
    %v291 = vld [vmem:[%s1 + $0x2b8] sm:$0xf]
    %v292 = vld [vmem:[%s1 + $0x2bc] sm:$0xff]
    %v293 = vld [vmem:[%s1 + $0x2c4] sm:$0xff]
    %v294 = vld [vmem:[%s1 + $0x2cc] sm:$0xff]
    %v295 = vld [vmem:[%s1 + $0x2d4] sm:$0xf]
    %v296 = vld [vmem:[%s1 + $0x2d8] sm:$0xff]
    %v297 = vld [vmem:[%s1 + $0x2e0] sm:$0xff]
    %v298 = vld [vmem:[%s1 + $0x2e8] sm:$0xff]
    %v299 = vld [vmem:[%s1 + $0x2f0] sm:$0xf]
    %v300 = vld [vmem:[%s1 + $0x2f4] sm:$0xff]
    %v301 = vld [vmem:[%s1 + $0x2fc] sm:$0xff]
    %v302 = vld [vmem:[%s1 + $0x304] sm:$0xff]
    %v303 = vld [vmem:[%s1 + $0x30c] sm:$0xf]
    %v304 = vld [vmem:[%s1 + $0x310] sm:$0xff]
    %v305 = vld [vmem:[%s1 + $0x318] sm:$0xff]
    %v306 = vld [vmem:[%s1 + $0x320] sm:$0xff]
    %v307 = vld [vmem:[%s1 + $0x328] sm:$0xf]
    %v308 = vld [vmem:[%s1 + $0x32c] sm:$0xff]
    %v309 = vld [vmem:[%s1 + $0x334] sm:$0xff]
    %v310 = vld [vmem:[%s1 + $0x33c] sm:$0xff]
    %v311 = vld [vmem:[%s1 + $0x344] sm:$0xf]
    %v312 = vld [vmem:[%s1 + $0x348] sm:$0xff]
    %v313 = vld [vmem:[%s1 + $0x350] sm:$0xff]
    %v314 = vld [vmem:[%s1 + $0x358] sm:$0xff]
    %v315 = vld [vmem:[%s1 + $0x360] sm:$0xf]
    %v316 = vld [vmem:[%s1 + $0x364] sm:$0xff]
    %v317 = vld [vmem:[%s1 + $0x36c] sm:$0xff]
    %v318 = vld [vmem:[%s1 + $0x374] sm:$0xff]
    %v319 = vld [vmem:[%s1 + $0x37c] sm:$0xf]
    %v320 = vld [vmem:[%s1 + $0x380] sm:$0xff]
    %v321 = vld [vmem:[%s1 + $0x388] sm:$0xff]
    %v322 = vld [vmem:[%s1 + $0x390] sm:$0xff]
    %v323 = vld [vmem:[%s1 + $0x398] sm:$0xf]
    %v324 = vld [vmem:[%s1 + $0x39c] sm:$0xff]
    %v325 = vld [vmem:[%s1 + $0x3a4] sm:$0xff]
    %v326 = vld [vmem:[%s1 + $0x3ac] sm:$0xff]
    %v327 = vld [vmem:[%s1 + $0x3b4] sm:$0xf]
    %v328 = vld [vmem:[%s1 + $0x3b8] sm:$0xff]
    %v329 = vld [vmem:[%s1 + $0x3c0] sm:$0xff]
    %v330 = vld [vmem:[%s1 + $0x3c8] sm:$0xff]
    %v331 = vld [vmem:[%s1 + $0x3d0] sm:$0xf]
    %v332 = vld [vmem:[%s1 + $0x3d4] sm:$0xff]
    %v333 = vld [vmem:[%s1 + $0x3dc] sm:$0xff]
    %v334 = vld [vmem:[%s1 + $0x3e4] sm:$0xff]
    %v335 = vld [vmem:[%s1 + $0x3ec] sm:$0xf]
    %v336 = vld [vmem:[%s1 + $0x3f0] sm:$0xff]
    %v337 = vld [vmem:[%s1 + $0x3f8] sm:$0xff]
    %v338 = vld [vmem:[%s1 + $0x400] sm:$0xff]
    %v339 = vld [vmem:[%s1 + $0x408] sm:$0xf]
    %v340 = vld [vmem:[%s1 + $0x40c] sm:$0xff]
    %v341 = vld [vmem:[%s1 + $0x414] sm:$0xff]
    %v342 = vld [vmem:[%s1 + $0x41c] sm:$0xff]
    %v343 = vld [vmem:[%s1 + $0x424] sm:$0xf]
    %v344 = vld [vmem:[%s1 + $0x428] sm:$0xff]
    %v345 = vld [vmem:[%s1 + $0x430] sm:$0xff]
    %v346 = vld [vmem:[%s1 + $0x438] sm:$0xff]
    %v347 = vld [vmem:[%s1 + $0x440] sm:$0xf]
    %v348 = vld [vmem:[%s1 + $0x444] sm:$0xff]
    %v349 = vld [vmem:[%s1 + $0x44c] sm:$0xff]
    %v350 = vld [vmem:[%s1 + $0x454] sm:$0xff]
    %v351 = vld [vmem:[%s1 + $0x45c] sm:$0xf]
    %v352 = vld [vmem:[%s1 + $0x460] sm:$0xff]
    %v353 = vld [vmem:[%s1 + $0x468] sm:$0xff]
    %v354 = vld [vmem:[%s1 + $0x470] sm:$0xff]
    %v355 = vld [vmem:[%s1 + $0x478] sm:$0xf]
    %v356 = vld [vmem:[%s1 + $0x47c] sm:$0xff]
    %v357 = vld [vmem:[%s1 + $0x484] sm:$0xff]
    %v358 = vld [vmem:[%s1 + $0x48c] sm:$0xff]
    %v359 = vld [vmem:[%s1 + $0x494] sm:$0xf]
    %v360 = vld [vmem:[%s1 + $0x498] sm:$0xff]
    %v361 = vld [vmem:[%s1 + $0x4a0] sm:$0xff]
    %v362 = vld [vmem:[%s1 + $0x4a8] sm:$0xff]
    %v363 = vld [vmem:[%s1 + $0x4b0] sm:$0xf]
    %v364 = vld [vmem:[%s1 + $0x4b4] sm:$0xff]
    %v365 = vld [vmem:[%s1 + $0x4bc] sm:$0xff]
    %v366 = vld [vmem:[%s1 + $0x4c4] sm:$0xff]
    %v367 = vld [vmem:[%s1 + $0x4cc] sm:$0xf]
    %v368 = vld [vmem:[%s1 + $0x4d0] sm:$0xff]
    %v369 = vld [vmem:[%s1 + $0x4d8] sm:$0xff]
    %v370 = vld [vmem:[%s1 + $0x4e0] sm:$0xff]
    %v371 = vld [vmem:[%s1 + $0x4e8] sm:$0xf]
    %v372 = vld [vmem:[%s1 + $0x4ec] sm:$0xff]
    %v373 = vld [vmem:[%s1 + $0x4f4] sm:$0xff]
    %v374 = vld [vmem:[%s1 + $0x4fc] sm:$0xff]
    %v375 = vld [vmem:[%s1 + $0x504] sm:$0xf]
    %v376 = vld [vmem:[%s1 + $0x508] sm:$0xff]
    %v377 = vld [vmem:[%s1 + $0x510] sm:$0xff]
    %v378 = vld [vmem:[%s1 + $0x518] sm:$0xff]
    %v379 = vld [vmem:[%s1 + $0x520] sm:$0xf]
    %v380 = vld [vmem:[%s1 + $0x524] sm:$0xff]
    %v381 = vld [vmem:[%s1 + $0x52c] sm:$0xff]
    %v382 = vld [vmem:[%s1 + $0x534] sm:$0xff]
    %v383 = vld [vmem:[%s1 + $0x53c] sm:$0xf]
    %v384 = vld [vmem:[%s1 + $0x540] sm:$0xff]
    %v385 = vld [vmem:[%s1 + $0x548] sm:$0xff]
    %v386 = vld [vmem:[%s1 + $0x550] sm:$0xff]
    %v387 = vld [vmem:[%s1 + $0x558] sm:$0xf]
    %v388 = vld [vmem:[%s1 + $0x55c] sm:$0xff]
    %v389 = vld [vmem:[%s1 + $0x564] sm:$0xff]
    %v390 = vld [vmem:[%s1 + $0x56c] sm:$0xff]
    %v391 = vld [vmem:[%s1 + $0x574] sm:$0xf]
    %v392 = vld [vmem:[%s1 + $0x578] sm:$0xff]
    %v393 = vld [vmem:[%s1 + $0x580] sm:$0xff]
    %v394 = vld [vmem:[%s1 + $0x588] sm:$0xff]
    %v395 = vld [vmem:[%s1 + $0x590] sm:$0xf]
    %v396 = vld [vmem:[%s1 + $0x594] sm:$0xff]
    %v397 = vld [vmem:[%s1 + $0x59c] sm:$0xff]
    %v398 = vld [vmem:[%s1 + $0x5a4] sm:$0xff]
    %v399 = vld [vmem:[%s1 + $0x5ac] sm:$0xf]
    %v400 = vld [vmem:[%s1 + $0x5b0] sm:$0xff]
    %v401 = vld [vmem:[%s1 + $0x5b8] sm:$0xff]
    %v402 = vld [vmem:[%s1 + $0x5c0] sm:$0xff]
    %v403 = vld [vmem:[%s1 + $0x5c8] sm:$0xf]
    %v404 = vld [vmem:[%s1 + $0x5cc] sm:$0xff]
    %v405 = vld [vmem:[%s1 + $0x5d4] sm:$0xff]
    %v406 = vld [vmem:[%s1 + $0x5dc] sm:$0xff]
    %v407 = vld [vmem:[%s1 + $0x5e4] sm:$0xf]
    %v408 = vld [vmem:[%s1 + $0x5e8] sm:$0xff]
    %v409 = vld [vmem:[%s1 + $0x5f0] sm:$0xff]
    %v410 = vld [vmem:[%s1 + $0x5f8] sm:$0xff]
    %v411 = vld [vmem:[%s1 + $0x600] sm:$0xf]
    %v412 = vld [vmem:[%s1 + $0x604] sm:$0xff]
    %v413 = vld [vmem:[%s1 + $0x60c] sm:$0xff]
    %v414 = vld [vmem:[%s1 + $0x614] sm:$0xff]
    %v415 = vld [vmem:[%s1 + $0x61c] sm:$0xf]
    %v416 = vld [vmem:[%s1 + $0x620] sm:$0xff]
    %v417 = vld [vmem:[%s1 + $0x628] sm:$0xff]
    %v418 = vld [vmem:[%s1 + $0x630] sm:$0xff]
    %v419 = vld [vmem:[%s1 + $0x638] sm:$0xf]
    %v420 = vld [vmem:[%s1 + $0x63c] sm:$0xff]
    %v421 = vld [vmem:[%s1 + $0x644] sm:$0xff]
    %v422 = vld [vmem:[%s1 + $0x64c] sm:$0xff]
    %v423 = vld [vmem:[%s1 + $0x654] sm:$0xf]
    %v424 = vld [vmem:[%s1 + $0x658] sm:$0xff]
    %v425 = vld [vmem:[%s1 + $0x660] sm:$0xff]
    %v426 = vld [vmem:[%s1 + $0x668] sm:$0xff]
    %v427 = vld [vmem:[%s1 + $0x670] sm:$0xf]
    %v428 = vld [vmem:[%s1 + $0x674] sm:$0xff]
    %v429 = vld [vmem:[%s1 + $0x67c] sm:$0xff]
    %v430 = vld [vmem:[%s1 + $0x684] sm:$0xff]
    %v431 = vld [vmem:[%s1 + $0x68c] sm:$0xf]
    %v432 = vld [vmem:[%s1 + $0x690] sm:$0xff]
    %v433 = vld [vmem:[%s1 + $0x698] sm:$0xff]
    %v434 = vld [vmem:[%s1 + $0x6a0] sm:$0xff]
    %v435 = vld [vmem:[%s1 + $0x6a8] sm:$0xf]
    %v436 = vld [vmem:[%s1 + $0x6ac] sm:$0xff]
    %v437 = vld [vmem:[%s1 + $0x6b4] sm:$0xff]
    %v438 = vld [vmem:[%s1 + $0x6bc] sm:$0xff]
    %v439 = vld [vmem:[%s1 + $0x6c4] sm:$0xf]
    %v440 = vld [vmem:[%s1 + $0x6c8] sm:$0xff]
    %v441 = vld [vmem:[%s1 + $0x6d0] sm:$0xff]
    %v442 = vld [vmem:[%s1 + $0x6d8] sm:$0xff]
    %v443 = vld [vmem:[%s1 + $0x6e0] sm:$0xf]
    %v444 = vld [vmem:[%s1 + $0x6e4] sm:$0xff]
    %v445 = vld [vmem:[%s1 + $0x6ec] sm:$0xff]
    %v446 = vld [vmem:[%s1 + $0x6f4] sm:$0xff]
    %v447 = vld [vmem:[%s1 + $0x6fc] sm:$0xf]
    %v704 = vunpack.c.l.b16 %v192
    %v705 = vunpack.c.h.b16 %v192
    %v706 = vunpack.c.l.b16 %v193
    %v707 = vunpack.c.h.b16 %v193
    %v708 = vunpack.c.l.b16 %v194
    %v709 = vunpack.c.h.b16 %v194
    %v710 = vunpack.c.l.b16 %v195
    %v711 = vunpack.c.l.b16 %v196
    %v712 = vunpack.c.h.b16 %v196
    %v713 = vunpack.c.l.b16 %v197
    %v714 = vunpack.c.h.b16 %v197
    %v715 = vunpack.c.l.b16 %v198
    %v716 = vunpack.c.h.b16 %v198
    %v717 = vunpack.c.l.b16 %v199
    %v718 = vunpack.c.l.b16 %v200
    %v719 = vunpack.c.h.b16 %v200
    %v720 = vunpack.c.l.b16 %v201
    %v721 = vunpack.c.h.b16 %v201
    %v722 = vunpack.c.l.b16 %v202
    %v723 = vunpack.c.h.b16 %v202
    %v724 = vunpack.c.l.b16 %v203
    %v725 = vunpack.c.l.b16 %v204
    %v726 = vunpack.c.h.b16 %v204
    %v727 = vunpack.c.l.b16 %v205
    %v728 = vunpack.c.h.b16 %v205
    %v729 = vunpack.c.l.b16 %v206
    %v730 = vunpack.c.h.b16 %v206
    %v731 = vunpack.c.l.b16 %v207
    %v732 = vunpack.c.l.b16 %v208
    %v733 = vunpack.c.h.b16 %v208
    %v734 = vunpack.c.l.b16 %v209
    %v735 = vunpack.c.h.b16 %v209
    %v736 = vunpack.c.l.b16 %v210
    %v737 = vunpack.c.h.b16 %v210
    %v738 = vunpack.c.l.b16 %v211
    %v739 = vunpack.c.l.b16 %v212
    %v740 = vunpack.c.h.b16 %v212
    %v741 = vunpack.c.l.b16 %v213
    %v742 = vunpack.c.h.b16 %v213
    %v743 = vunpack.c.l.b16 %v214
    %v744 = vunpack.c.h.b16 %v214
    %v745 = vunpack.c.l.b16 %v215
    %v746 = vunpack.c.l.b16 %v216
    %v747 = vunpack.c.h.b16 %v216
    %v748 = vunpack.c.l.b16 %v217
    %v749 = vunpack.c.h.b16 %v217
    %v750 = vunpack.c.l.b16 %v218
    %v751 = vunpack.c.h.b16 %v218
    %v752 = vunpack.c.l.b16 %v219
    %v753 = vunpack.c.l.b16 %v220
    %v754 = vunpack.c.h.b16 %v220
    %v755 = vunpack.c.l.b16 %v221
    %v756 = vunpack.c.h.b16 %v221
    %v757 = vunpack.c.l.b16 %v222
    %v758 = vunpack.c.h.b16 %v222
    %v759 = vunpack.c.l.b16 %v223
    %v760 = vunpack.c.l.b16 %v224
    %v761 = vunpack.c.h.b16 %v224
    %v762 = vunpack.c.l.b16 %v225
    %v763 = vunpack.c.h.b16 %v225
    %v764 = vunpack.c.l.b16 %v226
    %v765 = vunpack.c.h.b16 %v226
    %v766 = vunpack.c.l.b16 %v227
    %v767 = vunpack.c.l.b16 %v228
    %v768 = vunpack.c.h.b16 %v228
    %v769 = vunpack.c.l.b16 %v229
    %v770 = vunpack.c.h.b16 %v229
    %v771 = vunpack.c.l.b16 %v230
    %v772 = vunpack.c.h.b16 %v230
    %v773 = vunpack.c.l.b16 %v231
    %v774 = vunpack.c.l.b16 %v232
    %v775 = vunpack.c.h.b16 %v232
    %v776 = vunpack.c.l.b16 %v233
    %v777 = vunpack.c.h.b16 %v233
    %v778 = vunpack.c.l.b16 %v234
    %v779 = vunpack.c.h.b16 %v234
    %v780 = vunpack.c.l.b16 %v235
    %v781 = vunpack.c.l.b16 %v236
    %v782 = vunpack.c.h.b16 %v236
    %v783 = vunpack.c.l.b16 %v237
    %v784 = vunpack.c.h.b16 %v237
    %v785 = vunpack.c.l.b16 %v238
    %v786 = vunpack.c.h.b16 %v238
    %v787 = vunpack.c.l.b16 %v239
    %v788 = vunpack.c.l.b16 %v240
    %v789 = vunpack.c.h.b16 %v240
    %v790 = vunpack.c.l.b16 %v241
    %v791 = vunpack.c.h.b16 %v241
    %v792 = vunpack.c.l.b16 %v242
    %v793 = vunpack.c.h.b16 %v242
    %v794 = vunpack.c.l.b16 %v243
    %v795 = vunpack.c.l.b16 %v244
    %v796 = vunpack.c.h.b16 %v244
    %v797 = vunpack.c.l.b16 %v245
    %v798 = vunpack.c.h.b16 %v245
    %v799 = vunpack.c.l.b16 %v246
    %v800 = vunpack.c.h.b16 %v246
    %v801 = vunpack.c.l.b16 %v247
    %v802 = vunpack.c.l.b16 %v248
    %v803 = vunpack.c.h.b16 %v248
    %v804 = vunpack.c.l.b16 %v249
    %v805 = vunpack.c.h.b16 %v249
    %v806 = vunpack.c.l.b16 %v250
    %v807 = vunpack.c.h.b16 %v250
    %v808 = vunpack.c.l.b16 %v251
    %v809 = vunpack.c.l.b16 %v252
    %v810 = vunpack.c.h.b16 %v252
    %v811 = vunpack.c.l.b16 %v253
    %v812 = vunpack.c.h.b16 %v253
    %v813 = vunpack.c.l.b16 %v254
    %v814 = vunpack.c.h.b16 %v254
    %v815 = vunpack.c.l.b16 %v255
    %v816 = vunpack.c.l.b16 %v256
    %v817 = vunpack.c.h.b16 %v256
    %v818 = vunpack.c.l.b16 %v257
    %v819 = vunpack.c.h.b16 %v257
    %v820 = vunpack.c.l.b16 %v258
    %v821 = vunpack.c.h.b16 %v258
    %v822 = vunpack.c.l.b16 %v259
    %v823 = vunpack.c.l.b16 %v260
    %v824 = vunpack.c.h.b16 %v260
    %v825 = vunpack.c.l.b16 %v261
    %v826 = vunpack.c.h.b16 %v261
    %v827 = vunpack.c.l.b16 %v262
    %v828 = vunpack.c.h.b16 %v262
    %v829 = vunpack.c.l.b16 %v263
    %v830 = vunpack.c.l.b16 %v264
    %v831 = vunpack.c.h.b16 %v264
    %v832 = vunpack.c.l.b16 %v265
    %v833 = vunpack.c.h.b16 %v265
    %v834 = vunpack.c.l.b16 %v266
    %v835 = vunpack.c.h.b16 %v266
    %v836 = vunpack.c.l.b16 %v267
    %v837 = vunpack.c.l.b16 %v268
    %v838 = vunpack.c.h.b16 %v268
    %v839 = vunpack.c.l.b16 %v269
    %v840 = vunpack.c.h.b16 %v269
    %v841 = vunpack.c.l.b16 %v270
    %v842 = vunpack.c.h.b16 %v270
    %v843 = vunpack.c.l.b16 %v271
    %v844 = vunpack.c.l.b16 %v272
    %v845 = vunpack.c.h.b16 %v272
    %v846 = vunpack.c.l.b16 %v273
    %v847 = vunpack.c.h.b16 %v273
    %v848 = vunpack.c.l.b16 %v274
    %v849 = vunpack.c.h.b16 %v274
    %v850 = vunpack.c.l.b16 %v275
    %v851 = vunpack.c.l.b16 %v276
    %v852 = vunpack.c.h.b16 %v276
    %v853 = vunpack.c.l.b16 %v277
    %v854 = vunpack.c.h.b16 %v277
    %v855 = vunpack.c.l.b16 %v278
    %v856 = vunpack.c.h.b16 %v278
    %v857 = vunpack.c.l.b16 %v279
    %v858 = vunpack.c.l.b16 %v280
    %v859 = vunpack.c.h.b16 %v280
    %v860 = vunpack.c.l.b16 %v281
    %v861 = vunpack.c.h.b16 %v281
    %v862 = vunpack.c.l.b16 %v282
    %v863 = vunpack.c.h.b16 %v282
    %v864 = vunpack.c.l.b16 %v283
    %v865 = vunpack.c.l.b16 %v284
    %v866 = vunpack.c.h.b16 %v284
    %v867 = vunpack.c.l.b16 %v285
    %v868 = vunpack.c.h.b16 %v285
    %v869 = vunpack.c.l.b16 %v286
    %v870 = vunpack.c.h.b16 %v286
    %v871 = vunpack.c.l.b16 %v287
    %v872 = vunpack.c.l.b16 %v288
    %v873 = vunpack.c.h.b16 %v288
    %v874 = vunpack.c.l.b16 %v289
    %v875 = vunpack.c.h.b16 %v289
    %v876 = vunpack.c.l.b16 %v290
    %v877 = vunpack.c.h.b16 %v290
    %v878 = vunpack.c.l.b16 %v291
    %v879 = vunpack.c.l.b16 %v292
    %v880 = vunpack.c.h.b16 %v292
    %v881 = vunpack.c.l.b16 %v293
    %v882 = vunpack.c.h.b16 %v293
    %v883 = vunpack.c.l.b16 %v294
    %v884 = vunpack.c.h.b16 %v294
    %v885 = vunpack.c.l.b16 %v295
    %v886 = vunpack.c.l.b16 %v296
    %v887 = vunpack.c.h.b16 %v296
    %v888 = vunpack.c.l.b16 %v297
    %v889 = vunpack.c.h.b16 %v297
    %v890 = vunpack.c.l.b16 %v298
    %v891 = vunpack.c.h.b16 %v298
    %v892 = vunpack.c.l.b16 %v299
    %v893 = vunpack.c.l.b16 %v300
    %v894 = vunpack.c.h.b16 %v300
    %v895 = vunpack.c.l.b16 %v301
    %v896 = vunpack.c.h.b16 %v301
    %v897 = vunpack.c.l.b16 %v302
    %v898 = vunpack.c.h.b16 %v302
    %v899 = vunpack.c.l.b16 %v303
    %v900 = vunpack.c.l.b16 %v304
    %v901 = vunpack.c.h.b16 %v304
    %v902 = vunpack.c.l.b16 %v305
    %v903 = vunpack.c.h.b16 %v305
    %v904 = vunpack.c.l.b16 %v306
    %v905 = vunpack.c.h.b16 %v306
    %v906 = vunpack.c.l.b16 %v307
    %v907 = vunpack.c.l.b16 %v308
    %v908 = vunpack.c.h.b16 %v308
    %v909 = vunpack.c.l.b16 %v309
    %v910 = vunpack.c.h.b16 %v309
    %v911 = vunpack.c.l.b16 %v310
    %v912 = vunpack.c.h.b16 %v310
    %v913 = vunpack.c.l.b16 %v311
    %v914 = vunpack.c.l.b16 %v312
    %v915 = vunpack.c.h.b16 %v312
    %v916 = vunpack.c.l.b16 %v313
    %v917 = vunpack.c.h.b16 %v313
    %v918 = vunpack.c.l.b16 %v314
    %v919 = vunpack.c.h.b16 %v314
    %v920 = vunpack.c.l.b16 %v315
    %v921 = vunpack.c.l.b16 %v316
    %v922 = vunpack.c.h.b16 %v316
    %v923 = vunpack.c.l.b16 %v317
    %v924 = vunpack.c.h.b16 %v317
    %v925 = vunpack.c.l.b16 %v318
    %v926 = vunpack.c.h.b16 %v318
    %v927 = vunpack.c.l.b16 %v319
    %v928 = vunpack.c.l.b16 %v320
    %v929 = vunpack.c.h.b16 %v320
    %v930 = vunpack.c.l.b16 %v321
    %v931 = vunpack.c.h.b16 %v321
    %v932 = vunpack.c.l.b16 %v322
    %v933 = vunpack.c.h.b16 %v322
    %v934 = vunpack.c.l.b16 %v323
    %v935 = vunpack.c.l.b16 %v324
    %v936 = vunpack.c.h.b16 %v324
    %v937 = vunpack.c.l.b16 %v325
    %v938 = vunpack.c.h.b16 %v325
    %v939 = vunpack.c.l.b16 %v326
    %v940 = vunpack.c.h.b16 %v326
    %v941 = vunpack.c.l.b16 %v327
    %v942 = vunpack.c.l.b16 %v328
    %v943 = vunpack.c.h.b16 %v328
    %v944 = vunpack.c.l.b16 %v329
    %v945 = vunpack.c.h.b16 %v329
    %v946 = vunpack.c.l.b16 %v330
    %v947 = vunpack.c.h.b16 %v330
    %v948 = vunpack.c.l.b16 %v331
    %v949 = vunpack.c.l.b16 %v332
    %v950 = vunpack.c.h.b16 %v332
    %v951 = vunpack.c.l.b16 %v333
    %v952 = vunpack.c.h.b16 %v333
    %v953 = vunpack.c.l.b16 %v334
    %v954 = vunpack.c.h.b16 %v334
    %v955 = vunpack.c.l.b16 %v335
    %v956 = vunpack.c.l.b16 %v336
    %v957 = vunpack.c.h.b16 %v336
    %v958 = vunpack.c.l.b16 %v337
    %v959 = vunpack.c.h.b16 %v337
    %v960 = vunpack.c.l.b16 %v338
    %v961 = vunpack.c.h.b16 %v338
    %v962 = vunpack.c.l.b16 %v339
    %v963 = vunpack.c.l.b16 %v340
    %v964 = vunpack.c.h.b16 %v340
    %v965 = vunpack.c.l.b16 %v341
    %v966 = vunpack.c.h.b16 %v341
    %v967 = vunpack.c.l.b16 %v342
    %v968 = vunpack.c.h.b16 %v342
    %v969 = vunpack.c.l.b16 %v343
    %v970 = vunpack.c.l.b16 %v344
    %v971 = vunpack.c.h.b16 %v344
    %v972 = vunpack.c.l.b16 %v345
    %v973 = vunpack.c.h.b16 %v345
    %v974 = vunpack.c.l.b16 %v346
    %v975 = vunpack.c.h.b16 %v346
    %v976 = vunpack.c.l.b16 %v347
    %v977 = vunpack.c.l.b16 %v348
    %v978 = vunpack.c.h.b16 %v348
    %v979 = vunpack.c.l.b16 %v349
    %v980 = vunpack.c.h.b16 %v349
    %v981 = vunpack.c.l.b16 %v350
    %v982 = vunpack.c.h.b16 %v350
    %v983 = vunpack.c.l.b16 %v351
    %v984 = vunpack.c.l.b16 %v352
    %v985 = vunpack.c.h.b16 %v352
    %v986 = vunpack.c.l.b16 %v353
    %v987 = vunpack.c.h.b16 %v353
    %v988 = vunpack.c.l.b16 %v354
    %v989 = vunpack.c.h.b16 %v354
    %v990 = vunpack.c.l.b16 %v355
    %v991 = vunpack.c.l.b16 %v356
    %v992 = vunpack.c.h.b16 %v356
    %v993 = vunpack.c.l.b16 %v357
    %v994 = vunpack.c.h.b16 %v357
    %v995 = vunpack.c.l.b16 %v358
    %v996 = vunpack.c.h.b16 %v358
    %v997 = vunpack.c.l.b16 %v359
    %v998 = vunpack.c.l.b16 %v360
    %v999 = vunpack.c.h.b16 %v360
    %v1000 = vunpack.c.l.b16 %v361
    %v1001 = vunpack.c.h.b16 %v361
    %v1002 = vunpack.c.l.b16 %v362
    %v1003 = vunpack.c.h.b16 %v362
    %v1004 = vunpack.c.l.b16 %v363
    %v1005 = vunpack.c.l.b16 %v364
    %v1006 = vunpack.c.h.b16 %v364
    %v1007 = vunpack.c.l.b16 %v365
    %v1008 = vunpack.c.h.b16 %v365
    %v1009 = vunpack.c.l.b16 %v366
    %v1010 = vunpack.c.h.b16 %v366
    %v1011 = vunpack.c.l.b16 %v367
    %v1012 = vunpack.c.l.b16 %v368
    %v1013 = vunpack.c.h.b16 %v368
    %v1014 = vunpack.c.l.b16 %v369
    %v1015 = vunpack.c.h.b16 %v369
    %v1016 = vunpack.c.l.b16 %v370
    %v1017 = vunpack.c.h.b16 %v370
    %v1018 = vunpack.c.l.b16 %v371
    %v1019 = vunpack.c.l.b16 %v372
    %v1020 = vunpack.c.h.b16 %v372
    %v1021 = vunpack.c.l.b16 %v373
    %v1022 = vunpack.c.h.b16 %v373
    %v1023 = vunpack.c.l.b16 %v374
    %v1024 = vunpack.c.h.b16 %v374
    %v1025 = vunpack.c.l.b16 %v375
    %v1026 = vunpack.c.l.b16 %v376
    %v1027 = vunpack.c.h.b16 %v376
    %v1028 = vunpack.c.l.b16 %v377
    %v1029 = vunpack.c.h.b16 %v377
    %v1030 = vunpack.c.l.b16 %v378
    %v1031 = vunpack.c.h.b16 %v378
    %v1032 = vunpack.c.l.b16 %v379
    %v1033 = vunpack.c.l.b16 %v380
    %v1034 = vunpack.c.h.b16 %v380
    %v1035 = vunpack.c.l.b16 %v381
    %v1036 = vunpack.c.h.b16 %v381
    %v1037 = vunpack.c.l.b16 %v382
    %v1038 = vunpack.c.h.b16 %v382
    %v1039 = vunpack.c.l.b16 %v383
    %v1040 = vunpack.c.l.b16 %v384
    %v1041 = vunpack.c.h.b16 %v384
    %v1042 = vunpack.c.l.b16 %v385
    %v1043 = vunpack.c.h.b16 %v385
    %v1044 = vunpack.c.l.b16 %v386
    %v1045 = vunpack.c.h.b16 %v386
    %v1046 = vunpack.c.l.b16 %v387
    %v1047 = vunpack.c.l.b16 %v388
    %v1048 = vunpack.c.h.b16 %v388
    %v1049 = vunpack.c.l.b16 %v389
    %v1050 = vunpack.c.h.b16 %v389
    %v1051 = vunpack.c.l.b16 %v390
    %v1052 = vunpack.c.h.b16 %v390
    %v1053 = vunpack.c.l.b16 %v391
    %v1054 = vunpack.c.l.b16 %v392
    %v1055 = vunpack.c.h.b16 %v392
    %v1056 = vunpack.c.l.b16 %v393
    %v1057 = vunpack.c.h.b16 %v393
    %v1058 = vunpack.c.l.b16 %v394
    %v1059 = vunpack.c.h.b16 %v394
    %v1060 = vunpack.c.l.b16 %v395
    %v1061 = vunpack.c.l.b16 %v396
    %v1062 = vunpack.c.h.b16 %v396
    %v1063 = vunpack.c.l.b16 %v397
    %v1064 = vunpack.c.h.b16 %v397
    %v1065 = vunpack.c.l.b16 %v398
    %v1066 = vunpack.c.h.b16 %v398
    %v1067 = vunpack.c.l.b16 %v399
    %v1068 = vunpack.c.l.b16 %v400
    %v1069 = vunpack.c.h.b16 %v400
    %v1070 = vunpack.c.l.b16 %v401
    %v1071 = vunpack.c.h.b16 %v401
    %v1072 = vunpack.c.l.b16 %v402
    %v1073 = vunpack.c.h.b16 %v402
    %v1074 = vunpack.c.l.b16 %v403
    %v1075 = vunpack.c.l.b16 %v404
    %v1076 = vunpack.c.h.b16 %v404
    %v1077 = vunpack.c.l.b16 %v405
    %v1078 = vunpack.c.h.b16 %v405
    %v1079 = vunpack.c.l.b16 %v406
    %v1080 = vunpack.c.h.b16 %v406
    %v1081 = vunpack.c.l.b16 %v407
    %v1082 = vunpack.c.l.b16 %v408
    %v1083 = vunpack.c.h.b16 %v408
    %v1084 = vunpack.c.l.b16 %v409
    %v1085 = vunpack.c.h.b16 %v409
    %v1086 = vunpack.c.l.b16 %v410
    %v1087 = vunpack.c.h.b16 %v410
    %v1088 = vunpack.c.l.b16 %v411
    %v1089 = vunpack.c.l.b16 %v412
    %v1090 = vunpack.c.h.b16 %v412
    %v1091 = vunpack.c.l.b16 %v413
    %v1092 = vunpack.c.h.b16 %v413
    %v1093 = vunpack.c.l.b16 %v414
    %v1094 = vunpack.c.h.b16 %v414
    %v1095 = vunpack.c.l.b16 %v415
    %v1096 = vunpack.c.l.b16 %v416
    %v1097 = vunpack.c.h.b16 %v416
    %v1098 = vunpack.c.l.b16 %v417
    %v1099 = vunpack.c.h.b16 %v417
    %v1100 = vunpack.c.l.b16 %v418
    %v1101 = vunpack.c.h.b16 %v418
    %v1102 = vunpack.c.l.b16 %v419
    %v1103 = vunpack.c.l.b16 %v420
    %v1104 = vunpack.c.h.b16 %v420
    %v1105 = vunpack.c.l.b16 %v421
    %v1106 = vunpack.c.h.b16 %v421
    %v1107 = vunpack.c.l.b16 %v422
    %v1108 = vunpack.c.h.b16 %v422
    %v1109 = vunpack.c.l.b16 %v423
    %v1110 = vunpack.c.l.b16 %v424
    %v1111 = vunpack.c.h.b16 %v424
    %v1112 = vunpack.c.l.b16 %v425
    %v1113 = vunpack.c.h.b16 %v425
    %v1114 = vunpack.c.l.b16 %v426
    %v1115 = vunpack.c.h.b16 %v426
    %v1116 = vunpack.c.l.b16 %v427
    %v1117 = vunpack.c.l.b16 %v428
    %v1118 = vunpack.c.h.b16 %v428
    %v1119 = vunpack.c.l.b16 %v429
    %v1120 = vunpack.c.h.b16 %v429
    %v1121 = vunpack.c.l.b16 %v430
    %v1122 = vunpack.c.h.b16 %v430
    %v1123 = vunpack.c.l.b16 %v431
    %v1124 = vunpack.c.l.b16 %v432
    %v1125 = vunpack.c.h.b16 %v432
    %v1126 = vunpack.c.l.b16 %v433
    %v1127 = vunpack.c.h.b16 %v433
    %v1128 = vunpack.c.l.b16 %v434
    %v1129 = vunpack.c.h.b16 %v434
    %v1130 = vunpack.c.l.b16 %v435
    %v1131 = vunpack.c.l.b16 %v436
    %v1132 = vunpack.c.h.b16 %v436
    %v1133 = vunpack.c.l.b16 %v437
    %v1134 = vunpack.c.h.b16 %v437
    %v1135 = vunpack.c.l.b16 %v438
    %v1136 = vunpack.c.h.b16 %v438
    %v1137 = vunpack.c.l.b16 %v439
    %v1138 = vunpack.c.l.b16 %v440
    %v1139 = vunpack.c.h.b16 %v440
    %v1140 = vunpack.c.l.b16 %v441
    %v1141 = vunpack.c.h.b16 %v441
    %v1142 = vunpack.c.l.b16 %v442
    %v1143 = vunpack.c.h.b16 %v442
    %v1144 = vunpack.c.l.b16 %v443
    %v1145 = vunpack.c.l.b16 %v444
    %v1146 = vunpack.c.h.b16 %v444
    %v1147 = vunpack.c.l.b16 %v445
    %v1148 = vunpack.c.h.b16 %v445
    %v1149 = vunpack.c.l.b16 %v446
    %v1150 = vunpack.c.h.b16 %v446
    %v1151 = vunpack.c.l.b16 %v447
    %v1152 = vpack.c.b16 %v711, %v704
    %v1153 = vpack.c.b16 %v712, %v705
    %v1154 = vpack.c.b16 %v713, %v706
    %v1155 = vpack.c.b16 %v714, %v707
    %v1156 = vpack.c.b16 %v715, %v708
    %v1157 = vpack.c.b16 %v716, %v709
    %v1158 = vpack.c.b16 %v717, %v710
    %v1159 = vpack.c.b16 %v725, %v718
    %v1160 = vpack.c.b16 %v726, %v719
    %v1161 = vpack.c.b16 %v727, %v720
    %v1162 = vpack.c.b16 %v728, %v721
    %v1163 = vpack.c.b16 %v729, %v722
    %v1164 = vpack.c.b16 %v730, %v723
    %v1165 = vpack.c.b16 %v731, %v724
    %v1166 = vpack.c.b16 %v739, %v732
    %v1167 = vpack.c.b16 %v740, %v733
    %v1168 = vpack.c.b16 %v741, %v734
    %v1169 = vpack.c.b16 %v742, %v735
    %v1170 = vpack.c.b16 %v743, %v736
    %v1171 = vpack.c.b16 %v744, %v737
    %v1172 = vpack.c.b16 %v745, %v738
    %v1173 = vpack.c.b16 %v753, %v746
    %v1174 = vpack.c.b16 %v754, %v747
    %v1175 = vpack.c.b16 %v755, %v748
    %v1176 = vpack.c.b16 %v756, %v749
    %v1177 = vpack.c.b16 %v757, %v750
    %v1178 = vpack.c.b16 %v758, %v751
    %v1179 = vpack.c.b16 %v759, %v752
    %v1180 = vpack.c.b16 %v767, %v760
    %v1181 = vpack.c.b16 %v768, %v761
    %v1182 = vpack.c.b16 %v769, %v762
    %v1183 = vpack.c.b16 %v770, %v763
    %v1184 = vpack.c.b16 %v771, %v764
    %v1185 = vpack.c.b16 %v772, %v765
    %v1186 = vpack.c.b16 %v773, %v766
    %v1187 = vpack.c.b16 %v781, %v774
    %v1188 = vpack.c.b16 %v782, %v775
    %v1189 = vpack.c.b16 %v783, %v776
    %v1190 = vpack.c.b16 %v784, %v777
    %v1191 = vpack.c.b16 %v785, %v778
    %v1192 = vpack.c.b16 %v786, %v779
    %v1193 = vpack.c.b16 %v787, %v780
    %v1194 = vpack.c.b16 %v795, %v788
    %v1195 = vpack.c.b16 %v796, %v789
    %v1196 = vpack.c.b16 %v797, %v790
    %v1197 = vpack.c.b16 %v798, %v791
    %v1198 = vpack.c.b16 %v799, %v792
    %v1199 = vpack.c.b16 %v800, %v793
    %v1200 = vpack.c.b16 %v801, %v794
    %v1201 = vpack.c.b16 %v809, %v802
    %v1202 = vpack.c.b16 %v810, %v803
    %v1203 = vpack.c.b16 %v811, %v804
    %v1204 = vpack.c.b16 %v812, %v805
    %v1205 = vpack.c.b16 %v813, %v806
    %v1206 = vpack.c.b16 %v814, %v807
    %v1207 = vpack.c.b16 %v815, %v808
    %v1208 = vpack.c.b16 %v823, %v816
    %v1209 = vpack.c.b16 %v824, %v817
    %v1210 = vpack.c.b16 %v825, %v818
    %v1211 = vpack.c.b16 %v826, %v819
    %v1212 = vpack.c.b16 %v827, %v820
    %v1213 = vpack.c.b16 %v828, %v821
    %v1214 = vpack.c.b16 %v829, %v822
    %v1215 = vpack.c.b16 %v837, %v830
    %v1216 = vpack.c.b16 %v838, %v831
    %v1217 = vpack.c.b16 %v839, %v832
    %v1218 = vpack.c.b16 %v840, %v833
    %v1219 = vpack.c.b16 %v841, %v834
    %v1220 = vpack.c.b16 %v842, %v835
    %v1221 = vpack.c.b16 %v843, %v836
    %v1222 = vpack.c.b16 %v851, %v844
    %v1223 = vpack.c.b16 %v852, %v845
    %v1224 = vpack.c.b16 %v853, %v846
    %v1225 = vpack.c.b16 %v854, %v847
    %v1226 = vpack.c.b16 %v855, %v848
    %v1227 = vpack.c.b16 %v856, %v849
    %v1228 = vpack.c.b16 %v857, %v850
    %v1229 = vpack.c.b16 %v865, %v858
    %v1230 = vpack.c.b16 %v866, %v859
    %v1231 = vpack.c.b16 %v867, %v860
    %v1232 = vpack.c.b16 %v868, %v861
    %v1233 = vpack.c.b16 %v869, %v862
    %v1234 = vpack.c.b16 %v870, %v863
    %v1235 = vpack.c.b16 %v871, %v864
    %v1236 = vpack.c.b16 %v879, %v872
    %v1237 = vpack.c.b16 %v880, %v873
    %v1238 = vpack.c.b16 %v881, %v874
    %v1239 = vpack.c.b16 %v882, %v875
    %v1240 = vpack.c.b16 %v883, %v876
    %v1241 = vpack.c.b16 %v884, %v877
    %v1242 = vpack.c.b16 %v885, %v878
    %v1243 = vpack.c.b16 %v893, %v886
    %v1244 = vpack.c.b16 %v894, %v887
    %v1245 = vpack.c.b16 %v895, %v888
    %v1246 = vpack.c.b16 %v896, %v889
    %v1247 = vpack.c.b16 %v897, %v890
    %v1248 = vpack.c.b16 %v898, %v891
    %v1249 = vpack.c.b16 %v899, %v892
    %v1250 = vpack.c.b16 %v907, %v900
    %v1251 = vpack.c.b16 %v908, %v901
    %v1252 = vpack.c.b16 %v909, %v902
    %v1253 = vpack.c.b16 %v910, %v903
    %v1254 = vpack.c.b16 %v911, %v904
    %v1255 = vpack.c.b16 %v912, %v905
    %v1256 = vpack.c.b16 %v913, %v906
    %v1257 = vpack.c.b16 %v921, %v914
    %v1258 = vpack.c.b16 %v922, %v915
    %v1259 = vpack.c.b16 %v923, %v916
    %v1260 = vpack.c.b16 %v924, %v917
    %v1261 = vpack.c.b16 %v925, %v918
    %v1262 = vpack.c.b16 %v926, %v919
    %v1263 = vpack.c.b16 %v927, %v920
    %v1264 = vpack.c.b16 %v935, %v928
    %v1265 = vpack.c.b16 %v936, %v929
    %v1266 = vpack.c.b16 %v937, %v930
    %v1267 = vpack.c.b16 %v938, %v931
    %v1268 = vpack.c.b16 %v939, %v932
    %v1269 = vpack.c.b16 %v940, %v933
    %v1270 = vpack.c.b16 %v941, %v934
    %v1271 = vpack.c.b16 %v949, %v942
    %v1272 = vpack.c.b16 %v950, %v943
    %v1273 = vpack.c.b16 %v951, %v944
    %v1274 = vpack.c.b16 %v952, %v945
    %v1275 = vpack.c.b16 %v953, %v946
    %v1276 = vpack.c.b16 %v954, %v947
    %v1277 = vpack.c.b16 %v955, %v948
    %v1278 = vpack.c.b16 %v963, %v956
    %v1279 = vpack.c.b16 %v964, %v957
    %v1280 = vpack.c.b16 %v965, %v958
    %v1281 = vpack.c.b16 %v966, %v959
    %v1282 = vpack.c.b16 %v967, %v960
    %v1283 = vpack.c.b16 %v968, %v961
    %v1284 = vpack.c.b16 %v969, %v962
    %v1285 = vpack.c.b16 %v977, %v970
    %v1286 = vpack.c.b16 %v978, %v971
    %v1287 = vpack.c.b16 %v979, %v972
    %v1288 = vpack.c.b16 %v980, %v973
    %v1289 = vpack.c.b16 %v981, %v974
    %v1290 = vpack.c.b16 %v982, %v975
    %v1291 = vpack.c.b16 %v983, %v976
    %v1292 = vpack.c.b16 %v991, %v984
    %v1293 = vpack.c.b16 %v992, %v985
    %v1294 = vpack.c.b16 %v993, %v986
    %v1295 = vpack.c.b16 %v994, %v987
    %v1296 = vpack.c.b16 %v995, %v988
    %v1297 = vpack.c.b16 %v996, %v989
    %v1298 = vpack.c.b16 %v997, %v990
    %v1299 = vpack.c.b16 %v1005, %v998
    %v1300 = vpack.c.b16 %v1006, %v999
    %v1301 = vpack.c.b16 %v1007, %v1000
    %v1302 = vpack.c.b16 %v1008, %v1001
    %v1303 = vpack.c.b16 %v1009, %v1002
    %v1304 = vpack.c.b16 %v1010, %v1003
    %v1305 = vpack.c.b16 %v1011, %v1004
    %v1306 = vpack.c.b16 %v1019, %v1012
    %v1307 = vpack.c.b16 %v1020, %v1013
    %v1308 = vpack.c.b16 %v1021, %v1014
    %v1309 = vpack.c.b16 %v1022, %v1015
    %v1310 = vpack.c.b16 %v1023, %v1016
    %v1311 = vpack.c.b16 %v1024, %v1017
    %v1312 = vpack.c.b16 %v1025, %v1018
    %v1313 = vpack.c.b16 %v1033, %v1026
    %v1314 = vpack.c.b16 %v1034, %v1027
    %v1315 = vpack.c.b16 %v1035, %v1028
    %v1316 = vpack.c.b16 %v1036, %v1029
    %v1317 = vpack.c.b16 %v1037, %v1030
    %v1318 = vpack.c.b16 %v1038, %v1031
    %v1319 = vpack.c.b16 %v1039, %v1032
    %v1320 = vpack.c.b16 %v1047, %v1040
    %v1321 = vpack.c.b16 %v1048, %v1041
    %v1322 = vpack.c.b16 %v1049, %v1042
    %v1323 = vpack.c.b16 %v1050, %v1043
    %v1324 = vpack.c.b16 %v1051, %v1044
    %v1325 = vpack.c.b16 %v1052, %v1045
    %v1326 = vpack.c.b16 %v1053, %v1046
    %v1327 = vpack.c.b16 %v1061, %v1054
    %v1328 = vpack.c.b16 %v1062, %v1055
    %v1329 = vpack.c.b16 %v1063, %v1056
    %v1330 = vpack.c.b16 %v1064, %v1057
    %v1331 = vpack.c.b16 %v1065, %v1058
    %v1332 = vpack.c.b16 %v1066, %v1059
    %v1333 = vpack.c.b16 %v1067, %v1060
    %v1334 = vpack.c.b16 %v1075, %v1068
    %v1335 = vpack.c.b16 %v1076, %v1069
    %v1336 = vpack.c.b16 %v1077, %v1070
    %v1337 = vpack.c.b16 %v1078, %v1071
    %v1338 = vpack.c.b16 %v1079, %v1072
    %v1339 = vpack.c.b16 %v1080, %v1073
    %v1340 = vpack.c.b16 %v1081, %v1074
    %v1341 = vpack.c.b16 %v1089, %v1082
    %v1342 = vpack.c.b16 %v1090, %v1083
    %v1343 = vpack.c.b16 %v1091, %v1084
    %v1344 = vpack.c.b16 %v1092, %v1085
    %v1345 = vpack.c.b16 %v1093, %v1086
    %v1346 = vpack.c.b16 %v1094, %v1087
    %v1347 = vpack.c.b16 %v1095, %v1088
    %v1348 = vpack.c.b16 %v1103, %v1096
    %v1349 = vpack.c.b16 %v1104, %v1097
    %v1350 = vpack.c.b16 %v1105, %v1098
    %v1351 = vpack.c.b16 %v1106, %v1099
    %v1352 = vpack.c.b16 %v1107, %v1100
    %v1353 = vpack.c.b16 %v1108, %v1101
    %v1354 = vpack.c.b16 %v1109, %v1102
    %v1355 = vpack.c.b16 %v1117, %v1110
    %v1356 = vpack.c.b16 %v1118, %v1111
    %v1357 = vpack.c.b16 %v1119, %v1112
    %v1358 = vpack.c.b16 %v1120, %v1113
    %v1359 = vpack.c.b16 %v1121, %v1114
    %v1360 = vpack.c.b16 %v1122, %v1115
    %v1361 = vpack.c.b16 %v1123, %v1116
    %v1362 = vpack.c.b16 %v1131, %v1124
    %v1363 = vpack.c.b16 %v1132, %v1125
    %v1364 = vpack.c.b16 %v1133, %v1126
    %v1365 = vpack.c.b16 %v1134, %v1127
    %v1366 = vpack.c.b16 %v1135, %v1128
    %v1367 = vpack.c.b16 %v1136, %v1129
    %v1368 = vpack.c.b16 %v1137, %v1130
    %v1369 = vpack.c.b16 %v1145, %v1138
    %v1370 = vpack.c.b16 %v1146, %v1139
    %v1371 = vpack.c.b16 %v1147, %v1140
    %v1372 = vpack.c.b16 %v1148, %v1141
    %v1373 = vpack.c.b16 %v1149, %v1142
    %v1374 = vpack.c.b16 %v1150, %v1143
    %v1375 = vpack.c.b16 %v1151, %v1144
    %vm1568 = vcmask 130048
    %v1570 = vsel %vm1568, %v1158, 0
    %v1573 = vsel %vm1568, %v1165, 0
    %v1576 = vsel %vm1568, %v1172, 0
    %v1579 = vsel %vm1568, %v1179, 0
    %v1582 = vsel %vm1568, %v1186, 0
    %v1585 = vsel %vm1568, %v1193, 0
    %v1588 = vsel %vm1568, %v1200, 0
    %v1591 = vsel %vm1568, %v1207, 0
    %v1594 = vsel %vm1568, %v1214, 0
    %v1597 = vsel %vm1568, %v1221, 0
    %v1600 = vsel %vm1568, %v1228, 0
    %v1603 = vsel %vm1568, %v1235, 0
    %v1606 = vsel %vm1568, %v1242, 0
    %v1609 = vsel %vm1568, %v1249, 0
    %v1612 = vsel %vm1568, %v1256, 0
    %v1615 = vsel %vm1568, %v1263, 0
    %v1618 = vsel %vm1568, %v1270, 0
    %v1621 = vsel %vm1568, %v1277, 0
    %v1624 = vsel %vm1568, %v1284, 0
    %v1627 = vsel %vm1568, %v1291, 0
    %v1630 = vsel %vm1568, %v1298, 0
    %v1633 = vsel %vm1568, %v1305, 0
    %v1636 = vsel %vm1568, %v1312, 0
    %v1639 = vsel %vm1568, %v1319, 0
    %v1642 = vsel %vm1568, %v1326, 0
    %v1645 = vsel %vm1568, %v1333, 0
    %v1648 = vsel %vm1568, %v1340, 0
    %v1651 = vsel %vm1568, %v1347, 0
    %v1654 = vsel %vm1568, %v1354, 0
    %v1657 = vsel %vm1568, %v1361, 0
    %v1660 = vsel %vm1568, %v1368, 0
    %v1663 = vsel %vm1568, %v1375, 0
    %v1666 = vsel %vm1568, %v142, 0
    %v1669 = vsel %vm1568, %v149, 0
    %v1672 = vsel %vm1568, %v156, 0
    %v1675 = vsel %vm1568, %v163, 0
    %v1678 = vsel %vm1568, %v170, 0
    %v1681 = vsel %vm1568, %v177, 0
    %v1684 = vsel %vm1568, %v184, 0
    %v1687 = vsel %vm1568, %v191, 0
    %1689 = vmatpush.bf16.xpose.msra.mxu0 %v185
    %1690 = vmatpush.bf16.xpose.msra.mxu0 %v178
    %1691 = vmatpush.bf16.xpose.msra.mxu0 %v171
    %1692 = vmatpush.bf16.xpose.msra.mxu0 %v164
    %1693 = vmatpush.bf16.xpose.msra.mxu0 %v157
    %1694 = vmatpush.bf16.xpose.msra.mxu0 %v150
    %1695 = vmatpush.bf16.xpose.msra.mxu0 %v143
    %1696 = vmatpush.bf16.xpose.msra.mxu0 %v136
    %1697 = vmatmul.bf16.gmra.mxu0 %v1152
    %v1698 = vpop.f32.mrf.mxu0
    %v1699 = vadd.f32 0.0, %v1698
    %v1700 = vpop.f32.mrf.mxu0
    %v1701 = vadd.f32 0.0, %v1700
    %1702 = vmatmul.bf16.gmra.mxu0 %v1159
    %v1703 = vpop.f32.mrf.mxu0
    %v1704 = vadd.f32 0.0, %v1703
    %v1705 = vpop.f32.mrf.mxu0
    %v1706 = vadd.f32 0.0, %v1705
    %1707 = vmatmul.bf16.gmra.mxu0 %v1166
    %v1708 = vpop.f32.mrf.mxu0
    %v1709 = vadd.f32 0.0, %v1708
    %v1710 = vpop.f32.mrf.mxu0
    %v1711 = vadd.f32 0.0, %v1710
    %1712 = vmatmul.bf16.gmra.mxu0 %v1173
    %v1713 = vpop.f32.mrf.mxu0
    %v1714 = vadd.f32 0.0, %v1713
    %v1715 = vpop.f32.mrf.mxu0
    %v1716 = vadd.f32 0.0, %v1715
    %1717 = vmatmul.bf16.gmra.mxu0 %v1180
    %v1718 = vpop.f32.mrf.mxu0
    %v1719 = vadd.f32 0.0, %v1718
    %v1720 = vpop.f32.mrf.mxu0
    %v1721 = vadd.f32 0.0, %v1720
    %1722 = vmatmul.bf16.gmra.mxu0 %v1187
    %v1723 = vpop.f32.mrf.mxu0
    %v1724 = vadd.f32 0.0, %v1723
    %v1725 = vpop.f32.mrf.mxu0
    %v1726 = vadd.f32 0.0, %v1725
    %1727 = vmatmul.bf16.gmra.mxu0 %v1194
    %v1728 = vpop.f32.mrf.mxu0
    %v1729 = vadd.f32 0.0, %v1728
    %v1730 = vpop.f32.mrf.mxu0
    %v1731 = vadd.f32 0.0, %v1730
    %1732 = vmatmul.bf16.gmra.mxu0 %v1201
    %v1733 = vpop.f32.mrf.mxu0
    %v1734 = vadd.f32 0.0, %v1733
    %v1735 = vpop.f32.mrf.mxu0
    %v1736 = vadd.f32 0.0, %v1735
    %1737 = vmatmul.bf16.gmra.mxu0 %v1208
    %v1738 = vpop.f32.mrf.mxu0
    %v1739 = vadd.f32 0.0, %v1738
    %v1740 = vpop.f32.mrf.mxu0
    %v1741 = vadd.f32 0.0, %v1740
    %1742 = vmatmul.bf16.gmra.mxu0 %v1215
    %v1743 = vpop.f32.mrf.mxu0
    %v1744 = vadd.f32 0.0, %v1743
    %v1745 = vpop.f32.mrf.mxu0
    %v1746 = vadd.f32 0.0, %v1745
    %1747 = vmatmul.bf16.gmra.mxu0 %v1222
    %v1748 = vpop.f32.mrf.mxu0
    %v1749 = vadd.f32 0.0, %v1748
    %v1750 = vpop.f32.mrf.mxu0
    %v1751 = vadd.f32 0.0, %v1750
    %1752 = vmatmul.bf16.gmra.mxu0 %v1229
    %v1753 = vpop.f32.mrf.mxu0
    %v1754 = vadd.f32 0.0, %v1753
    %v1755 = vpop.f32.mrf.mxu0
    %v1756 = vadd.f32 0.0, %v1755
    %1757 = vmatmul.bf16.gmra.mxu0 %v1236
    %v1758 = vpop.f32.mrf.mxu0
    %v1759 = vadd.f32 0.0, %v1758
    %v1760 = vpop.f32.mrf.mxu0
    %v1761 = vadd.f32 0.0, %v1760
    %1762 = vmatmul.bf16.gmra.mxu0 %v1243
    %v1763 = vpop.f32.mrf.mxu0
    %v1764 = vadd.f32 0.0, %v1763
    %v1765 = vpop.f32.mrf.mxu0
    %v1766 = vadd.f32 0.0, %v1765
    %1767 = vmatmul.bf16.gmra.mxu0 %v1250
    %v1768 = vpop.f32.mrf.mxu0
    %v1769 = vadd.f32 0.0, %v1768
    %v1770 = vpop.f32.mrf.mxu0
    %v1771 = vadd.f32 0.0, %v1770
    %1772 = vmatmul.bf16.gmra.mxu0 %v1257
    %v1773 = vpop.f32.mrf.mxu0
    %v1774 = vadd.f32 0.0, %v1773
    %v1775 = vpop.f32.mrf.mxu0
    %v1776 = vadd.f32 0.0, %v1775
    %1777 = vmatmul.bf16.gmra.mxu0 %v1264
    %v1778 = vpop.f32.mrf.mxu0
    %v1779 = vadd.f32 0.0, %v1778
    %v1780 = vpop.f32.mrf.mxu0
    %v1781 = vadd.f32 0.0, %v1780
    %1782 = vmatmul.bf16.gmra.mxu0 %v1271
    %v1783 = vpop.f32.mrf.mxu0
    %v1784 = vadd.f32 0.0, %v1783
    %v1785 = vpop.f32.mrf.mxu0
    %v1786 = vadd.f32 0.0, %v1785
    %1787 = vmatmul.bf16.gmra.mxu0 %v1278
    %v1788 = vpop.f32.mrf.mxu0
    %v1789 = vadd.f32 0.0, %v1788
    %v1790 = vpop.f32.mrf.mxu0
    %v1791 = vadd.f32 0.0, %v1790
    %1792 = vmatmul.bf16.gmra.mxu0 %v1285
    %v1793 = vpop.f32.mrf.mxu0
    %v1794 = vadd.f32 0.0, %v1793
    %v1795 = vpop.f32.mrf.mxu0
    %v1796 = vadd.f32 0.0, %v1795
    %1797 = vmatmul.bf16.gmra.mxu0 %v1292
    %v1798 = vpop.f32.mrf.mxu0
    %v1799 = vadd.f32 0.0, %v1798
    %v1800 = vpop.f32.mrf.mxu0
    %v1801 = vadd.f32 0.0, %v1800
    %1802 = vmatmul.bf16.gmra.mxu0 %v1299
    %v1803 = vpop.f32.mrf.mxu0
    %v1804 = vadd.f32 0.0, %v1803
    %v1805 = vpop.f32.mrf.mxu0
    %v1806 = vadd.f32 0.0, %v1805
    %1807 = vmatmul.bf16.gmra.mxu0 %v1306
    %v1808 = vpop.f32.mrf.mxu0
    %v1809 = vadd.f32 0.0, %v1808
    %v1810 = vpop.f32.mrf.mxu0
    %v1811 = vadd.f32 0.0, %v1810
    %1812 = vmatmul.bf16.gmra.mxu0 %v1313
    %v1813 = vpop.f32.mrf.mxu0
    %v1814 = vadd.f32 0.0, %v1813
    %v1815 = vpop.f32.mrf.mxu0
    %v1816 = vadd.f32 0.0, %v1815
    %1817 = vmatmul.bf16.gmra.mxu0 %v1320
    %v1818 = vpop.f32.mrf.mxu0
    %v1819 = vadd.f32 0.0, %v1818
    %v1820 = vpop.f32.mrf.mxu0
    %v1821 = vadd.f32 0.0, %v1820
    %1822 = vmatmul.bf16.gmra.mxu0 %v1327
    %v1823 = vpop.f32.mrf.mxu0
    %v1824 = vadd.f32 0.0, %v1823
    %v1825 = vpop.f32.mrf.mxu0
    %v1826 = vadd.f32 0.0, %v1825
    %1827 = vmatmul.bf16.gmra.mxu0 %v1334
    %v1828 = vpop.f32.mrf.mxu0
    %v1829 = vadd.f32 0.0, %v1828
    %v1830 = vpop.f32.mrf.mxu0
    %v1831 = vadd.f32 0.0, %v1830
    %1832 = vmatmul.bf16.gmra.mxu0 %v1341
    %v1833 = vpop.f32.mrf.mxu0
    %v1834 = vadd.f32 0.0, %v1833
    %v1835 = vpop.f32.mrf.mxu0
    %v1836 = vadd.f32 0.0, %v1835
    %1837 = vmatmul.bf16.gmra.mxu0 %v1348
    %v1838 = vpop.f32.mrf.mxu0
    %v1839 = vadd.f32 0.0, %v1838
    %v1840 = vpop.f32.mrf.mxu0
    %v1841 = vadd.f32 0.0, %v1840
    %1842 = vmatmul.bf16.gmra.mxu0 %v1355
    %v1843 = vpop.f32.mrf.mxu0
    %v1844 = vadd.f32 0.0, %v1843
    %v1845 = vpop.f32.mrf.mxu0
    %v1846 = vadd.f32 0.0, %v1845
    %1847 = vmatmul.bf16.gmra.mxu0 %v1362
    %v1848 = vpop.f32.mrf.mxu0
    %v1849 = vadd.f32 0.0, %v1848
    %v1850 = vpop.f32.mrf.mxu0
    %v1851 = vadd.f32 0.0, %v1850
    %1852 = vmatmul.bf16.gmra.mxu0 %v1369
    %v1853 = vpop.f32.mrf.mxu0
    %v1854 = vadd.f32 0.0, %v1853
    %v1855 = vpop.f32.mrf.mxu0
    %v1856 = vadd.f32 0.0, %v1855
    %1857 = vdwg.mxu0
    %1858 = vmatpush.bf16.xpose.msra.mxu0 %v186
    %1859 = vmatpush.bf16.xpose.msra.mxu0 %v179
    %1860 = vmatpush.bf16.xpose.msra.mxu0 %v172
    %1861 = vmatpush.bf16.xpose.msra.mxu0 %v165
    %1862 = vmatpush.bf16.xpose.msra.mxu0 %v158
    %1863 = vmatpush.bf16.xpose.msra.mxu0 %v151
    %1864 = vmatpush.bf16.xpose.msra.mxu0 %v144
    %1865 = vmatpush.bf16.xpose.msra.mxu0 %v137
    %1866 = vmatmul.bf16.gmra.mxu0 %v1153
    %v1867 = vpop.f32.mrf.mxu0
    %v1868 = vadd.f32 %v1699, %v1867
    %v1869 = vpop.f32.mrf.mxu0
    %v1870 = vadd.f32 %v1701, %v1869
    %1871 = vmatmul.bf16.gmra.mxu0 %v1160
    %v1872 = vpop.f32.mrf.mxu0
    %v1873 = vadd.f32 %v1704, %v1872
    %v1874 = vpop.f32.mrf.mxu0
    %v1875 = vadd.f32 %v1706, %v1874
    %1876 = vmatmul.bf16.gmra.mxu0 %v1167
    %v1877 = vpop.f32.mrf.mxu0
    %v1878 = vadd.f32 %v1709, %v1877
    %v1879 = vpop.f32.mrf.mxu0
    %v1880 = vadd.f32 %v1711, %v1879
    %1881 = vmatmul.bf16.gmra.mxu0 %v1174
    %v1882 = vpop.f32.mrf.mxu0
    %v1883 = vadd.f32 %v1714, %v1882
    %v1884 = vpop.f32.mrf.mxu0
    %v1885 = vadd.f32 %v1716, %v1884
    %1886 = vmatmul.bf16.gmra.mxu0 %v1181
    %v1887 = vpop.f32.mrf.mxu0
    %v1888 = vadd.f32 %v1719, %v1887
    %v1889 = vpop.f32.mrf.mxu0
    %v1890 = vadd.f32 %v1721, %v1889
    %1891 = vmatmul.bf16.gmra.mxu0 %v1188
    %v1892 = vpop.f32.mrf.mxu0
    %v1893 = vadd.f32 %v1724, %v1892
    %v1894 = vpop.f32.mrf.mxu0
    %v1895 = vadd.f32 %v1726, %v1894
    %1896 = vmatmul.bf16.gmra.mxu0 %v1195
    %v1897 = vpop.f32.mrf.mxu0
    %v1898 = vadd.f32 %v1729, %v1897
    %v1899 = vpop.f32.mrf.mxu0
    %v1900 = vadd.f32 %v1731, %v1899
    %1901 = vmatmul.bf16.gmra.mxu0 %v1202
    %v1902 = vpop.f32.mrf.mxu0
    %v1903 = vadd.f32 %v1734, %v1902
    %v1904 = vpop.f32.mrf.mxu0
    %v1905 = vadd.f32 %v1736, %v1904
    %1906 = vmatmul.bf16.gmra.mxu0 %v1209
    %v1907 = vpop.f32.mrf.mxu0
    %v1908 = vadd.f32 %v1739, %v1907
    %v1909 = vpop.f32.mrf.mxu0
    %v1910 = vadd.f32 %v1741, %v1909
    %1911 = vmatmul.bf16.gmra.mxu0 %v1216
    %v1912 = vpop.f32.mrf.mxu0
    %v1913 = vadd.f32 %v1744, %v1912
    %v1914 = vpop.f32.mrf.mxu0
    %v1915 = vadd.f32 %v1746, %v1914
    %1916 = vmatmul.bf16.gmra.mxu0 %v1223
    %v1917 = vpop.f32.mrf.mxu0
    %v1918 = vadd.f32 %v1749, %v1917
    %v1919 = vpop.f32.mrf.mxu0
    %v1920 = vadd.f32 %v1751, %v1919
    %1921 = vmatmul.bf16.gmra.mxu0 %v1230
    %v1922 = vpop.f32.mrf.mxu0
    %v1923 = vadd.f32 %v1754, %v1922
    %v1924 = vpop.f32.mrf.mxu0
    %v1925 = vadd.f32 %v1756, %v1924
    %1926 = vmatmul.bf16.gmra.mxu0 %v1237
    %v1927 = vpop.f32.mrf.mxu0
    %v1928 = vadd.f32 %v1759, %v1927
    %v1929 = vpop.f32.mrf.mxu0
    %v1930 = vadd.f32 %v1761, %v1929
    %1931 = vmatmul.bf16.gmra.mxu0 %v1244
    %v1932 = vpop.f32.mrf.mxu0
    %v1933 = vadd.f32 %v1764, %v1932
    %v1934 = vpop.f32.mrf.mxu0
    %v1935 = vadd.f32 %v1766, %v1934
    %1936 = vmatmul.bf16.gmra.mxu0 %v1251
    %v1937 = vpop.f32.mrf.mxu0
    %v1938 = vadd.f32 %v1769, %v1937
    %v1939 = vpop.f32.mrf.mxu0
    %v1940 = vadd.f32 %v1771, %v1939
    %1941 = vmatmul.bf16.gmra.mxu0 %v1258
    %v1942 = vpop.f32.mrf.mxu0
    %v1943 = vadd.f32 %v1774, %v1942
    %v1944 = vpop.f32.mrf.mxu0
    %v1945 = vadd.f32 %v1776, %v1944
    %1946 = vmatmul.bf16.gmra.mxu0 %v1265
    %v1947 = vpop.f32.mrf.mxu0
    %v1948 = vadd.f32 %v1779, %v1947
    %v1949 = vpop.f32.mrf.mxu0
    %v1950 = vadd.f32 %v1781, %v1949
    %1951 = vmatmul.bf16.gmra.mxu0 %v1272
    %v1952 = vpop.f32.mrf.mxu0
    %v1953 = vadd.f32 %v1784, %v1952
    %v1954 = vpop.f32.mrf.mxu0
    %v1955 = vadd.f32 %v1786, %v1954
    %1956 = vmatmul.bf16.gmra.mxu0 %v1279
    %v1957 = vpop.f32.mrf.mxu0
    %v1958 = vadd.f32 %v1789, %v1957
    %v1959 = vpop.f32.mrf.mxu0
    %v1960 = vadd.f32 %v1791, %v1959
    %1961 = vmatmul.bf16.gmra.mxu0 %v1286
    %v1962 = vpop.f32.mrf.mxu0
    %v1963 = vadd.f32 %v1794, %v1962
    %v1964 = vpop.f32.mrf.mxu0
    %v1965 = vadd.f32 %v1796, %v1964
    %1966 = vmatmul.bf16.gmra.mxu0 %v1293
    %v1967 = vpop.f32.mrf.mxu0
    %v1968 = vadd.f32 %v1799, %v1967
    %v1969 = vpop.f32.mrf.mxu0
    %v1970 = vadd.f32 %v1801, %v1969
    %1971 = vmatmul.bf16.gmra.mxu0 %v1300
    %v1972 = vpop.f32.mrf.mxu0
    %v1973 = vadd.f32 %v1804, %v1972
    %v1974 = vpop.f32.mrf.mxu0
    %v1975 = vadd.f32 %v1806, %v1974
    %1976 = vmatmul.bf16.gmra.mxu0 %v1307
    %v1977 = vpop.f32.mrf.mxu0
    %v1978 = vadd.f32 %v1809, %v1977
    %v1979 = vpop.f32.mrf.mxu0
    %v1980 = vadd.f32 %v1811, %v1979
    %1981 = vmatmul.bf16.gmra.mxu0 %v1314
    %v1982 = vpop.f32.mrf.mxu0
    %v1983 = vadd.f32 %v1814, %v1982
    %v1984 = vpop.f32.mrf.mxu0
    %v1985 = vadd.f32 %v1816, %v1984
    %1986 = vmatmul.bf16.gmra.mxu0 %v1321
    %v1987 = vpop.f32.mrf.mxu0
    %v1988 = vadd.f32 %v1819, %v1987
    %v1989 = vpop.f32.mrf.mxu0
    %v1990 = vadd.f32 %v1821, %v1989
    %1991 = vmatmul.bf16.gmra.mxu0 %v1328
    %v1992 = vpop.f32.mrf.mxu0
    %v1993 = vadd.f32 %v1824, %v1992
    %v1994 = vpop.f32.mrf.mxu0
    %v1995 = vadd.f32 %v1826, %v1994
    %1996 = vmatmul.bf16.gmra.mxu0 %v1335
    %v1997 = vpop.f32.mrf.mxu0
    %v1998 = vadd.f32 %v1829, %v1997
    %v1999 = vpop.f32.mrf.mxu0
    %v2000 = vadd.f32 %v1831, %v1999
    %2001 = vmatmul.bf16.gmra.mxu0 %v1342
    %v2002 = vpop.f32.mrf.mxu0
    %v2003 = vadd.f32 %v1834, %v2002
    %v2004 = vpop.f32.mrf.mxu0
    %v2005 = vadd.f32 %v1836, %v2004
    %2006 = vmatmul.bf16.gmra.mxu0 %v1349
    %v2007 = vpop.f32.mrf.mxu0
    %v2008 = vadd.f32 %v1839, %v2007
    %v2009 = vpop.f32.mrf.mxu0
    %v2010 = vadd.f32 %v1841, %v2009
    %2011 = vmatmul.bf16.gmra.mxu0 %v1356
    %v2012 = vpop.f32.mrf.mxu0
    %v2013 = vadd.f32 %v1844, %v2012
    %v2014 = vpop.f32.mrf.mxu0
    %v2015 = vadd.f32 %v1846, %v2014
    %2016 = vmatmul.bf16.gmra.mxu0 %v1363
    %v2017 = vpop.f32.mrf.mxu0
    %v2018 = vadd.f32 %v1849, %v2017
    %v2019 = vpop.f32.mrf.mxu0
    %v2020 = vadd.f32 %v1851, %v2019
    %2021 = vmatmul.bf16.gmra.mxu0 %v1370
    %v2022 = vpop.f32.mrf.mxu0
    %v2023 = vadd.f32 %v1854, %v2022
    %v2024 = vpop.f32.mrf.mxu0
    %v2025 = vadd.f32 %v1856, %v2024
    %2026 = vdwg.mxu0
    %2027 = vmatpush.bf16.xpose.msra.mxu0 %v187
    %2028 = vmatpush.bf16.xpose.msra.mxu0 %v180
    %2029 = vmatpush.bf16.xpose.msra.mxu0 %v173
    %2030 = vmatpush.bf16.xpose.msra.mxu0 %v166
    %2031 = vmatpush.bf16.xpose.msra.mxu0 %v159
    %2032 = vmatpush.bf16.xpose.msra.mxu0 %v152
    %2033 = vmatpush.bf16.xpose.msra.mxu0 %v145
    %2034 = vmatpush.bf16.xpose.msra.mxu0 %v138
    %2035 = vmatmul.bf16.gmra.mxu0 %v1154
    %v2036 = vpop.f32.mrf.mxu0
    %v2037 = vadd.f32 %v1868, %v2036
    %v2038 = vpop.f32.mrf.mxu0
    %v2039 = vadd.f32 %v1870, %v2038
    %2040 = vmatmul.bf16.gmra.mxu0 %v1161
    %v2041 = vpop.f32.mrf.mxu0
    %v2042 = vadd.f32 %v1873, %v2041
    %v2043 = vpop.f32.mrf.mxu0
    %v2044 = vadd.f32 %v1875, %v2043
    %2045 = vmatmul.bf16.gmra.mxu0 %v1168
    %v2046 = vpop.f32.mrf.mxu0
    %v2047 = vadd.f32 %v1878, %v2046
    %v2048 = vpop.f32.mrf.mxu0
    %v2049 = vadd.f32 %v1880, %v2048
    %2050 = vmatmul.bf16.gmra.mxu0 %v1175
    %v2051 = vpop.f32.mrf.mxu0
    %v2052 = vadd.f32 %v1883, %v2051
    %v2053 = vpop.f32.mrf.mxu0
    %v2054 = vadd.f32 %v1885, %v2053
    %2055 = vmatmul.bf16.gmra.mxu0 %v1182
    %v2056 = vpop.f32.mrf.mxu0
    %v2057 = vadd.f32 %v1888, %v2056
    %v2058 = vpop.f32.mrf.mxu0
    %v2059 = vadd.f32 %v1890, %v2058
    %2060 = vmatmul.bf16.gmra.mxu0 %v1189
    %v2061 = vpop.f32.mrf.mxu0
    %v2062 = vadd.f32 %v1893, %v2061
    %v2063 = vpop.f32.mrf.mxu0
    %v2064 = vadd.f32 %v1895, %v2063
    %2065 = vmatmul.bf16.gmra.mxu0 %v1196
    %v2066 = vpop.f32.mrf.mxu0
    %v2067 = vadd.f32 %v1898, %v2066
    %v2068 = vpop.f32.mrf.mxu0
    %v2069 = vadd.f32 %v1900, %v2068
    %2070 = vmatmul.bf16.gmra.mxu0 %v1203
    %v2071 = vpop.f32.mrf.mxu0
    %v2072 = vadd.f32 %v1903, %v2071
    %v2073 = vpop.f32.mrf.mxu0
    %v2074 = vadd.f32 %v1905, %v2073
    %2075 = vmatmul.bf16.gmra.mxu0 %v1210
    %v2076 = vpop.f32.mrf.mxu0
    %v2077 = vadd.f32 %v1908, %v2076
    %v2078 = vpop.f32.mrf.mxu0
    %v2079 = vadd.f32 %v1910, %v2078
    %2080 = vmatmul.bf16.gmra.mxu0 %v1217
    %v2081 = vpop.f32.mrf.mxu0
    %v2082 = vadd.f32 %v1913, %v2081
    %v2083 = vpop.f32.mrf.mxu0
    %v2084 = vadd.f32 %v1915, %v2083
    %2085 = vmatmul.bf16.gmra.mxu0 %v1224
    %v2086 = vpop.f32.mrf.mxu0
    %v2087 = vadd.f32 %v1918, %v2086
    %v2088 = vpop.f32.mrf.mxu0
    %v2089 = vadd.f32 %v1920, %v2088
    %2090 = vmatmul.bf16.gmra.mxu0 %v1231
    %v2091 = vpop.f32.mrf.mxu0
    %v2092 = vadd.f32 %v1923, %v2091
    %v2093 = vpop.f32.mrf.mxu0
    %v2094 = vadd.f32 %v1925, %v2093
    %2095 = vmatmul.bf16.gmra.mxu0 %v1238
    %v2096 = vpop.f32.mrf.mxu0
    %v2097 = vadd.f32 %v1928, %v2096
    %v2098 = vpop.f32.mrf.mxu0
    %v2099 = vadd.f32 %v1930, %v2098
    %2100 = vmatmul.bf16.gmra.mxu0 %v1245
    %v2101 = vpop.f32.mrf.mxu0
    %v2102 = vadd.f32 %v1933, %v2101
    %v2103 = vpop.f32.mrf.mxu0
    %v2104 = vadd.f32 %v1935, %v2103
    %2105 = vmatmul.bf16.gmra.mxu0 %v1252
    %v2106 = vpop.f32.mrf.mxu0
    %v2107 = vadd.f32 %v1938, %v2106
    %v2108 = vpop.f32.mrf.mxu0
    %v2109 = vadd.f32 %v1940, %v2108
    %2110 = vmatmul.bf16.gmra.mxu0 %v1259
    %v2111 = vpop.f32.mrf.mxu0
    %v2112 = vadd.f32 %v1943, %v2111
    %v2113 = vpop.f32.mrf.mxu0
    %v2114 = vadd.f32 %v1945, %v2113
    %2115 = vmatmul.bf16.gmra.mxu0 %v1266
    %v2116 = vpop.f32.mrf.mxu0
    %v2117 = vadd.f32 %v1948, %v2116
    %v2118 = vpop.f32.mrf.mxu0
    %v2119 = vadd.f32 %v1950, %v2118
    %2120 = vmatmul.bf16.gmra.mxu0 %v1273
    %v2121 = vpop.f32.mrf.mxu0
    %v2122 = vadd.f32 %v1953, %v2121
    %v2123 = vpop.f32.mrf.mxu0
    %v2124 = vadd.f32 %v1955, %v2123
    %2125 = vmatmul.bf16.gmra.mxu0 %v1280
    %v2126 = vpop.f32.mrf.mxu0
    %v2127 = vadd.f32 %v1958, %v2126
    %v2128 = vpop.f32.mrf.mxu0
    %v2129 = vadd.f32 %v1960, %v2128
    %2130 = vmatmul.bf16.gmra.mxu0 %v1287
    %v2131 = vpop.f32.mrf.mxu0
    %v2132 = vadd.f32 %v1963, %v2131
    %v2133 = vpop.f32.mrf.mxu0
    %v2134 = vadd.f32 %v1965, %v2133
    %2135 = vmatmul.bf16.gmra.mxu0 %v1294
    %v2136 = vpop.f32.mrf.mxu0
    %v2137 = vadd.f32 %v1968, %v2136
    %v2138 = vpop.f32.mrf.mxu0
    %v2139 = vadd.f32 %v1970, %v2138
    %2140 = vmatmul.bf16.gmra.mxu0 %v1301
    %v2141 = vpop.f32.mrf.mxu0
    %v2142 = vadd.f32 %v1973, %v2141
    %v2143 = vpop.f32.mrf.mxu0
    %v2144 = vadd.f32 %v1975, %v2143
    %2145 = vmatmul.bf16.gmra.mxu0 %v1308
    %v2146 = vpop.f32.mrf.mxu0
    %v2147 = vadd.f32 %v1978, %v2146
    %v2148 = vpop.f32.mrf.mxu0
    %v2149 = vadd.f32 %v1980, %v2148
    %2150 = vmatmul.bf16.gmra.mxu0 %v1315
    %v2151 = vpop.f32.mrf.mxu0
    %v2152 = vadd.f32 %v1983, %v2151
    %v2153 = vpop.f32.mrf.mxu0
    %v2154 = vadd.f32 %v1985, %v2153
    %2155 = vmatmul.bf16.gmra.mxu0 %v1322
    %v2156 = vpop.f32.mrf.mxu0
    %v2157 = vadd.f32 %v1988, %v2156
    %v2158 = vpop.f32.mrf.mxu0
    %v2159 = vadd.f32 %v1990, %v2158
    %2160 = vmatmul.bf16.gmra.mxu0 %v1329
    %v2161 = vpop.f32.mrf.mxu0
    %v2162 = vadd.f32 %v1993, %v2161
    %v2163 = vpop.f32.mrf.mxu0
    %v2164 = vadd.f32 %v1995, %v2163
    %2165 = vmatmul.bf16.gmra.mxu0 %v1336
    %v2166 = vpop.f32.mrf.mxu0
    %v2167 = vadd.f32 %v1998, %v2166
    %v2168 = vpop.f32.mrf.mxu0
    %v2169 = vadd.f32 %v2000, %v2168
    %2170 = vmatmul.bf16.gmra.mxu0 %v1343
    %v2171 = vpop.f32.mrf.mxu0
    %v2172 = vadd.f32 %v2003, %v2171
    %v2173 = vpop.f32.mrf.mxu0
    %v2174 = vadd.f32 %v2005, %v2173
    %2175 = vmatmul.bf16.gmra.mxu0 %v1350
    %v2176 = vpop.f32.mrf.mxu0
    %v2177 = vadd.f32 %v2008, %v2176
    %v2178 = vpop.f32.mrf.mxu0
    %v2179 = vadd.f32 %v2010, %v2178
    %2180 = vmatmul.bf16.gmra.mxu0 %v1357
    %v2181 = vpop.f32.mrf.mxu0
    %v2182 = vadd.f32 %v2013, %v2181
    %v2183 = vpop.f32.mrf.mxu0
    %v2184 = vadd.f32 %v2015, %v2183
    %2185 = vmatmul.bf16.gmra.mxu0 %v1364
    %v2186 = vpop.f32.mrf.mxu0
    %v2187 = vadd.f32 %v2018, %v2186
    %v2188 = vpop.f32.mrf.mxu0
    %v2189 = vadd.f32 %v2020, %v2188
    %2190 = vmatmul.bf16.gmra.mxu0 %v1371
    %v2191 = vpop.f32.mrf.mxu0
    %v2192 = vadd.f32 %v2023, %v2191
    %v2193 = vpop.f32.mrf.mxu0
    %v2194 = vadd.f32 %v2025, %v2193
    %2195 = vdwg.mxu0
    %2196 = vmatpush.bf16.xpose.msra.mxu0 %v188
    %2197 = vmatpush.bf16.xpose.msra.mxu0 %v181
    %2198 = vmatpush.bf16.xpose.msra.mxu0 %v174
    %2199 = vmatpush.bf16.xpose.msra.mxu0 %v167
    %2200 = vmatpush.bf16.xpose.msra.mxu0 %v160
    %2201 = vmatpush.bf16.xpose.msra.mxu0 %v153
    %2202 = vmatpush.bf16.xpose.msra.mxu0 %v146
    %2203 = vmatpush.bf16.xpose.msra.mxu0 %v139
    %2204 = vmatmul.bf16.gmra.mxu0 %v1155
    %v2205 = vpop.f32.mrf.mxu0
    %v2206 = vadd.f32 %v2037, %v2205
    %v2207 = vpop.f32.mrf.mxu0
    %v2208 = vadd.f32 %v2039, %v2207
    %2209 = vmatmul.bf16.gmra.mxu0 %v1162
    %v2210 = vpop.f32.mrf.mxu0
    %v2211 = vadd.f32 %v2042, %v2210
    %v2212 = vpop.f32.mrf.mxu0
    %v2213 = vadd.f32 %v2044, %v2212
    %2214 = vmatmul.bf16.gmra.mxu0 %v1169
    %v2215 = vpop.f32.mrf.mxu0
    %v2216 = vadd.f32 %v2047, %v2215
    %v2217 = vpop.f32.mrf.mxu0
    %v2218 = vadd.f32 %v2049, %v2217
    %2219 = vmatmul.bf16.gmra.mxu0 %v1176
    %v2220 = vpop.f32.mrf.mxu0
    %v2221 = vadd.f32 %v2052, %v2220
    %v2222 = vpop.f32.mrf.mxu0
    %v2223 = vadd.f32 %v2054, %v2222
    %2224 = vmatmul.bf16.gmra.mxu0 %v1183
    %v2225 = vpop.f32.mrf.mxu0
    %v2226 = vadd.f32 %v2057, %v2225
    %v2227 = vpop.f32.mrf.mxu0
    %v2228 = vadd.f32 %v2059, %v2227
    %2229 = vmatmul.bf16.gmra.mxu0 %v1190
    %v2230 = vpop.f32.mrf.mxu0
    %v2231 = vadd.f32 %v2062, %v2230
    %v2232 = vpop.f32.mrf.mxu0
    %v2233 = vadd.f32 %v2064, %v2232
    %2234 = vmatmul.bf16.gmra.mxu0 %v1197
    %v2235 = vpop.f32.mrf.mxu0
    %v2236 = vadd.f32 %v2067, %v2235
    %v2237 = vpop.f32.mrf.mxu0
    %v2238 = vadd.f32 %v2069, %v2237
    %2239 = vmatmul.bf16.gmra.mxu0 %v1204
    %v2240 = vpop.f32.mrf.mxu0
    %v2241 = vadd.f32 %v2072, %v2240
    %v2242 = vpop.f32.mrf.mxu0
    %v2243 = vadd.f32 %v2074, %v2242
    %2244 = vmatmul.bf16.gmra.mxu0 %v1211
    %v2245 = vpop.f32.mrf.mxu0
    %v2246 = vadd.f32 %v2077, %v2245
    %v2247 = vpop.f32.mrf.mxu0
    %v2248 = vadd.f32 %v2079, %v2247
    %2249 = vmatmul.bf16.gmra.mxu0 %v1218
    %v2250 = vpop.f32.mrf.mxu0
    %v2251 = vadd.f32 %v2082, %v2250
    %v2252 = vpop.f32.mrf.mxu0
    %v2253 = vadd.f32 %v2084, %v2252
    %2254 = vmatmul.bf16.gmra.mxu0 %v1225
    %v2255 = vpop.f32.mrf.mxu0
    %v2256 = vadd.f32 %v2087, %v2255
    %v2257 = vpop.f32.mrf.mxu0
    %v2258 = vadd.f32 %v2089, %v2257
    %2259 = vmatmul.bf16.gmra.mxu0 %v1232
    %v2260 = vpop.f32.mrf.mxu0
    %v2261 = vadd.f32 %v2092, %v2260
    %v2262 = vpop.f32.mrf.mxu0
    %v2263 = vadd.f32 %v2094, %v2262
    %2264 = vmatmul.bf16.gmra.mxu0 %v1239
    %v2265 = vpop.f32.mrf.mxu0
    %v2266 = vadd.f32 %v2097, %v2265
    %v2267 = vpop.f32.mrf.mxu0
    %v2268 = vadd.f32 %v2099, %v2267
    %2269 = vmatmul.bf16.gmra.mxu0 %v1246
    %v2270 = vpop.f32.mrf.mxu0
    %v2271 = vadd.f32 %v2102, %v2270
    %v2272 = vpop.f32.mrf.mxu0
    %v2273 = vadd.f32 %v2104, %v2272
    %2274 = vmatmul.bf16.gmra.mxu0 %v1253
    %v2275 = vpop.f32.mrf.mxu0
    %v2276 = vadd.f32 %v2107, %v2275
    %v2277 = vpop.f32.mrf.mxu0
    %v2278 = vadd.f32 %v2109, %v2277
    %2279 = vmatmul.bf16.gmra.mxu0 %v1260
    %v2280 = vpop.f32.mrf.mxu0
    %v2281 = vadd.f32 %v2112, %v2280
    %v2282 = vpop.f32.mrf.mxu0
    %v2283 = vadd.f32 %v2114, %v2282
    %2284 = vmatmul.bf16.gmra.mxu0 %v1267
    %v2285 = vpop.f32.mrf.mxu0
    %v2286 = vadd.f32 %v2117, %v2285
    %v2287 = vpop.f32.mrf.mxu0
    %v2288 = vadd.f32 %v2119, %v2287
    %2289 = vmatmul.bf16.gmra.mxu0 %v1274
    %v2290 = vpop.f32.mrf.mxu0
    %v2291 = vadd.f32 %v2122, %v2290
    %v2292 = vpop.f32.mrf.mxu0
    %v2293 = vadd.f32 %v2124, %v2292
    %2294 = vmatmul.bf16.gmra.mxu0 %v1281
    %v2295 = vpop.f32.mrf.mxu0
    %v2296 = vadd.f32 %v2127, %v2295
    %v2297 = vpop.f32.mrf.mxu0
    %v2298 = vadd.f32 %v2129, %v2297
    %2299 = vmatmul.bf16.gmra.mxu0 %v1288
    %v2300 = vpop.f32.mrf.mxu0
    %v2301 = vadd.f32 %v2132, %v2300
    %v2302 = vpop.f32.mrf.mxu0
    %v2303 = vadd.f32 %v2134, %v2302
    %2304 = vmatmul.bf16.gmra.mxu0 %v1295
    %v2305 = vpop.f32.mrf.mxu0
    %v2306 = vadd.f32 %v2137, %v2305
    %v2307 = vpop.f32.mrf.mxu0
    %v2308 = vadd.f32 %v2139, %v2307
    %2309 = vmatmul.bf16.gmra.mxu0 %v1302
    %v2310 = vpop.f32.mrf.mxu0
    %v2311 = vadd.f32 %v2142, %v2310
    %v2312 = vpop.f32.mrf.mxu0
    %v2313 = vadd.f32 %v2144, %v2312
    %2314 = vmatmul.bf16.gmra.mxu0 %v1309
    %v2315 = vpop.f32.mrf.mxu0
    %v2316 = vadd.f32 %v2147, %v2315
    %v2317 = vpop.f32.mrf.mxu0
    %v2318 = vadd.f32 %v2149, %v2317
    %2319 = vmatmul.bf16.gmra.mxu0 %v1316
    %v2320 = vpop.f32.mrf.mxu0
    %v2321 = vadd.f32 %v2152, %v2320
    %v2322 = vpop.f32.mrf.mxu0
    %v2323 = vadd.f32 %v2154, %v2322
    %2324 = vmatmul.bf16.gmra.mxu0 %v1323
    %v2325 = vpop.f32.mrf.mxu0
    %v2326 = vadd.f32 %v2157, %v2325
    %v2327 = vpop.f32.mrf.mxu0
    %v2328 = vadd.f32 %v2159, %v2327
    %2329 = vmatmul.bf16.gmra.mxu0 %v1330
    %v2330 = vpop.f32.mrf.mxu0
    %v2331 = vadd.f32 %v2162, %v2330
    %v2332 = vpop.f32.mrf.mxu0
    %v2333 = vadd.f32 %v2164, %v2332
    %2334 = vmatmul.bf16.gmra.mxu0 %v1337
    %v2335 = vpop.f32.mrf.mxu0
    %v2336 = vadd.f32 %v2167, %v2335
    %v2337 = vpop.f32.mrf.mxu0
    %v2338 = vadd.f32 %v2169, %v2337
    %2339 = vmatmul.bf16.gmra.mxu0 %v1344
    %v2340 = vpop.f32.mrf.mxu0
    %v2341 = vadd.f32 %v2172, %v2340
    %v2342 = vpop.f32.mrf.mxu0
    %v2343 = vadd.f32 %v2174, %v2342
    %2344 = vmatmul.bf16.gmra.mxu0 %v1351
    %v2345 = vpop.f32.mrf.mxu0
    %v2346 = vadd.f32 %v2177, %v2345
    %v2347 = vpop.f32.mrf.mxu0
    %v2348 = vadd.f32 %v2179, %v2347
    %2349 = vmatmul.bf16.gmra.mxu0 %v1358
    %v2350 = vpop.f32.mrf.mxu0
    %v2351 = vadd.f32 %v2182, %v2350
    %v2352 = vpop.f32.mrf.mxu0
    %v2353 = vadd.f32 %v2184, %v2352
    %2354 = vmatmul.bf16.gmra.mxu0 %v1365
    %v2355 = vpop.f32.mrf.mxu0
    %v2356 = vadd.f32 %v2187, %v2355
    %v2357 = vpop.f32.mrf.mxu0
    %v2358 = vadd.f32 %v2189, %v2357
    %2359 = vmatmul.bf16.gmra.mxu0 %v1372
    %v2360 = vpop.f32.mrf.mxu0
    %v2361 = vadd.f32 %v2192, %v2360
    %v2362 = vpop.f32.mrf.mxu0
    %v2363 = vadd.f32 %v2194, %v2362
    %2364 = vdwg.mxu0
    %2365 = vmatpush.bf16.xpose.msra.mxu0 %v189
    %2366 = vmatpush.bf16.xpose.msra.mxu0 %v182
    %2367 = vmatpush.bf16.xpose.msra.mxu0 %v175
    %2368 = vmatpush.bf16.xpose.msra.mxu0 %v168
    %2369 = vmatpush.bf16.xpose.msra.mxu0 %v161
    %2370 = vmatpush.bf16.xpose.msra.mxu0 %v154
    %2371 = vmatpush.bf16.xpose.msra.mxu0 %v147
    %2372 = vmatpush.bf16.xpose.msra.mxu0 %v140
    %2373 = vmatmul.bf16.gmra.mxu0 %v1156
    %v2374 = vpop.f32.mrf.mxu0
    %v2375 = vadd.f32 %v2206, %v2374
    %v2376 = vpop.f32.mrf.mxu0
    %v2377 = vadd.f32 %v2208, %v2376
    %2378 = vmatmul.bf16.gmra.mxu0 %v1163
    %v2379 = vpop.f32.mrf.mxu0
    %v2380 = vadd.f32 %v2211, %v2379
    %v2381 = vpop.f32.mrf.mxu0
    %v2382 = vadd.f32 %v2213, %v2381
    %2383 = vmatmul.bf16.gmra.mxu0 %v1170
    %v2384 = vpop.f32.mrf.mxu0
    %v2385 = vadd.f32 %v2216, %v2384
    %v2386 = vpop.f32.mrf.mxu0
    %v2387 = vadd.f32 %v2218, %v2386
    %2388 = vmatmul.bf16.gmra.mxu0 %v1177
    %v2389 = vpop.f32.mrf.mxu0
    %v2390 = vadd.f32 %v2221, %v2389
    %v2391 = vpop.f32.mrf.mxu0
    %v2392 = vadd.f32 %v2223, %v2391
    %2393 = vmatmul.bf16.gmra.mxu0 %v1184
    %v2394 = vpop.f32.mrf.mxu0
    %v2395 = vadd.f32 %v2226, %v2394
    %v2396 = vpop.f32.mrf.mxu0
    %v2397 = vadd.f32 %v2228, %v2396
    %2398 = vmatmul.bf16.gmra.mxu0 %v1191
    %v2399 = vpop.f32.mrf.mxu0
    %v2400 = vadd.f32 %v2231, %v2399
    %v2401 = vpop.f32.mrf.mxu0
    %v2402 = vadd.f32 %v2233, %v2401
    %2403 = vmatmul.bf16.gmra.mxu0 %v1198
    %v2404 = vpop.f32.mrf.mxu0
    %v2405 = vadd.f32 %v2236, %v2404
    %v2406 = vpop.f32.mrf.mxu0
    %v2407 = vadd.f32 %v2238, %v2406
    %2408 = vmatmul.bf16.gmra.mxu0 %v1205
    %v2409 = vpop.f32.mrf.mxu0
    %v2410 = vadd.f32 %v2241, %v2409
    %v2411 = vpop.f32.mrf.mxu0
    %v2412 = vadd.f32 %v2243, %v2411
    %2413 = vmatmul.bf16.gmra.mxu0 %v1212
    %v2414 = vpop.f32.mrf.mxu0
    %v2415 = vadd.f32 %v2246, %v2414
    %v2416 = vpop.f32.mrf.mxu0
    %v2417 = vadd.f32 %v2248, %v2416
    %2418 = vmatmul.bf16.gmra.mxu0 %v1219
    %v2419 = vpop.f32.mrf.mxu0
    %v2420 = vadd.f32 %v2251, %v2419
    %v2421 = vpop.f32.mrf.mxu0
    %v2422 = vadd.f32 %v2253, %v2421
    %2423 = vmatmul.bf16.gmra.mxu0 %v1226
    %v2424 = vpop.f32.mrf.mxu0
    %v2425 = vadd.f32 %v2256, %v2424
    %v2426 = vpop.f32.mrf.mxu0
    %v2427 = vadd.f32 %v2258, %v2426
    %2428 = vmatmul.bf16.gmra.mxu0 %v1233
    %v2429 = vpop.f32.mrf.mxu0
    %v2430 = vadd.f32 %v2261, %v2429
    %v2431 = vpop.f32.mrf.mxu0
    %v2432 = vadd.f32 %v2263, %v2431
    %2433 = vmatmul.bf16.gmra.mxu0 %v1240
    %v2434 = vpop.f32.mrf.mxu0
    %v2435 = vadd.f32 %v2266, %v2434
    %v2436 = vpop.f32.mrf.mxu0
    %v2437 = vadd.f32 %v2268, %v2436
    %2438 = vmatmul.bf16.gmra.mxu0 %v1247
    %v2439 = vpop.f32.mrf.mxu0
    %v2440 = vadd.f32 %v2271, %v2439
    %v2441 = vpop.f32.mrf.mxu0
    %v2442 = vadd.f32 %v2273, %v2441
    %2443 = vmatmul.bf16.gmra.mxu0 %v1254
    %v2444 = vpop.f32.mrf.mxu0
    %v2445 = vadd.f32 %v2276, %v2444
    %v2446 = vpop.f32.mrf.mxu0
    %v2447 = vadd.f32 %v2278, %v2446
    %2448 = vmatmul.bf16.gmra.mxu0 %v1261
    %v2449 = vpop.f32.mrf.mxu0
    %v2450 = vadd.f32 %v2281, %v2449
    %v2451 = vpop.f32.mrf.mxu0
    %v2452 = vadd.f32 %v2283, %v2451
    %2453 = vmatmul.bf16.gmra.mxu0 %v1268
    %v2454 = vpop.f32.mrf.mxu0
    %v2455 = vadd.f32 %v2286, %v2454
    %v2456 = vpop.f32.mrf.mxu0
    %v2457 = vadd.f32 %v2288, %v2456
    %2458 = vmatmul.bf16.gmra.mxu0 %v1275
    %v2459 = vpop.f32.mrf.mxu0
    %v2460 = vadd.f32 %v2291, %v2459
    %v2461 = vpop.f32.mrf.mxu0
    %v2462 = vadd.f32 %v2293, %v2461
    %2463 = vmatmul.bf16.gmra.mxu0 %v1282
    %v2464 = vpop.f32.mrf.mxu0
    %v2465 = vadd.f32 %v2296, %v2464
    %v2466 = vpop.f32.mrf.mxu0
    %v2467 = vadd.f32 %v2298, %v2466
    %2468 = vmatmul.bf16.gmra.mxu0 %v1289
    %v2469 = vpop.f32.mrf.mxu0
    %v2470 = vadd.f32 %v2301, %v2469
    %v2471 = vpop.f32.mrf.mxu0
    %v2472 = vadd.f32 %v2303, %v2471
    %2473 = vmatmul.bf16.gmra.mxu0 %v1296
    %v2474 = vpop.f32.mrf.mxu0
    %v2475 = vadd.f32 %v2306, %v2474
    %v2476 = vpop.f32.mrf.mxu0
    %v2477 = vadd.f32 %v2308, %v2476
    %2478 = vmatmul.bf16.gmra.mxu0 %v1303
    %v2479 = vpop.f32.mrf.mxu0
    %v2480 = vadd.f32 %v2311, %v2479
    %v2481 = vpop.f32.mrf.mxu0
    %v2482 = vadd.f32 %v2313, %v2481
    %2483 = vmatmul.bf16.gmra.mxu0 %v1310
    %v2484 = vpop.f32.mrf.mxu0
    %v2485 = vadd.f32 %v2316, %v2484
    %v2486 = vpop.f32.mrf.mxu0
    %v2487 = vadd.f32 %v2318, %v2486
    %2488 = vmatmul.bf16.gmra.mxu0 %v1317
    %v2489 = vpop.f32.mrf.mxu0
    %v2490 = vadd.f32 %v2321, %v2489
    %v2491 = vpop.f32.mrf.mxu0
    %v2492 = vadd.f32 %v2323, %v2491
    %2493 = vmatmul.bf16.gmra.mxu0 %v1324
    %v2494 = vpop.f32.mrf.mxu0
    %v2495 = vadd.f32 %v2326, %v2494
    %v2496 = vpop.f32.mrf.mxu0
    %v2497 = vadd.f32 %v2328, %v2496
    %2498 = vmatmul.bf16.gmra.mxu0 %v1331
    %v2499 = vpop.f32.mrf.mxu0
    %v2500 = vadd.f32 %v2331, %v2499
    %v2501 = vpop.f32.mrf.mxu0
    %v2502 = vadd.f32 %v2333, %v2501
    %2503 = vmatmul.bf16.gmra.mxu0 %v1338
    %v2504 = vpop.f32.mrf.mxu0
    %v2505 = vadd.f32 %v2336, %v2504
    %v2506 = vpop.f32.mrf.mxu0
    %v2507 = vadd.f32 %v2338, %v2506
    %2508 = vmatmul.bf16.gmra.mxu0 %v1345
    %v2509 = vpop.f32.mrf.mxu0
    %v2510 = vadd.f32 %v2341, %v2509
    %v2511 = vpop.f32.mrf.mxu0
    %v2512 = vadd.f32 %v2343, %v2511
    %2513 = vmatmul.bf16.gmra.mxu0 %v1352
    %v2514 = vpop.f32.mrf.mxu0
    %v2515 = vadd.f32 %v2346, %v2514
    %v2516 = vpop.f32.mrf.mxu0
    %v2517 = vadd.f32 %v2348, %v2516
    %2518 = vmatmul.bf16.gmra.mxu0 %v1359
    %v2519 = vpop.f32.mrf.mxu0
    %v2520 = vadd.f32 %v2351, %v2519
    %v2521 = vpop.f32.mrf.mxu0
    %v2522 = vadd.f32 %v2353, %v2521
    %2523 = vmatmul.bf16.gmra.mxu0 %v1366
    %v2524 = vpop.f32.mrf.mxu0
    %v2525 = vadd.f32 %v2356, %v2524
    %v2526 = vpop.f32.mrf.mxu0
    %v2527 = vadd.f32 %v2358, %v2526
    %2528 = vmatmul.bf16.gmra.mxu0 %v1373
    %v2529 = vpop.f32.mrf.mxu0
    %v2530 = vadd.f32 %v2361, %v2529
    %v2531 = vpop.f32.mrf.mxu0
    %v2532 = vadd.f32 %v2363, %v2531
    %2533 = vdwg.mxu0
    %2534 = vmatpush.bf16.xpose.msra.mxu0 %v190
    %2535 = vmatpush.bf16.xpose.msra.mxu0 %v183
    %2536 = vmatpush.bf16.xpose.msra.mxu0 %v176
    %2537 = vmatpush.bf16.xpose.msra.mxu0 %v169
    %2538 = vmatpush.bf16.xpose.msra.mxu0 %v162
    %2539 = vmatpush.bf16.xpose.msra.mxu0 %v155
    %2540 = vmatpush.bf16.xpose.msra.mxu0 %v148
    %2541 = vmatpush.bf16.xpose.msra.mxu0 %v141
    %2542 = vmatmul.bf16.gmra.mxu0 %v1157
    %v2543 = vpop.f32.mrf.mxu0
    %v2544 = vadd.f32 %v2375, %v2543
    %v2545 = vpop.f32.mrf.mxu0
    %v2546 = vadd.f32 %v2377, %v2545
    %2547 = vmatmul.bf16.gmra.mxu0 %v1164
    %v2548 = vpop.f32.mrf.mxu0
    %v2549 = vadd.f32 %v2380, %v2548
    %v2550 = vpop.f32.mrf.mxu0
    %v2551 = vadd.f32 %v2382, %v2550
    %2552 = vmatmul.bf16.gmra.mxu0 %v1171
    %v2553 = vpop.f32.mrf.mxu0
    %v2554 = vadd.f32 %v2385, %v2553
    %v2555 = vpop.f32.mrf.mxu0
    %v2556 = vadd.f32 %v2387, %v2555
    %2557 = vmatmul.bf16.gmra.mxu0 %v1178
    %v2558 = vpop.f32.mrf.mxu0
    %v2559 = vadd.f32 %v2390, %v2558
    %v2560 = vpop.f32.mrf.mxu0
    %v2561 = vadd.f32 %v2392, %v2560
    %2562 = vmatmul.bf16.gmra.mxu0 %v1185
    %v2563 = vpop.f32.mrf.mxu0
    %v2564 = vadd.f32 %v2395, %v2563
    %v2565 = vpop.f32.mrf.mxu0
    %v2566 = vadd.f32 %v2397, %v2565
    %2567 = vmatmul.bf16.gmra.mxu0 %v1192
    %v2568 = vpop.f32.mrf.mxu0
    %v2569 = vadd.f32 %v2400, %v2568
    %v2570 = vpop.f32.mrf.mxu0
    %v2571 = vadd.f32 %v2402, %v2570
    %2572 = vmatmul.bf16.gmra.mxu0 %v1199
    %v2573 = vpop.f32.mrf.mxu0
    %v2574 = vadd.f32 %v2405, %v2573
    %v2575 = vpop.f32.mrf.mxu0
    %v2576 = vadd.f32 %v2407, %v2575
    %2577 = vmatmul.bf16.gmra.mxu0 %v1206
    %v2578 = vpop.f32.mrf.mxu0
    %v2579 = vadd.f32 %v2410, %v2578
    %v2580 = vpop.f32.mrf.mxu0
    %v2581 = vadd.f32 %v2412, %v2580
    %2582 = vmatmul.bf16.gmra.mxu0 %v1213
    %v2583 = vpop.f32.mrf.mxu0
    %v2584 = vadd.f32 %v2415, %v2583
    %v2585 = vpop.f32.mrf.mxu0
    %v2586 = vadd.f32 %v2417, %v2585
    %2587 = vmatmul.bf16.gmra.mxu0 %v1220
    %v2588 = vpop.f32.mrf.mxu0
    %v2589 = vadd.f32 %v2420, %v2588
    %v2590 = vpop.f32.mrf.mxu0
    %v2591 = vadd.f32 %v2422, %v2590
    %2592 = vmatmul.bf16.gmra.mxu0 %v1227
    %v2593 = vpop.f32.mrf.mxu0
    %v2594 = vadd.f32 %v2425, %v2593
    %v2595 = vpop.f32.mrf.mxu0
    %v2596 = vadd.f32 %v2427, %v2595
    %2597 = vmatmul.bf16.gmra.mxu0 %v1234
    %v2598 = vpop.f32.mrf.mxu0
    %v2599 = vadd.f32 %v2430, %v2598
    %v2600 = vpop.f32.mrf.mxu0
    %v2601 = vadd.f32 %v2432, %v2600
    %2602 = vmatmul.bf16.gmra.mxu0 %v1241
    %v2603 = vpop.f32.mrf.mxu0
    %v2604 = vadd.f32 %v2435, %v2603
    %v2605 = vpop.f32.mrf.mxu0
    %v2606 = vadd.f32 %v2437, %v2605
    %2607 = vmatmul.bf16.gmra.mxu0 %v1248
    %v2608 = vpop.f32.mrf.mxu0
    %v2609 = vadd.f32 %v2440, %v2608
    %v2610 = vpop.f32.mrf.mxu0
    %v2611 = vadd.f32 %v2442, %v2610
    %2612 = vmatmul.bf16.gmra.mxu0 %v1255
    %v2613 = vpop.f32.mrf.mxu0
    %v2614 = vadd.f32 %v2445, %v2613
    %v2615 = vpop.f32.mrf.mxu0
    %v2616 = vadd.f32 %v2447, %v2615
    %2617 = vmatmul.bf16.gmra.mxu0 %v1262
    %v2618 = vpop.f32.mrf.mxu0
    %v2619 = vadd.f32 %v2450, %v2618
    %v2620 = vpop.f32.mrf.mxu0
    %v2621 = vadd.f32 %v2452, %v2620
    %2622 = vmatmul.bf16.gmra.mxu0 %v1269
    %v2623 = vpop.f32.mrf.mxu0
    %v2624 = vadd.f32 %v2455, %v2623
    %v2625 = vpop.f32.mrf.mxu0
    %v2626 = vadd.f32 %v2457, %v2625
    %2627 = vmatmul.bf16.gmra.mxu0 %v1276
    %v2628 = vpop.f32.mrf.mxu0
    %v2629 = vadd.f32 %v2460, %v2628
    %v2630 = vpop.f32.mrf.mxu0
    %v2631 = vadd.f32 %v2462, %v2630
    %2632 = vmatmul.bf16.gmra.mxu0 %v1283
    %v2633 = vpop.f32.mrf.mxu0
    %v2634 = vadd.f32 %v2465, %v2633
    %v2635 = vpop.f32.mrf.mxu0
    %v2636 = vadd.f32 %v2467, %v2635
    %2637 = vmatmul.bf16.gmra.mxu0 %v1290
    %v2638 = vpop.f32.mrf.mxu0
    %v2639 = vadd.f32 %v2470, %v2638
    %v2640 = vpop.f32.mrf.mxu0
    %v2641 = vadd.f32 %v2472, %v2640
    %2642 = vmatmul.bf16.gmra.mxu0 %v1297
    %v2643 = vpop.f32.mrf.mxu0
    %v2644 = vadd.f32 %v2475, %v2643
    %v2645 = vpop.f32.mrf.mxu0
    %v2646 = vadd.f32 %v2477, %v2645
    %2647 = vmatmul.bf16.gmra.mxu0 %v1304
    %v2648 = vpop.f32.mrf.mxu0
    %v2649 = vadd.f32 %v2480, %v2648
    %v2650 = vpop.f32.mrf.mxu0
    %v2651 = vadd.f32 %v2482, %v2650
    %2652 = vmatmul.bf16.gmra.mxu0 %v1311
    %v2653 = vpop.f32.mrf.mxu0
    %v2654 = vadd.f32 %v2485, %v2653
    %v2655 = vpop.f32.mrf.mxu0
    %v2656 = vadd.f32 %v2487, %v2655
    %2657 = vmatmul.bf16.gmra.mxu0 %v1318
    %v2658 = vpop.f32.mrf.mxu0
    %v2659 = vadd.f32 %v2490, %v2658
    %v2660 = vpop.f32.mrf.mxu0
    %v2661 = vadd.f32 %v2492, %v2660
    %2662 = vmatmul.bf16.gmra.mxu0 %v1325
    %v2663 = vpop.f32.mrf.mxu0
    %v2664 = vadd.f32 %v2495, %v2663
    %v2665 = vpop.f32.mrf.mxu0
    %v2666 = vadd.f32 %v2497, %v2665
    %2667 = vmatmul.bf16.gmra.mxu0 %v1332
    %v2668 = vpop.f32.mrf.mxu0
    %v2669 = vadd.f32 %v2500, %v2668
    %v2670 = vpop.f32.mrf.mxu0
    %v2671 = vadd.f32 %v2502, %v2670
    %2672 = vmatmul.bf16.gmra.mxu0 %v1339
    %v2673 = vpop.f32.mrf.mxu0
    %v2674 = vadd.f32 %v2505, %v2673
    %v2675 = vpop.f32.mrf.mxu0
    %v2676 = vadd.f32 %v2507, %v2675
    %2677 = vmatmul.bf16.gmra.mxu0 %v1346
    %v2678 = vpop.f32.mrf.mxu0
    %v2679 = vadd.f32 %v2510, %v2678
    %v2680 = vpop.f32.mrf.mxu0
    %v2681 = vadd.f32 %v2512, %v2680
    %2682 = vmatmul.bf16.gmra.mxu0 %v1353
    %v2683 = vpop.f32.mrf.mxu0
    %v2684 = vadd.f32 %v2515, %v2683
    %v2685 = vpop.f32.mrf.mxu0
    %v2686 = vadd.f32 %v2517, %v2685
    %2687 = vmatmul.bf16.gmra.mxu0 %v1360
    %v2688 = vpop.f32.mrf.mxu0
    %v2689 = vadd.f32 %v2520, %v2688
    %v2690 = vpop.f32.mrf.mxu0
    %v2691 = vadd.f32 %v2522, %v2690
    %2692 = vmatmul.bf16.gmra.mxu0 %v1367
    %v2693 = vpop.f32.mrf.mxu0
    %v2694 = vadd.f32 %v2525, %v2693
    %v2695 = vpop.f32.mrf.mxu0
    %v2696 = vadd.f32 %v2527, %v2695
    %2697 = vmatmul.bf16.gmra.mxu0 %v1374
    %v2698 = vpop.f32.mrf.mxu0
    %v2699 = vadd.f32 %v2530, %v2698
    %v2700 = vpop.f32.mrf.mxu0
    %v2701 = vadd.f32 %v2532, %v2700
    %2702 = vdwg.mxu0
    %2703 = vmatpush.bf16.xpose.msra.mxu0 %v1687
    %2704 = vmatpush.bf16.xpose.msra.mxu0 %v1684
    %2705 = vmatpush.bf16.xpose.msra.mxu0 %v1681
    %2706 = vmatpush.bf16.xpose.msra.mxu0 %v1678
    %2707 = vmatpush.bf16.xpose.msra.mxu0 %v1675
    %2708 = vmatpush.bf16.xpose.msra.mxu0 %v1672
    %2709 = vmatpush.bf16.xpose.msra.mxu0 %v1669
    %2710 = vmatpush.bf16.xpose.msra.mxu0 %v1666
    %2711 = vmatmul.bf16.gmra.mxu0 %v1570
    %v2712 = vpop.f32.mrf.mxu0
    %v2713 = vadd.f32 %v2544, %v2712
    %v2714 = vpop.f32.mrf.mxu0
    %v2715 = vadd.f32 %v2546, %v2714
    %2716 = vmatmul.bf16.gmra.mxu0 %v1573
    %v2717 = vpop.f32.mrf.mxu0
    %v2718 = vadd.f32 %v2549, %v2717
    %v2719 = vpop.f32.mrf.mxu0
    %v2720 = vadd.f32 %v2551, %v2719
    %2721 = vmatmul.bf16.gmra.mxu0 %v1576
    %v2722 = vpop.f32.mrf.mxu0
    %v2723 = vadd.f32 %v2554, %v2722
    %v2724 = vpop.f32.mrf.mxu0
    %v2725 = vadd.f32 %v2556, %v2724
    %2726 = vmatmul.bf16.gmra.mxu0 %v1579
    %v2727 = vpop.f32.mrf.mxu0
    %v2728 = vadd.f32 %v2559, %v2727
    %v2729 = vpop.f32.mrf.mxu0
    %v2730 = vadd.f32 %v2561, %v2729
    %2731 = vmatmul.bf16.gmra.mxu0 %v1582
    %v2732 = vpop.f32.mrf.mxu0
    %v2733 = vadd.f32 %v2564, %v2732
    %v2734 = vpop.f32.mrf.mxu0
    %v2735 = vadd.f32 %v2566, %v2734
    %2736 = vmatmul.bf16.gmra.mxu0 %v1585
    %v2737 = vpop.f32.mrf.mxu0
    %v2738 = vadd.f32 %v2569, %v2737
    %v2739 = vpop.f32.mrf.mxu0
    %v2740 = vadd.f32 %v2571, %v2739
    %2741 = vmatmul.bf16.gmra.mxu0 %v1588
    %v2742 = vpop.f32.mrf.mxu0
    %v2743 = vadd.f32 %v2574, %v2742
    %v2744 = vpop.f32.mrf.mxu0
    %v2745 = vadd.f32 %v2576, %v2744
    %2746 = vmatmul.bf16.gmra.mxu0 %v1591
    %v2747 = vpop.f32.mrf.mxu0
    %v2748 = vadd.f32 %v2579, %v2747
    %v2749 = vpop.f32.mrf.mxu0
    %v2750 = vadd.f32 %v2581, %v2749
    %2751 = vmatmul.bf16.gmra.mxu0 %v1594
    %v2752 = vpop.f32.mrf.mxu0
    %v2753 = vadd.f32 %v2584, %v2752
    %v2754 = vpop.f32.mrf.mxu0
    %v2755 = vadd.f32 %v2586, %v2754
    %2756 = vmatmul.bf16.gmra.mxu0 %v1597
    %v2757 = vpop.f32.mrf.mxu0
    %v2758 = vadd.f32 %v2589, %v2757
    %v2759 = vpop.f32.mrf.mxu0
    %v2760 = vadd.f32 %v2591, %v2759
    %2761 = vmatmul.bf16.gmra.mxu0 %v1600
    %v2762 = vpop.f32.mrf.mxu0
    %v2763 = vadd.f32 %v2594, %v2762
    %v2764 = vpop.f32.mrf.mxu0
    %v2765 = vadd.f32 %v2596, %v2764
    %2766 = vmatmul.bf16.gmra.mxu0 %v1603
    %v2767 = vpop.f32.mrf.mxu0
    %v2768 = vadd.f32 %v2599, %v2767
    %v2769 = vpop.f32.mrf.mxu0
    %v2770 = vadd.f32 %v2601, %v2769
    %2771 = vmatmul.bf16.gmra.mxu0 %v1606
    %v2772 = vpop.f32.mrf.mxu0
    %v2773 = vadd.f32 %v2604, %v2772
    %v2774 = vpop.f32.mrf.mxu0
    %v2775 = vadd.f32 %v2606, %v2774
    %2776 = vmatmul.bf16.gmra.mxu0 %v1609
    %v2777 = vpop.f32.mrf.mxu0
    %v2778 = vadd.f32 %v2609, %v2777
    %v2779 = vpop.f32.mrf.mxu0
    %v2780 = vadd.f32 %v2611, %v2779
    %2781 = vmatmul.bf16.gmra.mxu0 %v1612
    %v2782 = vpop.f32.mrf.mxu0
    %v2783 = vadd.f32 %v2614, %v2782
    %v2784 = vpop.f32.mrf.mxu0
    %v2785 = vadd.f32 %v2616, %v2784
    %2786 = vmatmul.bf16.gmra.mxu0 %v1615
    %v2787 = vpop.f32.mrf.mxu0
    %v2788 = vadd.f32 %v2619, %v2787
    %v2789 = vpop.f32.mrf.mxu0
    %v2790 = vadd.f32 %v2621, %v2789
    %2791 = vmatmul.bf16.gmra.mxu0 %v1618
    %v2792 = vpop.f32.mrf.mxu0
    %v2793 = vadd.f32 %v2624, %v2792
    %v2794 = vpop.f32.mrf.mxu0
    %v2795 = vadd.f32 %v2626, %v2794
    %2796 = vmatmul.bf16.gmra.mxu0 %v1621
    %v2797 = vpop.f32.mrf.mxu0
    %v2798 = vadd.f32 %v2629, %v2797
    %v2799 = vpop.f32.mrf.mxu0
    %v2800 = vadd.f32 %v2631, %v2799
    %2801 = vmatmul.bf16.gmra.mxu0 %v1624
    %v2802 = vpop.f32.mrf.mxu0
    %v2803 = vadd.f32 %v2634, %v2802
    %v2804 = vpop.f32.mrf.mxu0
    %v2805 = vadd.f32 %v2636, %v2804
    %2806 = vmatmul.bf16.gmra.mxu0 %v1627
    %v2807 = vpop.f32.mrf.mxu0
    %v2808 = vadd.f32 %v2639, %v2807
    %v2809 = vpop.f32.mrf.mxu0
    %v2810 = vadd.f32 %v2641, %v2809
    %2811 = vmatmul.bf16.gmra.mxu0 %v1630
    %v2812 = vpop.f32.mrf.mxu0
    %v2813 = vadd.f32 %v2644, %v2812
    %v2814 = vpop.f32.mrf.mxu0
    %v2815 = vadd.f32 %v2646, %v2814
    %2816 = vmatmul.bf16.gmra.mxu0 %v1633
    %v2817 = vpop.f32.mrf.mxu0
    %v2818 = vadd.f32 %v2649, %v2817
    %v2819 = vpop.f32.mrf.mxu0
    %v2820 = vadd.f32 %v2651, %v2819
    %2821 = vmatmul.bf16.gmra.mxu0 %v1636
    %v2822 = vpop.f32.mrf.mxu0
    %v2823 = vadd.f32 %v2654, %v2822
    %v2824 = vpop.f32.mrf.mxu0
    %v2825 = vadd.f32 %v2656, %v2824
    %2826 = vmatmul.bf16.gmra.mxu0 %v1639
    %v2827 = vpop.f32.mrf.mxu0
    %v2828 = vadd.f32 %v2659, %v2827
    %v2829 = vpop.f32.mrf.mxu0
    %v2830 = vadd.f32 %v2661, %v2829
    %2831 = vmatmul.bf16.gmra.mxu0 %v1642
    %v2832 = vpop.f32.mrf.mxu0
    %v2833 = vadd.f32 %v2664, %v2832
    %v2834 = vpop.f32.mrf.mxu0
    %v2835 = vadd.f32 %v2666, %v2834
    %2836 = vmatmul.bf16.gmra.mxu0 %v1645
    %v2837 = vpop.f32.mrf.mxu0
    %v2838 = vadd.f32 %v2669, %v2837
    %v2839 = vpop.f32.mrf.mxu0
    %v2840 = vadd.f32 %v2671, %v2839
    %2841 = vmatmul.bf16.gmra.mxu0 %v1648
    %v2842 = vpop.f32.mrf.mxu0
    %v2843 = vadd.f32 %v2674, %v2842
    %v2844 = vpop.f32.mrf.mxu0
    %v2845 = vadd.f32 %v2676, %v2844
    %2846 = vmatmul.bf16.gmra.mxu0 %v1651
    %v2847 = vpop.f32.mrf.mxu0
    %v2848 = vadd.f32 %v2679, %v2847
    %v2849 = vpop.f32.mrf.mxu0
    %v2850 = vadd.f32 %v2681, %v2849
    %2851 = vmatmul.bf16.gmra.mxu0 %v1654
    %v2852 = vpop.f32.mrf.mxu0
    %v2853 = vadd.f32 %v2684, %v2852
    %v2854 = vpop.f32.mrf.mxu0
    %v2855 = vadd.f32 %v2686, %v2854
    %2856 = vmatmul.bf16.gmra.mxu0 %v1657
    %v2857 = vpop.f32.mrf.mxu0
    %v2858 = vadd.f32 %v2689, %v2857
    %v2859 = vpop.f32.mrf.mxu0
    %v2860 = vadd.f32 %v2691, %v2859
    %2861 = vmatmul.bf16.gmra.mxu0 %v1660
    %v2862 = vpop.f32.mrf.mxu0
    %v2863 = vadd.f32 %v2694, %v2862
    %v2864 = vpop.f32.mrf.mxu0
    %v2865 = vadd.f32 %v2696, %v2864
    %2866 = vmatmul.bf16.gmra.mxu0 %v1663
    %v2867 = vpop.f32.mrf.mxu0
    %v2868 = vadd.f32 %v2699, %v2867
    %v2869 = vpop.f32.mrf.mxu0
    %v2870 = vadd.f32 %v2701, %v2869
    %2871 = vdwg.mxu0
    %v2872 = vmax.f32 %v2713, %v2793
    %v2873 = vmax.f32 %v2715, %v2795
    %v2874 = vmax.f32 %v2718, %v2798
    %v2875 = vmax.f32 %v2720, %v2800
    %v2876 = vmax.f32 %v2723, %v2803
    %v2877 = vmax.f32 %v2725, %v2805
    %v2878 = vmax.f32 %v2728, %v2808
    %v2879 = vmax.f32 %v2730, %v2810
    %v2880 = vmax.f32 %v2733, %v2813
    %v2881 = vmax.f32 %v2735, %v2815
    %v2882 = vmax.f32 %v2738, %v2818
    %v2883 = vmax.f32 %v2740, %v2820
    %v2884 = vmax.f32 %v2743, %v2823
    %v2885 = vmax.f32 %v2745, %v2825
    %v2886 = vmax.f32 %v2748, %v2828
    %v2887 = vmax.f32 %v2750, %v2830
    %v2888 = vmax.f32 %v2753, %v2833
    %v2889 = vmax.f32 %v2755, %v2835
    %v2890 = vmax.f32 %v2758, %v2838
    %v2891 = vmax.f32 %v2760, %v2840
    %v2892 = vmax.f32 %v2763, %v2843
    %v2893 = vmax.f32 %v2765, %v2845
    %v2894 = vmax.f32 %v2768, %v2848
    %v2895 = vmax.f32 %v2770, %v2850
    %v2896 = vmax.f32 %v2773, %v2853
    %v2897 = vmax.f32 %v2775, %v2855
    %v2898 = vmax.f32 %v2778, %v2858
    %v2899 = vmax.f32 %v2780, %v2860
    %v2900 = vmax.f32 %v2783, %v2863
    %v2901 = vmax.f32 %v2785, %v2865
    %v2902 = vmax.f32 %v2788, %v2868
    %v2903 = vmax.f32 %v2790, %v2870
    %v2904 = vmax.f32 %v2872, %v2888
    %v2905 = vmax.f32 %v2873, %v2889
    %v2906 = vmax.f32 %v2874, %v2890
    %v2907 = vmax.f32 %v2875, %v2891
    %v2908 = vmax.f32 %v2876, %v2892
    %v2909 = vmax.f32 %v2877, %v2893
    %v2910 = vmax.f32 %v2878, %v2894
    %v2911 = vmax.f32 %v2879, %v2895
    %v2912 = vmax.f32 %v2880, %v2896
    %v2913 = vmax.f32 %v2881, %v2897
    %v2914 = vmax.f32 %v2882, %v2898
    %v2915 = vmax.f32 %v2883, %v2899
    %v2916 = vmax.f32 %v2884, %v2900
    %v2917 = vmax.f32 %v2885, %v2901
    %v2918 = vmax.f32 %v2886, %v2902
    %v2919 = vmax.f32 %v2887, %v2903
    %v2920 = vmax.f32 %v2904, %v2912
    %v2921 = vmax.f32 %v2905, %v2913
    %v2922 = vmax.f32 %v2906, %v2914
    %v2923 = vmax.f32 %v2907, %v2915
    %v2924 = vmax.f32 %v2908, %v2916
    %v2925 = vmax.f32 %v2909, %v2917
    %v2926 = vmax.f32 %v2910, %v2918
    %v2927 = vmax.f32 %v2911, %v2919
    %v2928 = vmax.f32 %v2920, %v2924
    %v2929 = vmax.f32 %v2921, %v2925
    %v2930 = vmax.f32 %v2922, %v2926
    %v2931 = vmax.f32 %v2923, %v2927
    %v2932 = vld [vmem:[#allocation2] sm:$0x1]
    %v2934 = vperm.slane %v2932, 0
    %2935 = vset.pattern.permute.xlu0 0
    %2936 = vperm.xlu0 %2935, %v2934
    %v2937 = vpop.permute.xlu0 %2936
    %v2939 = vadd.f32 %v2928, %v2937
    %v2940 = vadd.f32 %v2929, %v2937
    %v2941 = vadd.f32 %v2930, %v2937
    %v2942 = vadd.f32 %v2931, %v2937
    %v2943 = vmax.f32 %v2939, 0.0
    %v2944 = vmax.f32 %v2940, 0.0
    %v2945 = vmax.f32 %v2941, 0.0
    %v2946 = vmax.f32 %v2942, 0.0
    %v2947 = vpack.c.bf16 %v2944, %v2943
    %v2948 = vpack.c.bf16 %v2946, %v2945
    %v2949 = vld [vmem:[%s2] sm:$0xf]
    %v2950 = vld [vmem:[%s2 + $0x4] sm:$0x1]
    %v2951 = vld [vmem:[%s3] sm:$0xff]
    %v2952 = vld [vmem:[%s3 + $0x8] sm:$0x3]
    %2954 = vset.pattern.permute.xlu0 0
    %2955 = vperm.xlu0 %2954, %v2951
    %v2956 = vpop.permute.xlu0 %2955
    %2959 = vset.pattern.permute.xlu0 0
    %2960 = vperm.xlu0 %2959, %v2952
    %v2961 = vpop.permute.xlu0 %2960
    %v2965 = vunpack.c.l.b16 %v2949
    %v2966 = vunpack.c.l.b16 %v2950
    %v2967 = vpack.c.b16 %v2966, %v2965
    %vm2968 = vcmask 261120
    %v2970 = vsel %vm2968, %v2967, 0
    %2972 = vmatpush.bf16.msra.mxu0 0
    %2973 = vmatpush.bf16.msra.mxu0 0
    %2974 = vmatpush.bf16.msra.mxu0 0
    %2975 = vmatpush.bf16.msra.mxu0 0
    %2976 = vmatpush.bf16.msra.mxu0 0
    %2977 = vmatpush.bf16.msra.mxu0 0
    %2978 = vmatpush.bf16.msra.mxu0 %v2948
    %2979 = vmatpush.bf16.msra.mxu0 %v2947
    %2980 = vmatmul.bf16.gmra.mxu0 %v2970
    %v2981 = vpop.f32.mrf.mxu0
    %v2982 = vadd.f32 %v2956, %v2981
    %v2983 = vpop.f32.mrf.mxu0
    %v2984 = vadd.f32 %v2961, %v2983
    %2985 = vdwg.mxu0
    %2986 = vst [vmem:[#allocation3] sm:$0xff] %v2982
    %2987 = vst [vmem:[#allocation3 + $0x8] sm:$0x3] %v2984
    // Predicated region
    $region22: #{tpu_custom_call.1} parent=1 // pred_check
      _
    $region23: #{tpu_custom_call.1} parent=1 // pred_check_branch
      %2989 = sbr.rel (0) target = $region25
    $region24: #{tpu_custom_call.1} parent=1 // pred_region
      %2991 = vsyncadd [#allocation4], 0
      %s2992 = sshll.u32 [#allocation3], 4
      %s2993 = int_to_ptr.vmem [resolvable:$true] %s2992
      %s2994 = sshll.u32 %s5, 4
      %s2995 = int_to_ptr.hbm [resolvable:$true] %s2994
      %3000 = dma.vmem_to_hbm [thread:$0]  %s2993, 256, %s2995, [#allocation4], 128, 128, 8
    $region25: #{tpu_custom_call.1} parent=1 // pred_fallthru
      _
    // Predicated region
    $region26: #{tpu_custom_call.1} parent=1 // pred_check
      _
    $region27: #{tpu_custom_call.1} parent=1 // pred_check_branch
      %3002 = sbr.rel (0) target = $region29
    $region28: #{tpu_custom_call.1} parent=1 // pred_region
      %3004 = dma.done [#allocation4], 256
    $region29: #{tpu_custom_call.1} parent=1 // pred_fallthru
      _
    %3005 = vsyncpa [#allocation4], 1

</llo_original>
